<compile_context>
chip_gen: v5e
topology: v5e:2x2
jax: 0.10.0
libtpu: 0.0.40
codegen_flags: <defaults>
</compile_context>

<pallas_src>
import functools
import math

import jax
import jax.numpy as jnp
from jax.experimental import pallas as pl
from jax.experimental.pallas import tpu as pltpu

FEATURE_DIM = 128      # enc.fc.in_features of the synthetic encoder
PROJECTION_DIM = 128   # SimCLR default projection_dim
HIDDEN_DIM = 2048      # projector hidden width
C1_OUT = 64            # conv1 output channels (real, no zero-pad)
CONV1_K = 32           # 3*3*3 = 27 im2col channels, zero-padded to 32
VMEM_LIMIT = 32 * 1024 * 1024   # explicit scoped-VMEM limit (safe on v5e..v7x)


def _pick_block(total, target):
    """Largest divisor of `total` that is <= target."""
    blk = min(total, target)
    while total % blk:
        blk -= 1
    return blk


# ---------------------------------------------------------------------------
# conv1: Conv2d(3, 64, 3, stride 1, pad 1, bias=False) + ReLU.
# Wrapper builds a K-concatenated im2col of the tiny 3-channel input in
# phase-major (2x2 space-to-batch) pixel order; the kernel is a single dot
# and its output lands directly in the phase layout conv2 consumes.
# ---------------------------------------------------------------------------
def _conv1_kernel(col_ref, w_ref, o_ref, *, rows, wh, kdim, cout):
    col = col_ref[...].reshape(rows * wh, kdim)            # bf16
    acc = jnp.dot(col, w_ref[...], preferred_element_type=jnp.float32)
    acc = jnp.maximum(acc, 0.0)                            # ReLU on f32
    o_ref[...] = acc.reshape(1, 1, rows, wh, cout).astype(o_ref.dtype)


def conv1_phases(x_nhwc, w_col):
    N, H, W, cin = x_nhwc.shape
    assert H % 2 == 0 and W % 16 == 0, "synthetic encoder assumes even H, W%16==0"
    hh, wh = H // 2, W // 2
    cout = w_col.shape[-1]

    # Wrapper-side tap-concat (im2col) of the lane-sparse 3-channel input.
    xp = jnp.pad(x_nhwc, ((0, 0), (1, 1), (1, 1), (0, 0)))
    taps = [xp[:, kh:kh + H, kw:kw + W, :]
            for kh in range(3) for kw in range(3)]
    col = jnp.concatenate(taps, axis=-1)                   # (N, H, W, 27)
    col = jnp.pad(col, ((0, 0), (0, 0), (0, 0), (0, CONV1_K - 9 * cin)))
    # Phase-major pixel order: pixel (r, c) -> (r%2, c%2, r//2, c//2).
    col = col.reshape(N, hh, 2, wh, 2, CONV1_K).transpose(0, 2, 4, 1, 3, 5)
    col = col.reshape(N, 4, hh, wh, CONV1_K).astype(jnp.bfloat16)

    rb = _pick_block(hh, 128)                              # output-row tiling
    kernel = functools.partial(_conv1_kernel, rows=rb, wh=wh,
                               kdim=CONV1_K, cout=cout)
    return pl.pallas_call(
        kernel,
        out_shape=jax.ShapeDtypeStruct((N, 4, hh, wh, cout), jnp.bfloat16),
        grid_spec=pltpu.PrefetchScalarGridSpec(
            num_scalar_prefetch=0,
            grid=(N, 4, hh // rb),
            in_specs=[
                pl.BlockSpec((1, 1, rb, wh, CONV1_K),
                             lambda n, p, r: (n, p, r, 0, 0)),
                pl.BlockSpec((CONV1_K, cout), lambda n, p, r: (0, 0)),
            ],
            out_specs=pl.BlockSpec((1, 1, rb, wh, cout),
                                   lambda n, p, r: (n, p, r, 0, 0)),
        ),
        compiler_params=pltpu.CompilerParams(
            dimension_semantics=("parallel", "parallel", "parallel"),
            vmem_limit_bytes=VMEM_LIMIT),
    )(col, w_col)


# ---------------------------------------------------------------------------
# Synthetic body conv: Conv2d(64, 128, 3, stride 2, pad 1, bias=False) + ReLU
# + fused global average pool.  Reads h1 directly in phase layout, builds the
# (ho*wo, 576) im2col tile in VMEM (each phase loaded once) and does ONE dot.
# ---------------------------------------------------------------------------
def _conv2_pool_kernel(x_ref, w_ref, o_ref, *, hh, wh, cin, cout):
    # Load each of the 4 phase images once; front-pad one zero row/col in VMEM
    # (only the top/left conv padding is ever read for stride-2, pad-1, even H).
    padded = []
    for a in range(2):
        row = []
        for b in range(2):
            ph = x_ref[0, 2 * a + b]                       # (hh, wh, cin) bf16
            zr = jnp.zeros((1, wh, cin), ph.dtype)
            zc = jnp.zeros((hh + 1, 1, cin), ph.dtype)
            pp = jnp.concatenate([zr, ph], axis=0)         # (hh+1, wh, cin)
            pp = jnp.concatenate([zc, pp], axis=1)         # (hh+1, wh+1, cin)
            row.append(pp)
        padded.append(row)
    # K-concatenate the 9 stride-2 taps: every tap is a contiguous slice.
    taps = []
    for kh in range(3):
        a, rs = (kh + 1) % 2, (0 if kh == 0 else 1)
        for kw in range(3):
            b, cs = (kw + 1) % 2, (0 if kw == 0 else 1)
            taps.append(padded[a][b][rs:rs + hh, cs:cs + wh, :])
    col = jnp.concatenate(taps, axis=-1).reshape(hh * wh, 9 * cin)
    acc = jnp.dot(col, w_ref[...], preferred_element_type=jnp.float32)
    acc = jnp.maximum(acc, 0.0)                            # ReLU on f32
    pooled = jnp.mean(acc, axis=0, keepdims=True)          # global avg pool
    o_ref[...] = pooled.reshape(1, 1, cout)


def conv2_pool(h1_phases, w_col):
    N, _, hh, wh, cin = h1_phases.shape
    cout = w_col.shape[-1]
    kernel = functools.partial(_conv2_pool_kernel, hh=hh, wh=wh,
                               cin=cin, cout=cout)
    # TODO(synk): for large images, add a phase-row grid axis with a partial
    # pooling accumulator instead of one whole phase set per batch element.
    feat = pl.pallas_call(
        kernel,
        out_shape=jax.ShapeDtypeStruct((N, 1, cout), jnp.float32),
        grid_spec=pltpu.PrefetchScalarGridSpec(
            num_scalar_prefetch=0,
            grid=(N,),
            in_specs=[
                pl.BlockSpec((1, 4, hh, wh, cin), lambda n: (n, 0, 0, 0, 0)),
                pl.BlockSpec((9 * cin, cout), lambda n: (0, 0)),
            ],
            out_specs=pl.BlockSpec((1, 1, cout), lambda n: (n, 0, 0)),
        ),
        compiler_params=pltpu.CompilerParams(
            dimension_semantics=("parallel",),
            vmem_limit_bytes=VMEM_LIMIT),
    )(h1_phases, w_col)
    return feat.reshape(N, cout)


# ---------------------------------------------------------------------------
# Fused projector: Linear(128,2048) -> ReLU -> Linear(2048,128), batch-tiled.
# ---------------------------------------------------------------------------
def _projector_kernel(f_ref, w1_ref, b1_ref, w2_ref, b2_ref, o_ref):
    f = f_ref[...].astype(jnp.bfloat16)
    z = jnp.dot(f, w1_ref[...], preferred_element_type=jnp.float32)
    z = jnp.maximum(z + b1_ref[...], 0.0)                  # bias + ReLU in f32
    p = jnp.dot(z.astype(jnp.bfloat16), w2_ref[...],
                preferred_element_type=jnp.float32)
    o_ref[...] = (p + b2_ref[...]).astype(o_ref.dtype)


def projector(feature, w1, b1, w2, b2):
    N, F = feature.shape
    Hd, Pd = w1.shape[1], w2.shape[1]
    tm = _pick_block(N, 256)                # batch-row tiles -> both TCs on v7x
    if tm % 8 != 0 and tm != N:             # keep the sublane dim legal
        tm = N
    # TODO(synk): weight blocks could use pipeline_mode=pl.Buffered(1) to halve
    # their double-buffer footprint at very large batch tiles.
    return pl.pallas_call(
        _projector_kernel,
        out_shape=jax.ShapeDtypeStruct((N, Pd), jnp.float32),
        grid_spec=pltpu.PrefetchScalarGridSpec(
            num_scalar_prefetch=0,
            grid=(N // tm,),
            in_specs=[
                pl.BlockSpec((tm, F), lambda i: (i, 0)),
                pl.BlockSpec((F, Hd), lambda i: (0, 0)),
                pl.BlockSpec((1, Hd), lambda i: (0, 0)),
                pl.BlockSpec((Hd, Pd), lambda i: (0, 0)),
                pl.BlockSpec((1, Pd), lambda i: (0, 0)),
            ],
            out_specs=pl.BlockSpec((tm, Pd), lambda i: (i, 0)),
        ),
        compiler_params=pltpu.CompilerParams(
            dimension_semantics=("parallel",),
            vmem_limit_bytes=VMEM_LIMIT),
    )(feature, w1, b1, w2, b2)


# ---------------------------------------------------------------------------
# Parameters (deterministic, synthetic)
# ---------------------------------------------------------------------------
def init_params(key):
    ks = jax.random.split(key, 6)

    def kaiming(k, shape, fan_in):
        return jax.random.normal(k, shape, jnp.float32) / math.sqrt(fan_in)

    # conv1: Conv2d(3, 64, 3, 1, 1, bias=False) -> tap-major (27->32, 64).
    c1 = kaiming(ks[0], (3, 3, 3, C1_OUT), 27).reshape(27, C1_OUT)
    conv1_w = jnp.pad(c1, ((0, CONV1_K - 27), (0, 0))).astype(jnp.bfloat16)

    # synthetic body: Conv2d(64, FEATURE_DIM, 3, 2, 1, bias=False) -> (576,128).
    c2 = kaiming(ks[1], (3, 3, C1_OUT, FEATURE_DIM), 9 * C1_OUT)
    conv2_w = c2.reshape(9 * C1_OUT, FEATURE_DIM).astype(jnp.bfloat16)

    # projector: Linear(FEATURE_DIM, 2048) -> ReLU -> Linear(2048, 128).
    w1 = kaiming(ks[2], (FEATURE_DIM, HIDDEN_DIM), FEATURE_DIM).astype(jnp.bfloat16)
    b1 = jax.random.uniform(ks[3], (1, HIDDEN_DIM), jnp.float32,
                            -1.0 / math.sqrt(FEATURE_DIM),
                            1.0 / math.sqrt(FEATURE_DIM))
    w2 = kaiming(ks[4], (HIDDEN_DIM, PROJECTION_DIM), HIDDEN_DIM).astype(jnp.bfloat16)
    b2 = jax.random.uniform(ks[5], (1, PROJECTION_DIM), jnp.float32,
                            -1.0 / math.sqrt(HIDDEN_DIM),
                            1.0 / math.sqrt(HIDDEN_DIM))
    return dict(conv1_w=conv1_w, conv2_w=conv2_w, w1=w1, b1=b1, w2=w2, b2=b2)


# ---------------------------------------------------------------------------
# SimCLR forward: returns (feature, projection)
# ---------------------------------------------------------------------------
@jax.jit
def simclr_forward(x_nchw, params):
    x = jnp.transpose(x_nchw, (0, 2, 3, 1))                 # NCHW -> NHWC (f32)

    # --- encoder ---
    # conv1 (3->64, 3x3, s1, p1, no bias) + ReLU   [maxpool is Identity]
    h1_ph = conv1_phases(x, params["conv1_w"])               # (N,4,H/2,W/2,64)
    # synthetic body (64->FEATURE_DIM, 3x3, s2, p1, no bias) + ReLU + avg pool
    feature = conv2_pool(h1_ph, params["conv2_w"])            # (N, FEATURE_DIM)
    # (fc = Identity)

    # --- projector: Linear -> ReLU -> Linear, single fused kernel ---
    projection = projector(feature, params["w1"], params["b1"],
                           params["w2"], params["b2"])
    return feature, projection


if __name__ == "__main__":
    key = jax.random.PRNGKey(0)
    k_x, k_p = jax.random.split(key)
    x = jax.random.normal(k_x, (2, 3, 16, 16), jnp.float32)  # NCHW like PyTorch
    params = init_params(k_p)

    feature, projection = simclr_forward(x, params)
    jax.block_until_ready((feature, projection))

    assert feature.shape == (2, FEATURE_DIM)
    assert projection.shape == (2, PROJECTION_DIM)
    assert bool(jnp.all(jnp.isfinite(feature)))
    assert bool(jnp.all(jnp.isfinite(projection)))
    print("KERNEL_OK")
</pallas_src>

<mosaic_0001>
module attributes {stable_mosaic.version = 11 : i64} {
  func.func @_conv1_kernel(%arg0: i32, %arg1: i32, %arg2: i32, %arg3: memref<1x1x8x8x32xbf16, #tpu.memory_space<vmem>>, %arg4: memref<32x64xbf16, #tpu.memory_space<vmem>>, %arg5: memref<1x1x8x8x64xbf16, #tpu.memory_space<vmem>>) attributes {dimension_semantics = [#tpu.dimension_semantics<parallel>, #tpu.dimension_semantics<parallel>, #tpu.dimension_semantics<parallel>], iteration_bounds = array<i64: 2, 4, 1>, scalar_prefetch = 0 : i64, scratch_operands = 0 : i64, tpu.core_type = #tpu.core_type<tc>, window_params = [{transform_indices = @transform_0, window_bounds = array<i64: 1, 1, 8, 8, 32>}, {pipeline_mode = #tpu.pipeline_mode<synchronous>, transform_indices = @transform_1, window_bounds = array<i64: 32, 64>}, {transform_indices = @transform_2, window_bounds = array<i64: 1, 1, 8, 8, 64>}]} {
    %c0 = arith.constant 0 : index
    %c0_0 = arith.constant 0 : index
    %c0_1 = arith.constant 0 : index
    %c0_2 = arith.constant 0 : index
    %c0_3 = arith.constant 0 : index
    %0 = vector.load %arg3[%c0, %c0_0, %c0_1, %c0_2, %c0_3] : memref<1x1x8x8x32xbf16, #tpu.memory_space<vmem>>, vector<1x1x8x8x32xbf16>
    %1 = vector.shape_cast %0 : vector<1x1x8x8x32xbf16> to vector<64x32xbf16>
    %c0_4 = arith.constant 0 : index
    %c0_5 = arith.constant 0 : index
    %2 = vector.load %arg4[%c0_4, %c0_5] : memref<32x64xbf16, #tpu.memory_space<vmem>>, vector<32x64xbf16>
    %cst = arith.constant dense<0.000000e+00> : vector<64x64xf32>
    %3 = tpu.matmul %1, %2, %cst {dimension_numbers = #tpu.dot_dimension_numbers<[1], [0], [0], [1], [0, 0, 1, 1], [], []>} : vector<64x32xbf16>, vector<32x64xbf16>, vector<64x64xf32> -> vector<64x64xf32>
    %cst_6 = arith.constant 0.000000e+00 : f32
    %4 = vector.broadcast %cst_6 : f32 to vector<64x64xf32>
    %5 = arith.maximumf %3, %4 : vector<64x64xf32>
    %6 = vector.shape_cast %5 : vector<64x64xf32> to vector<1x1x8x8x64xf32>
    %7 = arith.truncf %6 : vector<1x1x8x8x64xf32> to vector<1x1x8x8x64xbf16>
    %c0_7 = arith.constant 0 : index
    %c0_8 = arith.constant 0 : index
    %c0_9 = arith.constant 0 : index
    %c0_10 = arith.constant 0 : index
    %c0_11 = arith.constant 0 : index
    %8 = vector.load %arg5[%c0_7, %c0_8, %c0_9, %c0_10, %c0_11] : memref<1x1x8x8x64xbf16, #tpu.memory_space<vmem>>, vector<1x1x8x8x64xbf16>
    tpu.vector_store %arg5[%c0_7, %c0_8, %c0_9, %c0_10, %c0_11], %7 {strides = array<i32>} : memref<1x1x8x8x64xbf16, #tpu.memory_space<vmem>>, vector<1x1x8x8x64xbf16>,
    return
  }
  func.func @transform_0(%arg0: i32, %arg1: i32, %arg2: i32) -> (i32, i32, i32, i32, i32) {
    %c0_i32 = arith.constant 0 : i32
    %c0_i32_0 = arith.constant 0 : i32
    %c0_i32_1 = arith.constant 0 : i32
    return %arg0, %arg1, %arg2, %c0_i32, %c0_i32_0 : i32, i32, i32, i32, i32
  }
  func.func @transform_1(%arg0: i32, %arg1: i32, %arg2: i32) -> (i32, i32) {
    %c0_i32 = arith.constant 0 : i32
    %c0_i32_0 = arith.constant 0 : i32
    %c0_i32_1 = arith.constant 0 : i32
    return %c0_i32, %c0_i32_0 : i32, i32
  }
  func.func @transform_2(%arg0: i32, %arg1: i32, %arg2: i32) -> (i32, i32, i32, i32, i32) {
    %c0_i32 = arith.constant 0 : i32
    %c0_i32_0 = arith.constant 0 : i32
    %c0_i32_1 = arith.constant 0 : i32
    return %arg0, %arg1, %arg2, %c0_i32, %c0_i32_0 : i32, i32, i32, i32, i32
  }
}

module attributes {stable_mosaic.version = 11 : i64} {
  func.func @_conv2_pool_kernel(%arg0: i32, %arg1: memref<1x4x8x8x64xbf16, #tpu.memory_space<vmem>>, %arg2: memref<576x128xbf16, #tpu.memory_space<vmem>>, %arg3: memref<1x1x128xf32, #tpu.memory_space<vmem>>) attributes {dimension_semantics = [#tpu.dimension_semantics<parallel>], iteration_bounds = array<i64: 2>, scalar_prefetch = 0 : i64, scratch_operands = 0 : i64, tpu.core_type = #tpu.core_type<tc>, window_params = [{transform_indices = @transform_0, window_bounds = array<i64: 1, 4, 8, 8, 64>}, {pipeline_mode = #tpu.pipeline_mode<synchronous>, transform_indices = @transform_1, window_bounds = array<i64: 576, 128>}, {transform_indices = @transform_2, window_bounds = array<i64: 1, 1, 128>}]} {
    %c0 = arith.constant 0 : index
    %c0_0 = arith.constant 0 : index
    %c0_1 = arith.constant 0 : index
    %c0_2 = arith.constant 0 : index
    %c0_3 = arith.constant 0 : index
    %0 = vector.load %arg1[%c0, %c0_0, %c0_1, %c0_2, %c0_3] : memref<1x4x8x8x64xbf16, #tpu.memory_space<vmem>>, vector<1x1x8x8x64xbf16>
    %1 = vector.shape_cast %0 : vector<1x1x8x8x64xbf16> to vector<8x8x64xbf16>
    %cst = arith.constant 0.000000e+00 : bf16
    %2 = vector.broadcast %cst : bf16 to vector<1x8x64xbf16>
    %cst_4 = arith.constant 0.000000e+00 : bf16
    %3 = vector.broadcast %cst_4 : bf16 to vector<9x1x64xbf16>
    %4 = tpu.concatenate %2, %1 in 0 : vector<1x8x64xbf16>, vector<8x8x64xbf16> -> vector<9x8x64xbf16>
    %5 = tpu.concatenate %3, %4 in 1 : vector<9x1x64xbf16>, vector<9x8x64xbf16> -> vector<9x9x64xbf16>
    %c0_5 = arith.constant 0 : index
    %c1 = arith.constant 1 : index
    %c0_6 = arith.constant 0 : index
    %c0_7 = arith.constant 0 : index
    %c0_8 = arith.constant 0 : index
    %6 = vector.load %arg1[%c0_5, %c1, %c0_6, %c0_7, %c0_8] : memref<1x4x8x8x64xbf16, #tpu.memory_space<vmem>>, vector<1x1x8x8x64xbf16>
    %7 = vector.shape_cast %6 : vector<1x1x8x8x64xbf16> to vector<8x8x64xbf16>
    %cst_9 = arith.constant 0.000000e+00 : bf16
    %8 = vector.broadcast %cst_9 : bf16 to vector<1x8x64xbf16>
    %cst_10 = arith.constant 0.000000e+00 : bf16
    %9 = vector.broadcast %cst_10 : bf16 to vector<9x1x64xbf16>
    %10 = tpu.concatenate %8, %7 in 0 : vector<1x8x64xbf16>, vector<8x8x64xbf16> -> vector<9x8x64xbf16>
    %11 = tpu.concatenate %9, %10 in 1 : vector<9x1x64xbf16>, vector<9x8x64xbf16> -> vector<9x9x64xbf16>
    %c0_11 = arith.constant 0 : index
    %c2 = arith.constant 2 : index
    %c0_12 = arith.constant 0 : index
    %c0_13 = arith.constant 0 : index
    %c0_14 = arith.constant 0 : index
    %12 = vector.load %arg1[%c0_11, %c2, %c0_12, %c0_13, %c0_14] : memref<1x4x8x8x64xbf16, #tpu.memory_space<vmem>>, vector<1x1x8x8x64xbf16>
    %13 = vector.shape_cast %12 : vector<1x1x8x8x64xbf16> to vector<8x8x64xbf16>
    %cst_15 = arith.constant 0.000000e+00 : bf16
    %14 = vector.broadcast %cst_15 : bf16 to vector<1x8x64xbf16>
    %cst_16 = arith.constant 0.000000e+00 : bf16
    %15 = vector.broadcast %cst_16 : bf16 to vector<9x1x64xbf16>
    %16 = tpu.concatenate %14, %13 in 0 : vector<1x8x64xbf16>, vector<8x8x64xbf16> -> vector<9x8x64xbf16>
    %17 = tpu.concatenate %15, %16 in 1 : vector<9x1x64xbf16>, vector<9x8x64xbf16> -> vector<9x9x64xbf16>
    %c0_17 = arith.constant 0 : index
    %c3 = arith.constant 3 : index
    %c0_18 = arith.constant 0 : index
    %c0_19 = arith.constant 0 : index
    %c0_20 = arith.constant 0 : index
    %18 = vector.load %arg1[%c0_17, %c3, %c0_18, %c0_19, %c0_20] : memref<1x4x8x8x64xbf16, #tpu.memory_space<vmem>>, vector<1x1x8x8x64xbf16>
    %19 = vector.shape_cast %18 : vector<1x1x8x8x64xbf16> to vector<8x8x64xbf16>
    %cst_21 = arith.constant 0.000000e+00 : bf16
    %20 = vector.broadcast %cst_21 : bf16 to vector<1x8x64xbf16>
    %cst_22 = arith.constant 0.000000e+00 : bf16
    %21 = vector.broadcast %cst_22 : bf16 to vector<9x1x64xbf16>
    %22 = tpu.concatenate %20, %19 in 0 : vector<1x8x64xbf16>, vector<8x8x64xbf16> -> vector<9x8x64xbf16>
    %23 = tpu.concatenate %21, %22 in 1 : vector<9x1x64xbf16>, vector<9x8x64xbf16> -> vector<9x9x64xbf16>
    %24 = vector.extract_strided_slice %23 {offsets = [0, 0, 0], sizes = [8, 8, 64], strides = [1, 1, 1]} : vector<9x9x64xbf16> to vector<8x8x64xbf16>
    %25 = vector.extract_strided_slice %17 {offsets = [0, 1, 0], sizes = [8, 8, 64], strides = [1, 1, 1]} : vector<9x9x64xbf16> to vector<8x8x64xbf16>
    %26 = vector.extract_strided_slice %23 {offsets = [0, 1, 0], sizes = [8, 8, 64], strides = [1, 1, 1]} : vector<9x9x64xbf16> to vector<8x8x64xbf16>
    %27 = vector.extract_strided_slice %11 {offsets = [1, 0, 0], sizes = [8, 8, 64], strides = [1, 1, 1]} : vector<9x9x64xbf16> to vector<8x8x64xbf16>
    %28 = vector.extract_strided_slice %5 {offsets = [1, 1, 0], sizes = [8, 8, 64], strides = [1, 1, 1]} : vector<9x9x64xbf16> to vector<8x8x64xbf16>
    %29 = vector.extract_strided_slice %11 {offsets = [1, 1, 0], sizes = [8, 8, 64], strides = [1, 1, 1]} : vector<9x9x64xbf16> to vector<8x8x64xbf16>
    %30 = vector.extract_strided_slice %23 {offsets = [1, 0, 0], sizes = [8, 8, 64], strides = [1, 1, 1]} : vector<9x9x64xbf16> to vector<8x8x64xbf16>
    %31 = vector.extract_strided_slice %17 {offsets = [1, 1, 0], sizes = [8, 8, 64], strides = [1, 1, 1]} : vector<9x9x64xbf16> to vector<8x8x64xbf16>
    %32 = vector.extract_strided_slice %23 {offsets = [1, 1, 0], sizes = [8, 8, 64], strides = [1, 1, 1]} : vector<9x9x64xbf16> to vector<8x8x64xbf16>
    %33 = tpu.concatenate %24, %25, %26, %27, %28, %29, %30, %31, %32 in 2 : vector<8x8x64xbf16>, vector<8x8x64xbf16>, vector<8x8x64xbf16>, vector<8x8x64xbf16>, vector<8x8x64xbf16>, vector<8x8x64xbf16>, vector<8x8x64xbf16>, vector<8x8x64xbf16>, vector<8x8x64xbf16> -> vector<8x8x576xbf16>
    %34 = vector.shape_cast %33 : vector<8x8x576xbf16> to vector<64x576xbf16>
    %c0_23 = arith.constant 0 : index
    %c0_24 = arith.constant 0 : index
    %35 = vector.load %arg2[%c0_23, %c0_24] : memref<576x128xbf16, #tpu.memory_space<vmem>>, vector<576x128xbf16>
    %cst_25 = arith.constant dense<0.000000e+00> : vector<64x128xf32>
    %36 = tpu.matmul %34, %35, %cst_25 {dimension_numbers = #tpu.dot_dimension_numbers<[1], [0], [0], [1], [0, 0, 1, 1], [], []>} : vector<64x576xbf16>, vector<576x128xbf16>, vector<64x128xf32> -> vector<64x128xf32>
    %cst_26 = arith.constant 0.000000e+00 : f32
    %37 = vector.broadcast %cst_26 : f32 to vector<64x128xf32>
    %38 = arith.maximumf %36, %37 : vector<64x128xf32>
    %cst_27 = arith.constant dense<0.000000e+00> : vector<128xf32>
    %39 = vector.multi_reduction <add>, %38, %cst_27 [0] : vector<64x128xf32> to vector<128xf32>
    %40 = vector.shape_cast %39 : vector<128xf32> to vector<1x128xf32>
    %cst_28 = arith.constant 6.400000e+01 : f32
    %41 = vector.broadcast %cst_28 : f32 to vector<1x128xf32>
    %42 = arith.divf %40, %41 : vector<1x128xf32>
    %43 = vector.shape_cast %42 : vector<1x128xf32> to vector<1x1x128xf32>
    %c0_29 = arith.constant 0 : index
    %c0_30 = arith.constant 0 : index
    %c0_31 = arith.constant 0 : index
    %44 = vector.load %arg3[%c0_29, %c0_30, %c0_31] : memref<1x1x128xf32, #tpu.memory_space<vmem>>, vector<1x1x128xf32>
    tpu.vector_store %arg3[%c0_29, %c0_30, %c0_31], %43 {strides = array<i32>} : memref<1x1x128xf32, #tpu.memory_space<vmem>>, vector<1x1x128xf32>,
    return
  }
  func.func @transform_0(%arg0: i32) -> (i32, i32, i32, i32, i32) {
    %c0_i32 = arith.constant 0 : i32
    %c0_i32_0 = arith.constant 0 : i32
    %c0_i32_1 = arith.constant 0 : i32
    %c0_i32_2 = arith.constant 0 : i32
    %c0_i32_3 = arith.constant 0 : i32
    return %arg0, %c0_i32, %c0_i32_0, %c0_i32_1, %c0_i32_2 : i32, i32, i32, i32, i32
  }
  func.func @transform_1(%arg0: i32) -> (i32, i32) {
    %c0_i32 = arith.constant 0 : i32
    %c0_i32_0 = arith.constant 0 : i32
    %c0_i32_1 = arith.constant 0 : i32
    return %c0_i32, %c0_i32_0 : i32, i32
  }
  func.func @transform_2(%arg0: i32) -> (i32, i32, i32) {
    %c0_i32 = arith.constant 0 : i32
    %c0_i32_0 = arith.constant 0 : i32
    %c0_i32_1 = arith.constant 0 : i32
    return %arg0, %c0_i32, %c0_i32_0 : i32, i32, i32
  }
}

module attributes {stable_mosaic.version = 11 : i64} {
  func.func @_projector_kernel(%arg0: i32, %arg1: memref<2x128xf32, #tpu.memory_space<vmem>>, %arg2: memref<128x2048xbf16, #tpu.memory_space<vmem>>, %arg3: memref<1x2048xf32, #tpu.memory_space<vmem>>, %arg4: memref<2048x128xbf16, #tpu.memory_space<vmem>>, %arg5: memref<1x128xf32, #tpu.memory_space<vmem>>, %arg6: memref<2x128xf32, #tpu.memory_space<vmem>>) attributes {dimension_semantics = [#tpu.dimension_semantics<parallel>], iteration_bounds = array<i64: 1>, scalar_prefetch = 0 : i64, scratch_operands = 0 : i64, tpu.core_type = #tpu.core_type<tc>, window_params = [{transform_indices = @transform_0, window_bounds = array<i64: 2, 128>}, {pipeline_mode = #tpu.pipeline_mode<synchronous>, transform_indices = @transform_1, window_bounds = array<i64: 128, 2048>}, {pipeline_mode = #tpu.pipeline_mode<synchronous>, transform_indices = @transform_2, window_bounds = array<i64: 1, 2048>}, {pipeline_mode = #tpu.pipeline_mode<synchronous>, transform_indices = @transform_3, window_bounds = array<i64: 2048, 128>}, {pipeline_mode = #tpu.pipeline_mode<synchronous>, transform_indices = @transform_4, window_bounds = array<i64: 1, 128>}, {transform_indices = @transform_5, window_bounds = array<i64: 2, 128>}]} {
    %c0 = arith.constant 0 : index
    %c0_0 = arith.constant 0 : index
    %0 = vector.load %arg1[%c0, %c0_0] : memref<2x128xf32, #tpu.memory_space<vmem>>, vector<2x128xf32>
    %1 = arith.truncf %0 : vector<2x128xf32> to vector<2x128xbf16>
    %c0_1 = arith.constant 0 : index
    %c0_2 = arith.constant 0 : index
    %2 = vector.load %arg2[%c0_1, %c0_2] : memref<128x2048xbf16, #tpu.memory_space<vmem>>, vector<128x2048xbf16>
    %cst = arith.constant dense<0.000000e+00> : vector<2x2048xf32>
    %3 = tpu.matmul %1, %2, %cst {dimension_numbers = #tpu.dot_dimension_numbers<[1], [0], [0], [1], [0, 0, 1, 1], [], []>} : vector<2x128xbf16>, vector<128x2048xbf16>, vector<2x2048xf32> -> vector<2x2048xf32>
    %c0_3 = arith.constant 0 : index
    %c0_4 = arith.constant 0 : index
    %4 = vector.load %arg3[%c0_3, %c0_4] : memref<1x2048xf32, #tpu.memory_space<vmem>>, vector<1x2048xf32>
    %5 = vector.broadcast %4 : vector<1x2048xf32> to vector<2x2048xf32>
    %6 = arith.addf %3, %5 : vector<2x2048xf32>
    %cst_5 = arith.constant 0.000000e+00 : f32
    %7 = vector.broadcast %cst_5 : f32 to vector<2x2048xf32>
    %8 = arith.maximumf %6, %7 : vector<2x2048xf32>
    %9 = arith.truncf %8 : vector<2x2048xf32> to vector<2x2048xbf16>
    %c0_6 = arith.constant 0 : index
    %c0_7 = arith.constant 0 : index
    %10 = vector.load %arg4[%c0_6, %c0_7] : memref<2048x128xbf16, #tpu.memory_space<vmem>>, vector<2048x128xbf16>
    %cst_8 = arith.constant dense<0.000000e+00> : vector<2x128xf32>
    %11 = tpu.matmul %9, %10, %cst_8 {dimension_numbers = #tpu.dot_dimension_numbers<[1], [0], [0], [1], [0, 0, 1, 1], [], []>} : vector<2x2048xbf16>, vector<2048x128xbf16>, vector<2x128xf32> -> vector<2x128xf32>
    %c0_9 = arith.constant 0 : index
    %c0_10 = arith.constant 0 : index
    %12 = vector.load %arg5[%c0_9, %c0_10] : memref<1x128xf32, #tpu.memory_space<vmem>>, vector<1x128xf32>
    %13 = vector.broadcast %12 : vector<1x128xf32> to vector<2x128xf32>
    %14 = arith.addf %11, %13 : vector<2x128xf32>
    %c0_11 = arith.constant 0 : index
    %c0_12 = arith.constant 0 : index
    %15 = vector.load %arg6[%c0_11, %c0_12] : memref<2x128xf32, #tpu.memory_space<vmem>>, vector<2x128xf32>
    tpu.vector_store %arg6[%c0_11, %c0_12], %14 {strides = array<i32>} : memref<2x128xf32, #tpu.memory_space<vmem>>, vector<2x128xf32>,
    return
  }
  func.func @transform_0(%arg0: i32) -> (i32, i32) {
    %c0_i32 = arith.constant 0 : i32
    %c0_i32_0 = arith.constant 0 : i32
    return %arg0, %c0_i32 : i32, i32
  }
  func.func @transform_1(%arg0: i32) -> (i32, i32) {
    %c0_i32 = arith.constant 0 : i32
    %c0_i32_0 = arith.constant 0 : i32
    %c0_i32_1 = arith.constant 0 : i32
    return %c0_i32, %c0_i32_0 : i32, i32
  }
  func.func @transform_2(%arg0: i32) -> (i32, i32) {
    %c0_i32 = arith.constant 0 : i32
    %c0_i32_0 = arith.constant 0 : i32
    %c0_i32_1 = arith.constant 0 : i32
    return %c0_i32, %c0_i32_0 : i32, i32
  }
  func.func @transform_3(%arg0: i32) -> (i32, i32) {
    %c0_i32 = arith.constant 0 : i32
    %c0_i32_0 = arith.constant 0 : i32
    %c0_i32_1 = arith.constant 0 : i32
    return %c0_i32, %c0_i32_0 : i32, i32
  }
  func.func @transform_4(%arg0: i32) -> (i32, i32) {
    %c0_i32 = arith.constant 0 : i32
    %c0_i32_0 = arith.constant 0 : i32
    %c0_i32_1 = arith.constant 0 : i32
    return %c0_i32, %c0_i32_0 : i32, i32
  }
  func.func @transform_5(%arg0: i32) -> (i32, i32) {
    %c0_i32 = arith.constant 0 : i32
    %c0_i32_0 = arith.constant 0 : i32
    return %arg0, %c0_i32 : i32, i32
  }
}

</mosaic_0001>

<llo_original>
// kernel: simclr_forward.3
$region0: #{simclr_forward.3}
  #allocation0 [shape = 'u32[]', space=smem, size = 0x4, offset = 0x4, fixed_abs, tag = 'smem constant byte address 0x4 - core index']
  #allocation1 [shape = 'u32[72,128]{1,0:T(1,128)}', space=vmem, size = 0x9000, scoped, tag = 'internal scratch']
  %s0 = inlined_call_operand.vmem [shape: bf16[2,4,8,8,32], index: 0, kind: input, shape index: {}]
  %s1 = inlined_call_operand.vmem [shape: bf16[32,64], index: 1, kind: input, shape index: {}]
  %s2 = inlined_call_operand.vmem [shape: bf16[2,4,8,8,64], index: 2, kind: output, shape index: {}]
  %s3 = sld [smem:[#allocation0]]
  $region41: #{simclr_forward.3} parent=0
    _
  %s5 = ssub.s32 1, %s3
  %s6 = scalar_select 0, %s5, %s3
  loop: start=0, step=1, limit=10
  $region2: #{simclr_forward.3} parent=0 // loop_pre_header
    _
  $region3: #{simclr_forward.3} parent=0 // loop_header
    %s8 = sphi 0, %s12
    %p9 = scmp.ge.s32.totalorder %s8, 10
    %s15 = sphi 0, %s34
    %s16 = sphi 0, %s30
    %s17 = sphi 0, %s26
    %s18 = sphi 0, %s15
    %s19 = sphi 0, %s16
    %s20 = sphi 0, %s17
    %s21 = sphi 0, %s18
    %s22 = sphi 0, %s19
    %s23 = sphi 0, %s20
    %s41 = sphi 0, %s43
    %s44 = sphi 0, %s41
    %s45 = sphi 0, %s44
    %s61 = sphi 0, %s45
    %s65 = sphi 0, %s65
    %s67 = sphi 0, %s65
    %s68 = sphi 0, %s67
    %s82 = sphi 0, %s68
    %s92 = sphi 0, %s94
    %s95 = sphi 0, %s92
    %s96 = sphi 0, %s95
    %s112 = sphi 0, %s96
  $region4: #{simclr_forward.3} parent=0 // loop_header_branch
    %11 = sbr.rel (%p9) target = $region8
  $region5: #{simclr_forward.3} parent=0 // loop_body
    %s13 = ssub.s32 %s8, 1
    %s14 = ssub.s32 %s8, 2
    %s24 = sadd.s32 1, %s17
    %p25 = scmp.ge.s32.totalorder %s24, 1
    %s26 = scalar_select %p25, 0, %s24
    %s27 = sadd.s32 1, %s16
    %s28 = scalar_select %p25, %s27, %s16
    %p29 = scmp.ge.s32.totalorder %s28, 4
    %s30 = scalar_select %p29, 0, %s28
    %s31 = sadd.s32 1, %s15
    %s32 = scalar_select %p29, %s31, %s15
    %p33 = scmp.ge.s32.totalorder %s32, 2
    %s34 = scalar_select %p33, 0, %s32
    %s35 = ssub.s32 %s15, %s34
    %s36 = ssub.s32 %s16, %s30
    %s37 = sor.u32 %s35, %s36
    %s38 = ssub.s32 %s17, %s26
    %s39 = sor.u32 %s37, %s38
    %p40 = scmp.eq.s32.totalorder %s39, 0
    %s42 = sadd.s32 %s41, 1
    %s43 = scalar_select %p40, %s41, %s42
    %p46 = pneg %p40
    %p47 = scmp.eq.s32.totalorder %s8, 7
    %p48 = por %p46, %p47
    %p49 = scmp.ne.s32.totalorder %s41, %s44
    %p50 = scmp.eq.s32.totalorder %s8, 0
    %p51 = por %p49, %p50
    %p52 = scmp.ne.s32.totalorder %s41, %s44
    %p53 = scmp.eq.s32.totalorder %s13, 7
    %p54 = por %p52, %p53
    %p55 = scmp.ne.s32.totalorder %s44, %s45
    %p56 = scmp.eq.s32.totalorder %s13, 0
    %p57 = por %p55, %p56
    %p58 = scmp.ne.s32.totalorder %s44, %s45
    %p59 = scmp.eq.s32.totalorder %s14, 7
    %p60 = por %p58, %p59
    %p62 = scmp.ne.s32.totalorder %s45, %s61
    %p63 = scmp.eq.s32.totalorder %s14, 0
    %p64 = por %p62, %p63
    %s66 = sadd.s32 %s65, 1
    %p69 = scmp.eq.s32.totalorder %s8, 7
    %p70 = scmp.ne.s32.totalorder %s65, %s67
    %p71 = scmp.eq.s32.totalorder %s8, 0
    %p72 = por %p70, %p71
    %p73 = scmp.ne.s32.totalorder %s65, %s67
    %p74 = scmp.eq.s32.totalorder %s13, 7
    %p75 = por %p73, %p74
    %p76 = scmp.ne.s32.totalorder %s67, %s68
    %p77 = scmp.eq.s32.totalorder %s13, 0
    %p78 = por %p76, %p77
    %p79 = scmp.ne.s32.totalorder %s67, %s68
    %p80 = scmp.eq.s32.totalorder %s14, 7
    %p81 = por %p79, %p80
    %p83 = scmp.ne.s32.totalorder %s68, %s82
    %p84 = scmp.eq.s32.totalorder %s14, 0
    %p85 = por %p83, %p84
    %s86 = ssub.s32 %s15, %s34
    %s87 = ssub.s32 %s16, %s30
    %s88 = sor.u32 %s86, %s87
    %s89 = ssub.s32 %s17, %s26
    %s90 = sor.u32 %s88, %s89
    %p91 = scmp.eq.s32.totalorder %s90, 0
    %s93 = sadd.s32 %s92, 1
    %s94 = scalar_select %p91, %s92, %s93
    %p97 = pneg %p91
    %p98 = scmp.eq.s32.totalorder %s8, 7
    %p99 = por %p97, %p98
    %p100 = scmp.ne.s32.totalorder %s92, %s95
    %p101 = scmp.eq.s32.totalorder %s8, 0
    %p102 = por %p100, %p101
    %p103 = scmp.ne.s32.totalorder %s92, %s95
    %p104 = scmp.eq.s32.totalorder %s13, 7
    %p105 = por %p103, %p104
    %p106 = scmp.ne.s32.totalorder %s95, %s96
    %p107 = scmp.eq.s32.totalorder %s13, 0
    %p108 = por %p106, %p107
    %p109 = scmp.ne.s32.totalorder %s95, %s96
    %p110 = scmp.eq.s32.totalorder %s14, 7
    %p111 = por %p109, %p110
    %p113 = scmp.ne.s32.totalorder %s96, %s112
    %p114 = scmp.eq.s32.totalorder %s14, 0
    %p115 = por %p113, %p114
    %p116 = scmp.le.s32.totalorder 1, %s8
    %p117 = scmp.lt.s32.totalorder %s8, 9
    %p118 = pnand %p116, %p117
    %p119 = pneg %p118
    // Predicated region
    $region9: #{simclr_forward.3} parent=5 // pred_check
      _
    $region10: #{simclr_forward.3} parent=5 // pred_check_branch
      %121 = sbr.rel (%p118) target = $region12
    $region11: #{simclr_forward.3} parent=5 // pred_region
      %s122 = ssub.s32 %s8, 1
      // Predicated region
      $region13: #{simclr_forward.3} parent=11 // pred_check
        %p123 = pneg %p78
      $region14: #{simclr_forward.3} parent=11 // pred_check_branch
        %125 = sbr.rel (%p123) target = $region16
      $region15: #{simclr_forward.3} parent=11 // pred_region
        _
      $region16: #{simclr_forward.3} parent=11 // pred_fallthru
        _
    $region12: #{simclr_forward.3} parent=5 // pred_fallthru
      _
    %p126 = scmp.lt.s32.totalorder %s8, 8
    // Predicated region
    $region17: #{simclr_forward.3} parent=5 // pred_check
      %p127 = pneg %p126
    $region18: #{simclr_forward.3} parent=5 // pred_check_branch
      %129 = sbr.rel (%p127) target = $region20
    $region19: #{simclr_forward.3} parent=5 // pred_region
      // Predicated region
      $region21: #{simclr_forward.3} parent=19 // pred_check
        %p130 = pneg %p51
      $region22: #{simclr_forward.3} parent=19 // pred_check_branch
        %132 = sbr.rel (%p130) target = $region24
      $region23: #{simclr_forward.3} parent=19 // pred_region
        %s133 = smul.u32 8, %s17
        %p134 = scmp.lt.s32.totalorder %s15, 1
        %s135 = scalar_select %p134, %s15, 1
        %p136 = scmp.lt.s32.totalorder %s16, 3
        %s137 = scalar_select %p136, %s16, 3
        %p138 = scmp.lt.s32.totalorder %s133, 7
        %s139 = scalar_select %p138, %s133, 7
        %s140 = smul.addr %s137, 8
        %s141 = sadd.s32 %s139, %s140
        %s142 = smul.addr %s135, 32
        %s143 = sadd.s32 %s141, %s142
        %s144 = smul.addr %s143, 4
        %s145 = scalar_lea.vmem %s0, %s144
        %s146 = smul.u32 8, %s17
      $region24: #{simclr_forward.3} parent=19 // pred_fallthru
        _
    $region20: #{simclr_forward.3} parent=5 // pred_fallthru
      _
    %p147 = scmp.le.s32.totalorder 1, %s8
    %p148 = scmp.lt.s32.totalorder %s8, 9
    %p149 = pnand %p147, %p148
    %p150 = pneg %p149
    // Predicated region
    $region25: #{simclr_forward.3} parent=5 // pred_check
      _
    $region26: #{simclr_forward.3} parent=5 // pred_check_branch
      %152 = sbr.rel (%p149) target = $region28
    $region27: #{simclr_forward.3} parent=5 // pred_region
      %s153 = ssub.s32 %s8, 1
      %s154 = smul.u32 8, %s20
      %p155 = scmp.lt.s32.totalorder %s18, 1
      %s156 = scalar_select %p155, %s18, 1
      %p157 = scmp.lt.s32.totalorder %s19, 3
      %s158 = scalar_select %p157, %s19, 3
      %p159 = scmp.lt.s32.totalorder %s154, 7
      %s160 = scalar_select %p159, %s154, 7
      %s161 = smul.addr %s158, 8
      %s162 = sadd.s32 %s160, %s161
      %s163 = smul.addr %s156, 32
      %s164 = sadd.s32 %s162, %s163
      %s165 = smul.addr %s164, 4
      %s166 = scalar_lea.vmem %s0, %s165
      %p167 = pneg %p57
      %p168 = pneg %p54
      %p169 = pneg %p78
      %p170 = pneg %p75
      %p171 = pneg %p108
      %p172 = pneg %p105
      %s173 = smul.u32 8, %s20
      %p174 = scmp.lt.s32.totalorder %s18, 1
      %s175 = scalar_select %p174, %s18, 1
      %p176 = scmp.lt.s32.totalorder %s19, 3
      %s177 = scalar_select %p176, %s19, 3
      %p178 = scmp.lt.s32.totalorder %s173, 7
      %s179 = scalar_select %p178, %s173, 7
      %s180 = smul.addr %s177, 8
      %s181 = sadd.s32 %s179, %s180
      %s182 = smul.addr %s175, 32
      %s183 = sadd.s32 %s181, %s182
      %s184 = smul.addr %s183, 4
      %s185 = scalar_lea.vmem %s2, %s184
      %s186 = smul.u32 8, %s20
      %p187 = scmp.lt.s32.totalorder %s18, 1
      %s188 = scalar_select %p187, %s18, 1
      %p189 = scmp.lt.s32.totalorder %s19, 3
      %s190 = scalar_select %p189, %s19, 3
      %p191 = scmp.lt.s32.totalorder %s186, 7
      %s192 = scalar_select %p191, %s186, 7
      %s193 = smul.addr %s190, 8
      %s194 = sadd.s32 %s192, %s193
      %s195 = smul.addr %s188, 32
      %s196 = sadd.s32 %s194, %s195
      %s197 = smul.addr %s196, 4
      %s198 = scalar_lea.vmem %s0, %s197
      %s199 = smul.u32 8, %s20
      %s200 = smul.u32 8, %s20
      %p201 = scmp.lt.s32.totalorder %s18, 1
      %s202 = scalar_select %p201, %s18, 1
      %p203 = scmp.lt.s32.totalorder %s19, 3
      %s204 = scalar_select %p203, %s19, 3
      %p205 = scmp.lt.s32.totalorder %s200, 7
      %s206 = scalar_select %p205, %s200, 7
      %s207 = smul.addr %s204, 8
      %s208 = sadd.s32 %s206, %s207
      %s209 = smul.addr %s202, 32
      %s210 = sadd.s32 %s208, %s209
      %s211 = smul.addr %s210, 4
      %s212 = scalar_lea.vmem %s2, %s211
      %s213 = smul.u32 8, %s20
      %v215 = vld [vmem:[%s198] sm:$0xf]
      %v216 = vld [vmem:[%s198 + $0x4] sm:$0xf]
      %v217 = vld [vmem:[%s198 + $0x8] sm:$0xf]
      %v218 = vld [vmem:[%s198 + $0xc] sm:$0xf]
      %v219 = vld [vmem:[%s198 + $0x10] sm:$0xf]
      %v220 = vld [vmem:[%s198 + $0x14] sm:$0xf]
      %v221 = vld [vmem:[%s198 + $0x18] sm:$0xf]
      %v222 = vld [vmem:[%s198 + $0x1c] sm:$0xf]
      %v223 = vld [vmem:[%s1] sm:$0xf]
      %v224 = vld [vmem:[%s1 + $0x4] sm:$0xf]
      %v225 = vld [vmem:[%s1 + $0x8] sm:$0xf]
      %v226 = vld [vmem:[%s1 + $0xc] sm:$0xf]
      %v235 = vunpack.c.l.b16 %v215
      %v236 = vunpack.c.l.b16 %v216
      %v237 = vunpack.c.l.b16 %v217
      %v238 = vunpack.c.l.b16 %v218
      %v239 = vunpack.c.l.b16 %v219
      %v240 = vunpack.c.l.b16 %v220
      %v241 = vunpack.c.l.b16 %v221
      %v242 = vunpack.c.l.b16 %v222
      %v243 = vpack.c.b16 %v236, %v235
      %v244 = vpack.c.b16 %v238, %v237
      %v245 = vpack.c.b16 %v240, %v239
      %v246 = vpack.c.b16 %v242, %v241
      %v251 = vunpack.c.l.b16 %v223
      %v252 = vunpack.c.l.b16 %v224
      %v253 = vunpack.c.l.b16 %v225
      %v254 = vunpack.c.l.b16 %v226
      %v255 = vpack.c.b16 %v252, %v251
      %v256 = vpack.c.b16 %v254, %v253
      %vm259 = vcmask 261120
      %v261 = vsel %vm259, %v243, 0
      %v264 = vsel %vm259, %v244, 0
      %v267 = vsel %vm259, %v245, 0
      %v270 = vsel %vm259, %v246, 0
      %272 = vmatpush.bf16.msra.mxu0 0
      %273 = vmatpush.bf16.msra.mxu0 0
      %274 = vmatpush.bf16.msra.mxu0 0
      %275 = vmatpush.bf16.msra.mxu0 0
      %276 = vmatpush.bf16.msra.mxu0 0
      %277 = vmatpush.bf16.msra.mxu0 0
      %278 = vmatpush.bf16.msra.mxu0 %v256
      %279 = vmatpush.bf16.msra.mxu0 %v255
      %280 = vmatmul.bf16.gmra.mxu0 %v261
      %v281 = vpop.f32.mrf.mxu0
      %v282 = vadd.f32 0.0, %v281
      %v283 = vpop.f32.mrf.mxu0
      %v284 = vadd.f32 0.0, %v283
      %285 = vmatmul.bf16.gmra.mxu0 %v264
      %v286 = vpop.f32.mrf.mxu0
      %v287 = vadd.f32 0.0, %v286
      %v288 = vpop.f32.mrf.mxu0
      %v289 = vadd.f32 0.0, %v288
      %290 = vmatmul.bf16.gmra.mxu0 %v267
      %v291 = vpop.f32.mrf.mxu0
      %v292 = vadd.f32 0.0, %v291
      %v293 = vpop.f32.mrf.mxu0
      %v294 = vadd.f32 0.0, %v293
      %295 = vmatmul.bf16.gmra.mxu0 %v270
      %v296 = vpop.f32.mrf.mxu0
      %v297 = vadd.f32 0.0, %v296
      %v298 = vpop.f32.mrf.mxu0
      %v299 = vadd.f32 0.0, %v298
      %300 = vdwg.mxu0
      %v301 = vmax.f32 %v282, 0.0
      %v302 = vmax.f32 %v284, 0.0
      %v303 = vmax.f32 %v287, 0.0
      %v304 = vmax.f32 %v289, 0.0
      %v305 = vmax.f32 %v292, 0.0
      %v306 = vmax.f32 %v294, 0.0
      %v307 = vmax.f32 %v297, 0.0
      %v308 = vmax.f32 %v299, 0.0
      %v309 = vpack.c.bf16 %v301, %v301
      %v310 = vpack.c.bf16 %v302, %v302
      %v311 = vpack.c.bf16 %v303, %v303
      %v312 = vpack.c.bf16 %v304, %v304
      %v313 = vpack.c.bf16 %v305, %v305
      %v314 = vpack.c.bf16 %v306, %v306
      %v315 = vpack.c.bf16 %v307, %v307
      %v316 = vpack.c.bf16 %v308, %v308
      %vm317 = vcmask 519168
      %318 = vst.msk [vmem:[%s212] sm:$0xf] %vm317, %v309
      %319 = vst.msk [vmem:[%s212 + $0x4] sm:$0xf] %vm317, %v310
      %320 = vst.msk [vmem:[%s212 + $0x8] sm:$0xf] %vm317, %v311
      %321 = vst.msk [vmem:[%s212 + $0xc] sm:$0xf] %vm317, %v312
      %322 = vst.msk [vmem:[%s212 + $0x10] sm:$0xf] %vm317, %v313
      %323 = vst.msk [vmem:[%s212 + $0x14] sm:$0xf] %vm317, %v314
      %324 = vst.msk [vmem:[%s212 + $0x18] sm:$0xf] %vm317, %v315
      %325 = vst.msk [vmem:[%s212 + $0x1c] sm:$0xf] %vm317, %v316
      %s326 = smul.u32 8, %s20
      %p327 = scmp.lt.s32.totalorder %s18, 1
      %s328 = scalar_select %p327, %s18, 1
      %p329 = scmp.lt.s32.totalorder %s19, 3
      %s330 = scalar_select %p329, %s19, 3
      %p331 = scmp.lt.s32.totalorder %s326, 7
      %s332 = scalar_select %p331, %s326, 7
      %s333 = smul.addr %s330, 8
      %s334 = sadd.s32 %s332, %s333
      %s335 = smul.addr %s328, 32
      %s336 = sadd.s32 %s334, %s335
      %s337 = smul.addr %s336, 4
      %s338 = scalar_lea.vmem %s2, %s337
      // Predicated region
      $region29: #{simclr_forward.3} parent=27 // pred_check
        %p339 = pneg %p105
      $region30: #{simclr_forward.3} parent=27 // pred_check_branch
        %341 = sbr.rel (%p339) target = $region32
      $region31: #{simclr_forward.3} parent=27 // pred_region
        %s342 = smul.u32 8, %s20
      $region32: #{simclr_forward.3} parent=27 // pred_fallthru
        _
    $region28: #{simclr_forward.3} parent=5 // pred_fallthru
      _
    %p343 = scmp.le.s32.totalorder 2, %s8
    // Predicated region
    $region33: #{simclr_forward.3} parent=5 // pred_check
      %p344 = pneg %p343
    $region34: #{simclr_forward.3} parent=5 // pred_check_branch
      %346 = sbr.rel (%p344) target = $region36
    $region35: #{simclr_forward.3} parent=5 // pred_region
      %s347 = ssub.s32 %s8, 2
      // Predicated region
      $region37: #{simclr_forward.3} parent=35 // pred_check
        %p348 = pneg %p111
      $region38: #{simclr_forward.3} parent=35 // pred_check_branch
        %350 = sbr.rel (%p348) target = $region40
      $region39: #{simclr_forward.3} parent=35 // pred_region
        %s351 = smul.u32 8, %s23
        %p352 = scmp.lt.s32.totalorder %s21, 1
        %s353 = scalar_select %p352, %s21, 1
        %p354 = scmp.lt.s32.totalorder %s22, 3
        %s355 = scalar_select %p354, %s22, 3
        %p356 = scmp.lt.s32.totalorder %s351, 7
        %s357 = scalar_select %p356, %s351, 7
        %s358 = smul.addr %s355, 8
        %s359 = sadd.s32 %s357, %s358
        %s360 = smul.addr %s353, 32
        %s361 = sadd.s32 %s359, %s360
        %s362 = smul.addr %s361, 4
        %s363 = scalar_lea.vmem %s2, %s362
      $region40: #{simclr_forward.3} parent=35 // pred_fallthru
        _
    $region36: #{simclr_forward.3} parent=5 // pred_fallthru
      _
  $region6: #{simclr_forward.3} parent=0 // loop_footer
    %s12 = sadd.s32 1, %s8
  $region7: #{simclr_forward.3} parent=0 // loop_footer_branch
    %7 = sbr.rel target = $region3
  $region8: #{simclr_forward.3} parent=0 // loop_exit
    _

// kernel: simclr_forward.4
$region0: #{simclr_forward.4}
  #allocation0 [shape = 'u32[]', space=smem, size = 0x4, offset = 0x4, fixed_abs, tag = 'smem constant byte address 0x4 - core index']
  #allocation1 [shape = 'u32[72,128]{1,0:T(1,128)}', space=vmem, size = 0x9000, scoped, tag = 'internal scratch']
  %s0 = inlined_call_operand.vmem [shape: bf16[2,4,8,8,64], index: 0, kind: input, shape index: {}]
  %s1 = inlined_call_operand.vmem [shape: bf16[576,128], index: 1, kind: input, shape index: {}]
  %s2 = inlined_call_operand.vmem [shape: f32[2,1,128], index: 2, kind: output, shape index: {}]
  %s3 = sld [smem:[#allocation0]]
  $region41: #{simclr_forward.4} parent=0
    _
  %s5 = ssub.s32 1, %s3
  %s6 = scalar_select 0, %s5, %s3
  loop: start=0, step=1, limit=4
  $region2: #{simclr_forward.4} parent=0 // loop_pre_header
    _
  $region3: #{simclr_forward.4} parent=0 // loop_header
    %s8 = sphi 0, %s12
    %p9 = scmp.ge.s32.totalorder %s8, 4
    %s18 = sphi 0, %s20
    %s21 = sphi 0, %s18
    %s22 = sphi 0, %s21
    %s38 = sphi 0, %s22
    %s42 = sphi 0, %s42
    %s44 = sphi 0, %s42
    %s45 = sphi 0, %s44
    %s59 = sphi 0, %s45
    %s65 = sphi 0, %s67
    %s68 = sphi 0, %s65
    %s69 = sphi 0, %s68
    %s85 = sphi 0, %s69
  $region4: #{simclr_forward.4} parent=0 // loop_header_branch
    %11 = sbr.rel (%p9) target = $region8
  $region5: #{simclr_forward.4} parent=0 // loop_body
    %s13 = ssub.s32 %s8, 1
    %s14 = ssub.s32 %s8, 2
    %s15 = sadd.s32 %s8, 1
    %s16 = ssub.s32 %s8, %s15
    %p17 = scmp.eq.s32.totalorder %s16, 0
    %s19 = sadd.s32 %s18, 1
    %s20 = scalar_select %p17, %s18, %s19
    %p23 = pneg %p17
    %p24 = scmp.eq.s32.totalorder %s8, 1
    %p25 = por %p23, %p24
    %p26 = scmp.ne.s32.totalorder %s18, %s21
    %p27 = scmp.eq.s32.totalorder %s8, 0
    %p28 = por %p26, %p27
    %p29 = scmp.ne.s32.totalorder %s18, %s21
    %p30 = scmp.eq.s32.totalorder %s13, 1
    %p31 = por %p29, %p30
    %p32 = scmp.ne.s32.totalorder %s21, %s22
    %p33 = scmp.eq.s32.totalorder %s13, 0
    %p34 = por %p32, %p33
    %p35 = scmp.ne.s32.totalorder %s21, %s22
    %p36 = scmp.eq.s32.totalorder %s14, 1
    %p37 = por %p35, %p36
    %p39 = scmp.ne.s32.totalorder %s22, %s38
    %p40 = scmp.eq.s32.totalorder %s14, 0
    %p41 = por %p39, %p40
    %s43 = sadd.s32 %s42, 1
    %p46 = scmp.eq.s32.totalorder %s8, 1
    %p47 = scmp.ne.s32.totalorder %s42, %s44
    %p48 = scmp.eq.s32.totalorder %s8, 0
    %p49 = por %p47, %p48
    %p50 = scmp.ne.s32.totalorder %s42, %s44
    %p51 = scmp.eq.s32.totalorder %s13, 1
    %p52 = por %p50, %p51
    %p53 = scmp.ne.s32.totalorder %s44, %s45
    %p54 = scmp.eq.s32.totalorder %s13, 0
    %p55 = por %p53, %p54
    %p56 = scmp.ne.s32.totalorder %s44, %s45
    %p57 = scmp.eq.s32.totalorder %s14, 1
    %p58 = por %p56, %p57
    %p60 = scmp.ne.s32.totalorder %s45, %s59
    %p61 = scmp.eq.s32.totalorder %s14, 0
    %p62 = por %p60, %p61
    %s63 = ssub.s32 %s8, %s15
    %p64 = scmp.eq.s32.totalorder %s63, 0
    %s66 = sadd.s32 %s65, 1
    %s67 = scalar_select %p64, %s65, %s66
    %p70 = pneg %p64
    %p71 = scmp.eq.s32.totalorder %s8, 1
    %p72 = por %p70, %p71
    %p73 = scmp.ne.s32.totalorder %s65, %s68
    %p74 = scmp.eq.s32.totalorder %s8, 0
    %p75 = por %p73, %p74
    %p76 = scmp.ne.s32.totalorder %s65, %s68
    %p77 = scmp.eq.s32.totalorder %s13, 1
    %p78 = por %p76, %p77
    %p79 = scmp.ne.s32.totalorder %s68, %s69
    %p80 = scmp.eq.s32.totalorder %s13, 0
    %p81 = por %p79, %p80
    %p82 = scmp.ne.s32.totalorder %s68, %s69
    %p83 = scmp.eq.s32.totalorder %s14, 1
    %p84 = por %p82, %p83
    %p86 = scmp.ne.s32.totalorder %s69, %s85
    %p87 = scmp.eq.s32.totalorder %s14, 0
    %p88 = por %p86, %p87
    %p89 = scmp.le.s32.totalorder 1, %s8
    %p90 = scmp.lt.s32.totalorder %s8, 3
    %p91 = pnand %p89, %p90
    %p92 = pneg %p91
    // Predicated region
    $region9: #{simclr_forward.4} parent=5 // pred_check
      _
    $region10: #{simclr_forward.4} parent=5 // pred_check_branch
      %94 = sbr.rel (%p91) target = $region12
    $region11: #{simclr_forward.4} parent=5 // pred_region
      %s95 = ssub.s32 %s8, 1
      // Predicated region
      $region13: #{simclr_forward.4} parent=11 // pred_check
        %p96 = pneg %p55
      $region14: #{simclr_forward.4} parent=11 // pred_check_branch
        %98 = sbr.rel (%p96) target = $region16
      $region15: #{simclr_forward.4} parent=11 // pred_region
        _
      $region16: #{simclr_forward.4} parent=11 // pred_fallthru
        _
    $region12: #{simclr_forward.4} parent=5 // pred_fallthru
      _
    %p99 = scmp.lt.s32.totalorder %s8, 2
    // Predicated region
    $region17: #{simclr_forward.4} parent=5 // pred_check
      %p100 = pneg %p99
    $region18: #{simclr_forward.4} parent=5 // pred_check_branch
      %102 = sbr.rel (%p100) target = $region20
    $region19: #{simclr_forward.4} parent=5 // pred_region
      // Predicated region
      $region21: #{simclr_forward.4} parent=19 // pred_check
        %p103 = pneg %p28
      $region22: #{simclr_forward.4} parent=19 // pred_check_branch
        %105 = sbr.rel (%p103) target = $region24
      $region23: #{simclr_forward.4} parent=19 // pred_region
        %p106 = scmp.lt.s32.totalorder %s8, 1
        %s107 = scalar_select %p106, %s8, 1
        %s108 = smul.addr %s107, 32
        %s109 = smul.addr %s108, 4
        %s110 = scalar_lea.vmem %s0, %s109
      $region24: #{simclr_forward.4} parent=19 // pred_fallthru
        _
    $region20: #{simclr_forward.4} parent=5 // pred_fallthru
      _
    %p111 = scmp.le.s32.totalorder 1, %s8
    %p112 = scmp.lt.s32.totalorder %s8, 3
    %p113 = pnand %p111, %p112
    %p114 = pneg %p113
    // Predicated region
    $region25: #{simclr_forward.4} parent=5 // pred_check
      _
    $region26: #{simclr_forward.4} parent=5 // pred_check_branch
      %116 = sbr.rel (%p113) target = $region28
    $region27: #{simclr_forward.4} parent=5 // pred_region
      %s117 = ssub.s32 %s8, 1
      %p118 = scmp.lt.s32.totalorder %s13, 1
      %s119 = scalar_select %p118, %s13, 1
      %s120 = smul.addr %s119, 32
      %s121 = smul.addr %s120, 4
      %s122 = scalar_lea.vmem %s0, %s121
      %p123 = pneg %p34
      %p124 = pneg %p31
      %p125 = pneg %p55
      %p126 = pneg %p52
      %p127 = pneg %p81
      %p128 = pneg %p78
      %p129 = scmp.lt.s32.totalorder %s13, 1
      %s130 = scalar_select %p129, %s13, 1
      %s131 = scalar_lea.vmem %s2, %s130
      %p132 = scmp.lt.s32.totalorder %s13, 1
      %s133 = scalar_select %p132, %s13, 1
      %s134 = smul.addr %s133, 32
      %s135 = smul.addr %s134, 4
      %s136 = scalar_lea.vmem %s0, %s135
      %p137 = scmp.lt.s32.totalorder %s13, 1
      %s138 = scalar_select %p137, %s13, 1
      %s139 = scalar_lea.vmem %s2, %s138
      %v141 = vld [vmem:[%s136] sm:$0xf]
      %v142 = vld [vmem:[%s136 + $0x4] sm:$0xf]
      %v143 = vld [vmem:[%s136 + $0x8] sm:$0xf]
      %v144 = vld [vmem:[%s136 + $0xc] sm:$0xf]
      %v145 = vld [vmem:[%s136 + $0x10] sm:$0xf]
      %v146 = vld [vmem:[%s136 + $0x14] sm:$0xf]
      %v147 = vld [vmem:[%s136 + $0x18] sm:$0xf]
      %v148 = vld [vmem:[%s136 + $0x1c] sm:$0xf]
      %v150 = vshrl.u32 %v141, 16
      %v152 = vrot.slane %v150, 7
      %v153 = vshll.u32 %v141, 16
      %v155 = vor.u32 %v152, %v153
      %v157 = vshrl.u32 %v142, 16
      %v159 = vrot.slane %v157, 7
      %v160 = vshll.u32 %v142, 16
      %v162 = vor.u32 %v159, %v160
      %v164 = vshrl.u32 %v143, 16
      %v166 = vrot.slane %v164, 7
      %v167 = vshll.u32 %v143, 16
      %v169 = vor.u32 %v166, %v167
      %v171 = vshrl.u32 %v144, 16
      %v173 = vrot.slane %v171, 7
      %v174 = vshll.u32 %v144, 16
      %v176 = vor.u32 %v173, %v174
      %v178 = vshrl.u32 %v145, 16
      %v180 = vrot.slane %v178, 7
      %v181 = vshll.u32 %v145, 16
      %v183 = vor.u32 %v180, %v181
      %v185 = vshrl.u32 %v146, 16
      %v187 = vrot.slane %v185, 7
      %v188 = vshll.u32 %v146, 16
      %v190 = vor.u32 %v187, %v188
      %v192 = vshrl.u32 %v147, 16
      %v194 = vrot.slane %v192, 7
      %v195 = vshll.u32 %v147, 16
      %v197 = vor.u32 %v194, %v195
      %v199 = vshrl.u32 %v148, 16
      %v201 = vrot.slane %v199, 7
      %v202 = vshll.u32 %v148, 16
      %v204 = vor.u32 %v201, %v202
      %vm213 = vcmask 1040384
      %vm214 = vsmask.f32 256
      %vm215 = vmand %vm213, %vm214
      %v216 = vsel %vm215, 0, %v155
      %v217 = vsel %vm215, 0, %v162
      %v218 = vsel %vm215, 0, %v169
      %v219 = vsel %vm215, 0, %v176
      %v220 = vsel %vm215, 0, %v183
      %v221 = vsel %vm215, 0, %v190
      %v222 = vsel %vm215, 0, %v197
      %v223 = vsel %vm215, 0, %v204
      %s224 = scalar_lea.vmem %s136, 32
      %v225 = vld [vmem:[%s224] sm:$0xf]
      %v226 = vld [vmem:[%s224 + $0x4] sm:$0xf]
      %v227 = vld [vmem:[%s224 + $0x8] sm:$0xf]
      %v228 = vld [vmem:[%s224 + $0xc] sm:$0xf]
      %v229 = vld [vmem:[%s224 + $0x10] sm:$0xf]
      %v230 = vld [vmem:[%s224 + $0x14] sm:$0xf]
      %v231 = vld [vmem:[%s224 + $0x18] sm:$0xf]
      %v232 = vld [vmem:[%s224 + $0x1c] sm:$0xf]
      %v234 = vshrl.u32 %v225, 16
      %v236 = vrot.slane %v234, 7
      %v237 = vshll.u32 %v225, 16
      %v239 = vor.u32 %v236, %v237
      %v241 = vshrl.u32 %v226, 16
      %v243 = vrot.slane %v241, 7
      %v244 = vshll.u32 %v226, 16
      %v246 = vor.u32 %v243, %v244
      %v248 = vshrl.u32 %v227, 16
      %v250 = vrot.slane %v248, 7
      %v251 = vshll.u32 %v227, 16
      %v253 = vor.u32 %v250, %v251
      %v255 = vshrl.u32 %v228, 16
      %v257 = vrot.slane %v255, 7
      %v258 = vshll.u32 %v228, 16
      %v260 = vor.u32 %v257, %v258
      %v262 = vshrl.u32 %v229, 16
      %v264 = vrot.slane %v262, 7
      %v265 = vshll.u32 %v229, 16
      %v267 = vor.u32 %v264, %v265
      %v269 = vshrl.u32 %v230, 16
      %v271 = vrot.slane %v269, 7
      %v272 = vshll.u32 %v230, 16
      %v274 = vor.u32 %v271, %v272
      %v276 = vshrl.u32 %v231, 16
      %v278 = vrot.slane %v276, 7
      %v279 = vshll.u32 %v231, 16
      %v281 = vor.u32 %v278, %v279
      %v283 = vshrl.u32 %v232, 16
      %v285 = vrot.slane %v283, 7
      %v286 = vshll.u32 %v232, 16
      %v288 = vor.u32 %v285, %v286
      %v297 = vsel %vm215, 0, %v239
      %v298 = vsel %vm215, 0, %v246
      %v299 = vsel %vm215, 0, %v253
      %v300 = vsel %vm215, 0, %v260
      %v301 = vsel %vm215, 0, %v267
      %v302 = vsel %vm215, 0, %v274
      %v303 = vsel %vm215, 0, %v281
      %v304 = vsel %vm215, 0, %v288
      %s305 = scalar_lea.vmem %s136, 64
      %v306 = vld [vmem:[%s305] sm:$0xf]
      %v307 = vld [vmem:[%s305 + $0x4] sm:$0xf]
      %v308 = vld [vmem:[%s305 + $0x8] sm:$0xf]
      %v309 = vld [vmem:[%s305 + $0xc] sm:$0xf]
      %v310 = vld [vmem:[%s305 + $0x10] sm:$0xf]
      %v311 = vld [vmem:[%s305 + $0x14] sm:$0xf]
      %v312 = vld [vmem:[%s305 + $0x18] sm:$0xf]
      %v313 = vld [vmem:[%s305 + $0x1c] sm:$0xf]
      %v315 = vshrl.u32 0, 16
      %v317 = vrot.slane %v315, 7
      %v318 = vshll.u32 0, 16
      %v320 = vor.u32 %v317, %v318
      %v322 = vshrl.u32 %v306, 16
      %v324 = vrot.slane %v322, 7
      %v325 = vshll.u32 %v306, 16
      %v327 = vor.u32 %v324, %v325
      %v329 = vshrl.u32 %v307, 16
      %v331 = vrot.slane %v329, 7
      %v332 = vshll.u32 %v307, 16
      %v334 = vor.u32 %v331, %v332
      %v336 = vshrl.u32 %v308, 16
      %v338 = vrot.slane %v336, 7
      %v339 = vshll.u32 %v308, 16
      %v341 = vor.u32 %v338, %v339
      %v343 = vshrl.u32 %v309, 16
      %v345 = vrot.slane %v343, 7
      %v346 = vshll.u32 %v309, 16
      %v348 = vor.u32 %v345, %v346
      %v350 = vshrl.u32 %v310, 16
      %v352 = vrot.slane %v350, 7
      %v353 = vshll.u32 %v310, 16
      %v355 = vor.u32 %v352, %v353
      %v357 = vshrl.u32 %v311, 16
      %v359 = vrot.slane %v357, 7
      %v360 = vshll.u32 %v311, 16
      %v362 = vor.u32 %v359, %v360
      %v364 = vshrl.u32 %v312, 16
      %v366 = vrot.slane %v364, 7
      %v367 = vshll.u32 %v312, 16
      %v369 = vor.u32 %v366, %v367
      %v371 = vshrl.u32 %v313, 16
      %v373 = vrot.slane %v371, 7
      %v374 = vshll.u32 %v313, 16
      %v376 = vor.u32 %v373, %v374
      %v386 = vsel %vm215, 0, %v320
      %v387 = vsel %vm215, 0, %v327
      %v388 = vsel %vm215, 0, %v334
      %v389 = vsel %vm215, 0, %v341
      %v390 = vsel %vm215, 0, %v348
      %v391 = vsel %vm215, 0, %v355
      %v392 = vsel %vm215, 0, %v362
      %v393 = vsel %vm215, 0, %v369
      %v394 = vsel %vm215, 0, %v376
      %s395 = scalar_lea.vmem %s136, 96
      %v396 = vld [vmem:[%s395] sm:$0xf]
      %v397 = vld [vmem:[%s395 + $0x4] sm:$0xf]
      %v398 = vld [vmem:[%s395 + $0x8] sm:$0xf]
      %v399 = vld [vmem:[%s395 + $0xc] sm:$0xf]
      %v400 = vld [vmem:[%s395 + $0x10] sm:$0xf]
      %v401 = vld [vmem:[%s395 + $0x14] sm:$0xf]
      %v402 = vld [vmem:[%s395 + $0x18] sm:$0xf]
      %v403 = vld [vmem:[%s395 + $0x1c] sm:$0xf]
      %v405 = vshrl.u32 %v396, 16
      %v407 = vrot.slane %v405, 7
      %v408 = vshll.u32 %v396, 16
      %v410 = vor.u32 %v407, %v408
      %v412 = vshrl.u32 %v397, 16
      %v414 = vrot.slane %v412, 7
      %v415 = vshll.u32 %v397, 16
      %v417 = vor.u32 %v414, %v415
      %v419 = vshrl.u32 %v398, 16
      %v421 = vrot.slane %v419, 7
      %v422 = vshll.u32 %v398, 16
      %v424 = vor.u32 %v421, %v422
      %v426 = vshrl.u32 %v399, 16
      %v428 = vrot.slane %v426, 7
      %v429 = vshll.u32 %v399, 16
      %v431 = vor.u32 %v428, %v429
      %v433 = vshrl.u32 %v400, 16
      %v435 = vrot.slane %v433, 7
      %v436 = vshll.u32 %v400, 16
      %v438 = vor.u32 %v435, %v436
      %v440 = vshrl.u32 %v401, 16
      %v442 = vrot.slane %v440, 7
      %v443 = vshll.u32 %v401, 16
      %v445 = vor.u32 %v442, %v443
      %v447 = vshrl.u32 %v402, 16
      %v449 = vrot.slane %v447, 7
      %v450 = vshll.u32 %v402, 16
      %v452 = vor.u32 %v449, %v450
      %v454 = vshrl.u32 %v403, 16
      %v456 = vrot.slane %v454, 7
      %v457 = vshll.u32 %v403, 16
      %v459 = vor.u32 %v456, %v457
      %v468 = vsel %vm215, 0, %v410
      %v469 = vsel %vm215, 0, %v417
      %v470 = vsel %vm215, 0, %v424
      %v471 = vsel %vm215, 0, %v431
      %v472 = vsel %vm215, 0, %v438
      %v473 = vsel %vm215, 0, %v445
      %v474 = vsel %vm215, 0, %v452
      %v475 = vsel %vm215, 0, %v459
      %v477 = vshrl.u32 %v386, 16
      %v479 = vshll.u32 %v386, 16
      %v481 = vrot.slane %v479, 1
      %v482 = vor.u32 %v477, %v481
      %v484 = vshrl.u32 %v387, 16
      %v486 = vshll.u32 %v387, 16
      %v488 = vrot.slane %v486, 1
      %v489 = vor.u32 %v484, %v488
      %v491 = vshrl.u32 %v388, 16
      %v493 = vshll.u32 %v388, 16
      %v495 = vrot.slane %v493, 1
      %v496 = vor.u32 %v491, %v495
      %v498 = vshrl.u32 %v389, 16
      %v500 = vshll.u32 %v389, 16
      %v502 = vrot.slane %v500, 1
      %v503 = vor.u32 %v498, %v502
      %v505 = vshrl.u32 %v390, 16
      %v507 = vshll.u32 %v390, 16
      %v509 = vrot.slane %v507, 1
      %v510 = vor.u32 %v505, %v509
      %v512 = vshrl.u32 %v391, 16
      %v514 = vshll.u32 %v391, 16
      %v516 = vrot.slane %v514, 1
      %v517 = vor.u32 %v512, %v516
      %v519 = vshrl.u32 %v392, 16
      %v521 = vshll.u32 %v392, 16
      %v523 = vrot.slane %v521, 1
      %v524 = vor.u32 %v519, %v523
      %v526 = vshrl.u32 %v393, 16
      %v528 = vshll.u32 %v393, 16
      %v530 = vrot.slane %v528, 1
      %v531 = vor.u32 %v526, %v530
      %532 = vrot.lane.b32.xlu0 %v482, 64
      %v533 = vpop.permute.xlu0 %532
      %534 = vrot.lane.b32.xlu0 %v489, 64
      %v535 = vpop.permute.xlu0 %534
      %536 = vrot.lane.b32.xlu0 %v496, 64
      %v537 = vpop.permute.xlu0 %536
      %538 = vrot.lane.b32.xlu0 %v503, 64
      %v539 = vpop.permute.xlu0 %538
      %540 = vrot.lane.b32.xlu0 %v510, 64
      %v541 = vpop.permute.xlu0 %540
      %542 = vrot.lane.b32.xlu0 %v517, 64
      %v543 = vpop.permute.xlu0 %542
      %544 = vrot.lane.b32.xlu0 %v524, 64
      %v545 = vpop.permute.xlu0 %544
      %546 = vrot.lane.b32.xlu0 %v531, 64
      %v547 = vpop.permute.xlu0 %546
      %v549 = vshrl.u32 %v468, 16
      %v551 = vshll.u32 %v468, 16
      %v553 = vrot.slane %v551, 1
      %v554 = vor.u32 %v549, %v553
      %v556 = vshrl.u32 %v469, 16
      %v558 = vshll.u32 %v469, 16
      %v560 = vrot.slane %v558, 1
      %v561 = vor.u32 %v556, %v560
      %v563 = vshrl.u32 %v470, 16
      %v565 = vshll.u32 %v470, 16
      %v567 = vrot.slane %v565, 1
      %v568 = vor.u32 %v563, %v567
      %v570 = vshrl.u32 %v471, 16
      %v572 = vshll.u32 %v471, 16
      %v574 = vrot.slane %v572, 1
      %v575 = vor.u32 %v570, %v574
      %v577 = vshrl.u32 %v472, 16
      %v579 = vshll.u32 %v472, 16
      %v581 = vrot.slane %v579, 1
      %v582 = vor.u32 %v577, %v581
      %v584 = vshrl.u32 %v473, 16
      %v586 = vshll.u32 %v473, 16
      %v588 = vrot.slane %v586, 1
      %v589 = vor.u32 %v584, %v588
      %v591 = vshrl.u32 %v474, 16
      %v593 = vshll.u32 %v474, 16
      %v595 = vrot.slane %v593, 1
      %v596 = vor.u32 %v591, %v595
      %605 = vrot.lane.b32.xlu0 %v297, 64
      %v606 = vpop.permute.xlu0 %605
      %607 = vrot.lane.b32.xlu0 %v298, 64
      %v608 = vpop.permute.xlu0 %607
      %609 = vrot.lane.b32.xlu0 %v299, 64
      %v610 = vpop.permute.xlu0 %609
      %611 = vrot.lane.b32.xlu0 %v300, 64
      %v612 = vpop.permute.xlu0 %611
      %613 = vrot.lane.b32.xlu0 %v301, 64
      %v614 = vpop.permute.xlu0 %613
      %615 = vrot.lane.b32.xlu0 %v302, 64
      %v616 = vpop.permute.xlu0 %615
      %617 = vrot.lane.b32.xlu0 %v303, 64
      %v618 = vpop.permute.xlu0 %617
      %619 = vrot.lane.b32.xlu0 %v304, 64
      %v620 = vpop.permute.xlu0 %619
      %v622 = vshrl.u32 %v216, 16
      %v624 = vshll.u32 %v216, 16
      %v626 = vrot.slane %v624, 1
      %v627 = vor.u32 %v622, %v626
      %v629 = vshrl.u32 %v217, 16
      %v631 = vshll.u32 %v217, 16
      %v633 = vrot.slane %v631, 1
      %v634 = vor.u32 %v629, %v633
      %v636 = vshrl.u32 %v218, 16
      %v638 = vshll.u32 %v218, 16
      %v640 = vrot.slane %v638, 1
      %v641 = vor.u32 %v636, %v640
      %v643 = vshrl.u32 %v219, 16
      %v645 = vshll.u32 %v219, 16
      %v647 = vrot.slane %v645, 1
      %v648 = vor.u32 %v643, %v647
      %v650 = vshrl.u32 %v220, 16
      %v652 = vshll.u32 %v220, 16
      %v654 = vrot.slane %v652, 1
      %v655 = vor.u32 %v650, %v654
      %v657 = vshrl.u32 %v221, 16
      %v659 = vshll.u32 %v221, 16
      %v661 = vrot.slane %v659, 1
      %v662 = vor.u32 %v657, %v661
      %v664 = vshrl.u32 %v222, 16
      %v666 = vshll.u32 %v222, 16
      %v668 = vrot.slane %v666, 1
      %v669 = vor.u32 %v664, %v668
      %v671 = vshrl.u32 %v223, 16
      %v673 = vshll.u32 %v223, 16
      %v675 = vrot.slane %v673, 1
      %v676 = vor.u32 %v671, %v675
      %v678 = vshrl.u32 %v297, 16
      %v680 = vshll.u32 %v297, 16
      %v682 = vrot.slane %v680, 1
      %v683 = vor.u32 %v678, %v682
      %v685 = vshrl.u32 %v298, 16
      %v687 = vshll.u32 %v298, 16
      %v689 = vrot.slane %v687, 1
      %v690 = vor.u32 %v685, %v689
      %v692 = vshrl.u32 %v299, 16
      %v694 = vshll.u32 %v299, 16
      %v696 = vrot.slane %v694, 1
      %v697 = vor.u32 %v692, %v696
      %v699 = vshrl.u32 %v300, 16
      %v701 = vshll.u32 %v300, 16
      %v703 = vrot.slane %v701, 1
      %v704 = vor.u32 %v699, %v703
      %v706 = vshrl.u32 %v301, 16
      %v708 = vshll.u32 %v301, 16
      %v710 = vrot.slane %v708, 1
      %v711 = vor.u32 %v706, %v710
      %v713 = vshrl.u32 %v302, 16
      %v715 = vshll.u32 %v302, 16
      %v717 = vrot.slane %v715, 1
      %v718 = vor.u32 %v713, %v717
      %v720 = vshrl.u32 %v303, 16
      %v722 = vshll.u32 %v303, 16
      %v724 = vrot.slane %v722, 1
      %v725 = vor.u32 %v720, %v724
      %v727 = vshrl.u32 %v304, 16
      %v729 = vshll.u32 %v304, 16
      %v731 = vrot.slane %v729, 1
      %v732 = vor.u32 %v727, %v731
      %733 = vrot.lane.b32.xlu0 %v683, 64
      %v734 = vpop.permute.xlu0 %733
      %735 = vrot.lane.b32.xlu0 %v690, 64
      %v736 = vpop.permute.xlu0 %735
      %737 = vrot.lane.b32.xlu0 %v697, 64
      %v738 = vpop.permute.xlu0 %737
      %739 = vrot.lane.b32.xlu0 %v704, 64
      %v740 = vpop.permute.xlu0 %739
      %741 = vrot.lane.b32.xlu0 %v711, 64
      %v742 = vpop.permute.xlu0 %741
      %743 = vrot.lane.b32.xlu0 %v718, 64
      %v744 = vpop.permute.xlu0 %743
      %745 = vrot.lane.b32.xlu0 %v725, 64
      %v746 = vpop.permute.xlu0 %745
      %747 = vrot.lane.b32.xlu0 %v732, 64
      %v748 = vpop.permute.xlu0 %747
      %v750 = vshrl.u32 %v394, 16
      %v752 = vshll.u32 %v394, 16
      %v754 = vrot.slane %v752, 1
      %v755 = vor.u32 %v750, %v754
      %756 = vrot.lane.b32.xlu0 %v755, 64
      %v757 = vpop.permute.xlu0 %756
      %v759 = vshrl.u32 %v475, 16
      %v761 = vshll.u32 %v475, 16
      %v763 = vrot.slane %v761, 1
      %v764 = vor.u32 %v759, %v763
      %vm765 = vcmask 523264
      %v767 = vsel %vm765, %v386, %v533
      %v769 = vsel %vm765, %v468, %v535
      %v771 = vsel %vm765, %v469, %v537
      %v773 = vsel %vm765, %v470, %v539
      %v775 = vsel %vm765, %v471, %v541
      %v777 = vsel %vm765, %v472, %v543
      %v779 = vsel %vm765, %v473, %v545
      %v781 = vsel %vm765, %v474, %v547
      %v784 = vsel %vm765, %v482, %v606
      %v787 = vsel %vm765, %v554, %v608
      %v790 = vsel %vm765, %v561, %v610
      %v793 = vsel %vm765, %v568, %v612
      %v796 = vsel %vm765, %v575, %v614
      %v799 = vsel %vm765, %v582, %v616
      %v802 = vsel %vm765, %v589, %v618
      %v805 = vsel %vm765, %v596, %v620
      %v808 = vsel %vm765, %v627, %v734
      %v811 = vsel %vm765, %v634, %v736
      %v814 = vsel %vm765, %v641, %v738
      %v817 = vsel %vm765, %v648, %v740
      %v820 = vsel %vm765, %v655, %v742
      %v823 = vsel %vm765, %v662, %v744
      %v826 = vsel %vm765, %v669, %v746
      %v829 = vsel %vm765, %v676, %v748
      %v831 = vsel %vm765, %v475, %v757
      %v857 = vunpack.c.l.b16 %v767
      %v858 = vunpack.c.l.b16 %v784
      %v859 = vunpack.c.l.b16 %v808
      %v860 = vunpack.c.l.b16 %v769
      %v861 = vunpack.c.l.b16 %v554
      %v862 = vunpack.c.l.b16 %v787
      %v863 = vunpack.c.l.b16 %v811
      %v864 = vunpack.c.l.b16 %v771
      %v865 = vunpack.c.l.b16 %v561
      %v866 = vunpack.c.l.b16 %v790
      %v867 = vunpack.c.l.b16 %v814
      %v868 = vunpack.c.l.b16 %v773
      %v869 = vunpack.c.l.b16 %v568
      %v870 = vunpack.c.l.b16 %v793
      %v871 = vunpack.c.l.b16 %v817
      %v872 = vunpack.c.l.b16 %v775
      %v873 = vunpack.c.l.b16 %v575
      %v874 = vunpack.c.l.b16 %v796
      %v875 = vunpack.c.l.b16 %v820
      %v876 = vunpack.c.l.b16 %v777
      %v877 = vunpack.c.l.b16 %v582
      %v878 = vunpack.c.l.b16 %v799
      %v879 = vunpack.c.l.b16 %v823
      %v880 = vunpack.c.l.b16 %v779
      %v881 = vunpack.c.l.b16 %v589
      %v882 = vunpack.c.l.b16 %v802
      %v883 = vunpack.c.l.b16 %v826
      %v884 = vunpack.c.l.b16 %v781
      %v885 = vunpack.c.l.b16 %v596
      %v886 = vunpack.c.l.b16 %v805
      %v887 = vunpack.c.l.b16 %v829
      %v888 = vunpack.c.l.b16 %v831
      %v889 = vunpack.c.l.b16 %v764
      %v890 = vld [vmem:[%s1] sm:$0xf]
      %v891 = vld [vmem:[%s1 + $0x4] sm:$0xf]
      %v892 = vld [vmem:[%s1 + $0x8] sm:$0xf]
      %v893 = vld [vmem:[%s1 + $0xc] sm:$0xf]
      %v894 = vld [vmem:[%s1 + $0x10] sm:$0xf]
      %v895 = vld [vmem:[%s1 + $0x14] sm:$0xf]
      %v896 = vld [vmem:[%s1 + $0x18] sm:$0xf]
      %v897 = vld [vmem:[%s1 + $0x1c] sm:$0xf]
      %v898 = vld [vmem:[%s1 + $0x20] sm:$0xf]
      %v899 = vld [vmem:[%s1 + $0x24] sm:$0xf]
      %v900 = vld [vmem:[%s1 + $0x28] sm:$0xf]
      %v901 = vld [vmem:[%s1 + $0x2c] sm:$0xf]
      %v902 = vld [vmem:[%s1 + $0x30] sm:$0xf]
      %v903 = vld [vmem:[%s1 + $0x34] sm:$0xf]
      %v904 = vld [vmem:[%s1 + $0x38] sm:$0xf]
      %v905 = vld [vmem:[%s1 + $0x3c] sm:$0xf]
      %v906 = vld [vmem:[%s1 + $0x40] sm:$0xf]
      %v907 = vld [vmem:[%s1 + $0x44] sm:$0xf]
      %v908 = vld [vmem:[%s1 + $0x48] sm:$0xf]
      %v909 = vld [vmem:[%s1 + $0x4c] sm:$0xf]
      %v910 = vld [vmem:[%s1 + $0x50] sm:$0xf]
      %v911 = vld [vmem:[%s1 + $0x54] sm:$0xf]
      %v912 = vld [vmem:[%s1 + $0x58] sm:$0xf]
      %v913 = vld [vmem:[%s1 + $0x5c] sm:$0xf]
      %v914 = vld [vmem:[%s1 + $0x60] sm:$0xf]
      %v915 = vld [vmem:[%s1 + $0x64] sm:$0xf]
      %v916 = vld [vmem:[%s1 + $0x68] sm:$0xf]
      %v917 = vld [vmem:[%s1 + $0x6c] sm:$0xf]
      %v918 = vld [vmem:[%s1 + $0x70] sm:$0xf]
      %v919 = vld [vmem:[%s1 + $0x74] sm:$0xf]
      %v920 = vld [vmem:[%s1 + $0x78] sm:$0xf]
      %v921 = vld [vmem:[%s1 + $0x7c] sm:$0xf]
      %v922 = vld [vmem:[%s1 + $0x80] sm:$0xf]
      %v923 = vld [vmem:[%s1 + $0x84] sm:$0xf]
      %v924 = vld [vmem:[%s1 + $0x88] sm:$0xf]
      %v925 = vld [vmem:[%s1 + $0x8c] sm:$0xf]
      %v926 = vld [vmem:[%s1 + $0x90] sm:$0xf]
      %v927 = vld [vmem:[%s1 + $0x94] sm:$0xf]
      %v928 = vld [vmem:[%s1 + $0x98] sm:$0xf]
      %v929 = vld [vmem:[%s1 + $0x9c] sm:$0xf]
      %v930 = vld [vmem:[%s1 + $0xa0] sm:$0xf]
      %v931 = vld [vmem:[%s1 + $0xa4] sm:$0xf]
      %v932 = vld [vmem:[%s1 + $0xa8] sm:$0xf]
      %v933 = vld [vmem:[%s1 + $0xac] sm:$0xf]
      %v934 = vld [vmem:[%s1 + $0xb0] sm:$0xf]
      %v935 = vld [vmem:[%s1 + $0xb4] sm:$0xf]
      %v936 = vld [vmem:[%s1 + $0xb8] sm:$0xf]
      %v937 = vld [vmem:[%s1 + $0xbc] sm:$0xf]
      %v938 = vld [vmem:[%s1 + $0xc0] sm:$0xf]
      %v939 = vld [vmem:[%s1 + $0xc4] sm:$0xf]
      %v940 = vld [vmem:[%s1 + $0xc8] sm:$0xf]
      %v941 = vld [vmem:[%s1 + $0xcc] sm:$0xf]
      %v942 = vld [vmem:[%s1 + $0xd0] sm:$0xf]
      %v943 = vld [vmem:[%s1 + $0xd4] sm:$0xf]
      %v944 = vld [vmem:[%s1 + $0xd8] sm:$0xf]
      %v945 = vld [vmem:[%s1 + $0xdc] sm:$0xf]
      %v946 = vld [vmem:[%s1 + $0xe0] sm:$0xf]
      %v947 = vld [vmem:[%s1 + $0xe4] sm:$0xf]
      %v948 = vld [vmem:[%s1 + $0xe8] sm:$0xf]
      %v949 = vld [vmem:[%s1 + $0xec] sm:$0xf]
      %v950 = vld [vmem:[%s1 + $0xf0] sm:$0xf]
      %v951 = vld [vmem:[%s1 + $0xf4] sm:$0xf]
      %v952 = vld [vmem:[%s1 + $0xf8] sm:$0xf]
      %v953 = vld [vmem:[%s1 + $0xfc] sm:$0xf]
      %v954 = vld [vmem:[%s1 + $0x100] sm:$0xf]
      %v955 = vld [vmem:[%s1 + $0x104] sm:$0xf]
      %v956 = vld [vmem:[%s1 + $0x108] sm:$0xf]
      %v957 = vld [vmem:[%s1 + $0x10c] sm:$0xf]
      %v958 = vld [vmem:[%s1 + $0x110] sm:$0xf]
      %v959 = vld [vmem:[%s1 + $0x114] sm:$0xf]
      %v960 = vld [vmem:[%s1 + $0x118] sm:$0xf]
      %v961 = vld [vmem:[%s1 + $0x11c] sm:$0xf]
      %v962 = vpack.c.b16 %v860, %v857
      %v963 = vpack.c.b16 %v862, %v858
      %v964 = vpack.c.b16 %v863, %v859
      %v965 = vpack.c.b16 %v864, %v860
      %v966 = vpack.c.b16 %v865, %v861
      %v967 = vpack.c.b16 %v868, %v864
      %v968 = vpack.c.b16 %v870, %v866
      %v969 = vpack.c.b16 %v871, %v867
      %v970 = vpack.c.b16 %v872, %v868
      %v971 = vpack.c.b16 %v873, %v869
      %v972 = vpack.c.b16 %v876, %v872
      %v973 = vpack.c.b16 %v878, %v874
      %v974 = vpack.c.b16 %v879, %v875
      %v975 = vpack.c.b16 %v880, %v876
      %v976 = vpack.c.b16 %v881, %v877
      %v977 = vpack.c.b16 %v884, %v880
      %v978 = vpack.c.b16 %v886, %v882
      %v979 = vpack.c.b16 %v887, %v883
      %v980 = vpack.c.b16 %v888, %v884
      %v981 = vpack.c.b16 %v889, %v885
      %v1070 = vunpack.c.l.b16 %v890
      %v1071 = vunpack.c.l.b16 %v891
      %v1072 = vunpack.c.l.b16 %v892
      %v1073 = vunpack.c.l.b16 %v893
      %v1074 = vunpack.c.l.b16 %v894
      %v1075 = vunpack.c.l.b16 %v895
      %v1076 = vunpack.c.l.b16 %v896
      %v1077 = vunpack.c.l.b16 %v897
      %v1078 = vunpack.c.l.b16 %v898
      %v1079 = vunpack.c.l.b16 %v899
      %v1080 = vunpack.c.l.b16 %v900
      %v1081 = vunpack.c.l.b16 %v901
      %v1082 = vunpack.c.l.b16 %v902
      %v1083 = vunpack.c.l.b16 %v903
      %v1084 = vunpack.c.l.b16 %v904
      %v1085 = vunpack.c.l.b16 %v905
      %v1086 = vunpack.c.l.b16 %v906
      %v1087 = vunpack.c.l.b16 %v907
      %v1088 = vunpack.c.l.b16 %v908
      %v1089 = vunpack.c.l.b16 %v909
      %v1090 = vunpack.c.l.b16 %v910
      %v1091 = vunpack.c.l.b16 %v911
      %v1092 = vunpack.c.l.b16 %v912
      %v1093 = vunpack.c.l.b16 %v913
      %v1094 = vunpack.c.l.b16 %v914
      %v1095 = vunpack.c.l.b16 %v915
      %v1096 = vunpack.c.l.b16 %v916
      %v1097 = vunpack.c.l.b16 %v917
      %v1098 = vunpack.c.l.b16 %v918
      %v1099 = vunpack.c.l.b16 %v919
      %v1100 = vunpack.c.l.b16 %v920
      %v1101 = vunpack.c.l.b16 %v921
      %v1102 = vunpack.c.l.b16 %v922
      %v1103 = vunpack.c.l.b16 %v923
      %v1104 = vunpack.c.l.b16 %v924
      %v1105 = vunpack.c.l.b16 %v925
      %v1106 = vunpack.c.l.b16 %v926
      %v1107 = vunpack.c.l.b16 %v927
      %v1108 = vunpack.c.l.b16 %v928
      %v1109 = vunpack.c.l.b16 %v929
      %v1110 = vunpack.c.l.b16 %v930
      %v1111 = vunpack.c.l.b16 %v931
      %v1112 = vunpack.c.l.b16 %v932
      %v1113 = vunpack.c.l.b16 %v933
      %v1114 = vunpack.c.l.b16 %v934
      %v1115 = vunpack.c.l.b16 %v935
      %v1116 = vunpack.c.l.b16 %v936
      %v1117 = vunpack.c.l.b16 %v937
      %v1118 = vunpack.c.l.b16 %v938
      %v1119 = vunpack.c.l.b16 %v939
      %v1120 = vunpack.c.l.b16 %v940
      %v1121 = vunpack.c.l.b16 %v941
      %v1122 = vunpack.c.l.b16 %v942
      %v1123 = vunpack.c.l.b16 %v943
      %v1124 = vunpack.c.l.b16 %v944
      %v1125 = vunpack.c.l.b16 %v945
      %v1126 = vunpack.c.l.b16 %v946
      %v1127 = vunpack.c.l.b16 %v947
      %v1128 = vunpack.c.l.b16 %v948
      %v1129 = vunpack.c.l.b16 %v949
      %v1130 = vunpack.c.l.b16 %v950
      %v1131 = vunpack.c.l.b16 %v951
      %v1132 = vunpack.c.l.b16 %v952
      %v1133 = vunpack.c.l.b16 %v953
      %v1134 = vunpack.c.l.b16 %v954
      %v1135 = vunpack.c.l.b16 %v955
      %v1136 = vunpack.c.l.b16 %v956
      %v1137 = vunpack.c.l.b16 %v957
      %v1138 = vunpack.c.l.b16 %v958
      %v1139 = vunpack.c.l.b16 %v959
      %v1140 = vunpack.c.l.b16 %v960
      %v1141 = vunpack.c.l.b16 %v961
      %v1142 = vpack.c.b16 %v1071, %v1070
      %v1143 = vpack.c.b16 %v1073, %v1072
      %v1144 = vpack.c.b16 %v1075, %v1074
      %v1145 = vpack.c.b16 %v1077, %v1076
      %v1146 = vpack.c.b16 %v1079, %v1078
      %v1147 = vpack.c.b16 %v1081, %v1080
      %v1148 = vpack.c.b16 %v1083, %v1082
      %v1149 = vpack.c.b16 %v1085, %v1084
      %v1150 = vpack.c.b16 %v1087, %v1086
      %v1151 = vpack.c.b16 %v1089, %v1088
      %v1152 = vpack.c.b16 %v1091, %v1090
      %v1153 = vpack.c.b16 %v1093, %v1092
      %v1154 = vpack.c.b16 %v1095, %v1094
      %v1155 = vpack.c.b16 %v1097, %v1096
      %v1156 = vpack.c.b16 %v1099, %v1098
      %v1157 = vpack.c.b16 %v1101, %v1100
      %v1158 = vpack.c.b16 %v1103, %v1102
      %v1159 = vpack.c.b16 %v1105, %v1104
      %v1160 = vpack.c.b16 %v1107, %v1106
      %v1161 = vpack.c.b16 %v1109, %v1108
      %v1162 = vpack.c.b16 %v1111, %v1110
      %v1163 = vpack.c.b16 %v1113, %v1112
      %v1164 = vpack.c.b16 %v1115, %v1114
      %v1165 = vpack.c.b16 %v1117, %v1116
      %v1166 = vpack.c.b16 %v1119, %v1118
      %v1167 = vpack.c.b16 %v1121, %v1120
      %v1168 = vpack.c.b16 %v1123, %v1122
      %v1169 = vpack.c.b16 %v1125, %v1124
      %v1170 = vpack.c.b16 %v1127, %v1126
      %v1171 = vpack.c.b16 %v1129, %v1128
      %v1172 = vpack.c.b16 %v1131, %v1130
      %v1173 = vpack.c.b16 %v1133, %v1132
      %v1174 = vpack.c.b16 %v1135, %v1134
      %v1175 = vpack.c.b16 %v1137, %v1136
      %v1176 = vpack.c.b16 %v1139, %v1138
      %v1177 = vpack.c.b16 %v1141, %v1140
      %v1215 = vsel %vm765, %v966, 0
      %v1218 = vsel %vm765, %v971, 0
      %v1221 = vsel %vm765, %v976, 0
      %v1224 = vsel %vm765, %v981, 0
      %1226 = vmatpush.bf16.msra.mxu0 %v1149
      %1227 = vmatpush.bf16.msra.mxu0 %v1148
      %1228 = vmatpush.bf16.msra.mxu0 %v1147
      %1229 = vmatpush.bf16.msra.mxu0 %v1146
      %1230 = vmatpush.bf16.msra.mxu0 %v1145
      %1231 = vmatpush.bf16.msra.mxu0 %v1144
      %1232 = vmatpush.bf16.msra.mxu0 %v1143
      %1233 = vmatpush.bf16.msra.mxu0 %v1142
      %1234 = vmatmul.bf16.gmra.mxu0 %v962
      %v1235 = vpop.f32.mrf.mxu0
      %v1236 = vadd.f32 0.0, %v1235
      %v1237 = vpop.f32.mrf.mxu0
      %v1238 = vadd.f32 0.0, %v1237
      %1239 = vmatmul.bf16.gmra.mxu0 %v967
      %v1240 = vpop.f32.mrf.mxu0
      %v1241 = vadd.f32 0.0, %v1240
      %v1242 = vpop.f32.mrf.mxu0
      %v1243 = vadd.f32 0.0, %v1242
      %1244 = vmatmul.bf16.gmra.mxu0 %v972
      %v1245 = vpop.f32.mrf.mxu0
      %v1246 = vadd.f32 0.0, %v1245
      %v1247 = vpop.f32.mrf.mxu0
      %v1248 = vadd.f32 0.0, %v1247
      %1249 = vmatmul.bf16.gmra.mxu0 %v977
      %v1250 = vpop.f32.mrf.mxu0
      %v1251 = vadd.f32 0.0, %v1250
      %v1252 = vpop.f32.mrf.mxu0
      %v1253 = vadd.f32 0.0, %v1252
      %1254 = vdwg.mxu0
      %1255 = vmatpush.bf16.msra.mxu0 %v1157
      %1256 = vmatpush.bf16.msra.mxu0 %v1156
      %1257 = vmatpush.bf16.msra.mxu0 %v1155
      %1258 = vmatpush.bf16.msra.mxu0 %v1154
      %1259 = vmatpush.bf16.msra.mxu0 %v1153
      %1260 = vmatpush.bf16.msra.mxu0 %v1152
      %1261 = vmatpush.bf16.msra.mxu0 %v1151
      %1262 = vmatpush.bf16.msra.mxu0 %v1150
      %1263 = vmatmul.bf16.gmra.mxu0 %v963
      %v1264 = vpop.f32.mrf.mxu0
      %v1265 = vadd.f32 %v1236, %v1264
      %v1266 = vpop.f32.mrf.mxu0
      %v1267 = vadd.f32 %v1238, %v1266
      %1268 = vmatmul.bf16.gmra.mxu0 %v968
      %v1269 = vpop.f32.mrf.mxu0
      %v1270 = vadd.f32 %v1241, %v1269
      %v1271 = vpop.f32.mrf.mxu0
      %v1272 = vadd.f32 %v1243, %v1271
      %1273 = vmatmul.bf16.gmra.mxu0 %v973
      %v1274 = vpop.f32.mrf.mxu0
      %v1275 = vadd.f32 %v1246, %v1274
      %v1276 = vpop.f32.mrf.mxu0
      %v1277 = vadd.f32 %v1248, %v1276
      %1278 = vmatmul.bf16.gmra.mxu0 %v978
      %v1279 = vpop.f32.mrf.mxu0
      %v1280 = vadd.f32 %v1251, %v1279
      %v1281 = vpop.f32.mrf.mxu0
      %v1282 = vadd.f32 %v1253, %v1281
      %1283 = vdwg.mxu0
      %1284 = vmatpush.bf16.msra.mxu0 %v1165
      %1285 = vmatpush.bf16.msra.mxu0 %v1164
      %1286 = vmatpush.bf16.msra.mxu0 %v1163
      %1287 = vmatpush.bf16.msra.mxu0 %v1162
      %1288 = vmatpush.bf16.msra.mxu0 %v1161
      %1289 = vmatpush.bf16.msra.mxu0 %v1160
      %1290 = vmatpush.bf16.msra.mxu0 %v1159
      %1291 = vmatpush.bf16.msra.mxu0 %v1158
      %1292 = vmatmul.bf16.gmra.mxu0 %v964
      %v1293 = vpop.f32.mrf.mxu0
      %v1294 = vadd.f32 %v1265, %v1293
      %v1295 = vpop.f32.mrf.mxu0
      %v1296 = vadd.f32 %v1267, %v1295
      %1297 = vmatmul.bf16.gmra.mxu0 %v969
      %v1298 = vpop.f32.mrf.mxu0
      %v1299 = vadd.f32 %v1270, %v1298
      %v1300 = vpop.f32.mrf.mxu0
      %v1301 = vadd.f32 %v1272, %v1300
      %1302 = vmatmul.bf16.gmra.mxu0 %v974
      %v1303 = vpop.f32.mrf.mxu0
      %v1304 = vadd.f32 %v1275, %v1303
      %v1305 = vpop.f32.mrf.mxu0
      %v1306 = vadd.f32 %v1277, %v1305
      %1307 = vmatmul.bf16.gmra.mxu0 %v979
      %v1308 = vpop.f32.mrf.mxu0
      %v1309 = vadd.f32 %v1280, %v1308
      %v1310 = vpop.f32.mrf.mxu0
      %v1311 = vadd.f32 %v1282, %v1310
      %1312 = vdwg.mxu0
      %1313 = vmatpush.bf16.msra.mxu0 %v1173
      %1314 = vmatpush.bf16.msra.mxu0 %v1172
      %1315 = vmatpush.bf16.msra.mxu0 %v1171
      %1316 = vmatpush.bf16.msra.mxu0 %v1170
      %1317 = vmatpush.bf16.msra.mxu0 %v1169
      %1318 = vmatpush.bf16.msra.mxu0 %v1168
      %1319 = vmatpush.bf16.msra.mxu0 %v1167
      %1320 = vmatpush.bf16.msra.mxu0 %v1166
      %1321 = vmatmul.bf16.gmra.mxu0 %v965
      %v1322 = vpop.f32.mrf.mxu0
      %v1323 = vadd.f32 %v1294, %v1322
      %v1324 = vpop.f32.mrf.mxu0
      %v1325 = vadd.f32 %v1296, %v1324
      %1326 = vmatmul.bf16.gmra.mxu0 %v970
      %v1327 = vpop.f32.mrf.mxu0
      %v1328 = vadd.f32 %v1299, %v1327
      %v1329 = vpop.f32.mrf.mxu0
      %v1330 = vadd.f32 %v1301, %v1329
      %1331 = vmatmul.bf16.gmra.mxu0 %v975
      %v1332 = vpop.f32.mrf.mxu0
      %v1333 = vadd.f32 %v1304, %v1332
      %v1334 = vpop.f32.mrf.mxu0
      %v1335 = vadd.f32 %v1306, %v1334
      %1336 = vmatmul.bf16.gmra.mxu0 %v980
      %v1337 = vpop.f32.mrf.mxu0
      %v1338 = vadd.f32 %v1309, %v1337
      %v1339 = vpop.f32.mrf.mxu0
      %v1340 = vadd.f32 %v1311, %v1339
      %1341 = vdwg.mxu0
      %1342 = vmatpush.bf16.msra.mxu0 0
      %1343 = vmatpush.bf16.msra.mxu0 0
      %1344 = vmatpush.bf16.msra.mxu0 0
      %1345 = vmatpush.bf16.msra.mxu0 0
      %1346 = vmatpush.bf16.msra.mxu0 %v1177
      %1347 = vmatpush.bf16.msra.mxu0 %v1176
      %1348 = vmatpush.bf16.msra.mxu0 %v1175
      %1349 = vmatpush.bf16.msra.mxu0 %v1174
      %1350 = vmatmul.bf16.gmra.mxu0 %v1215
      %v1351 = vpop.f32.mrf.mxu0
      %v1352 = vadd.f32 %v1323, %v1351
      %v1353 = vpop.f32.mrf.mxu0
      %v1354 = vadd.f32 %v1325, %v1353
      %1355 = vmatmul.bf16.gmra.mxu0 %v1218
      %v1356 = vpop.f32.mrf.mxu0
      %v1357 = vadd.f32 %v1328, %v1356
      %v1358 = vpop.f32.mrf.mxu0
      %v1359 = vadd.f32 %v1330, %v1358
      %1360 = vmatmul.bf16.gmra.mxu0 %v1221
      %v1361 = vpop.f32.mrf.mxu0
      %v1362 = vadd.f32 %v1333, %v1361
      %v1363 = vpop.f32.mrf.mxu0
      %v1364 = vadd.f32 %v1335, %v1363
      %1365 = vmatmul.bf16.gmra.mxu0 %v1224
      %v1366 = vpop.f32.mrf.mxu0
      %v1367 = vadd.f32 %v1338, %v1366
      %v1368 = vpop.f32.mrf.mxu0
      %v1369 = vadd.f32 %v1340, %v1368
      %1370 = vdwg.mxu0
      %v1371 = vmax.f32 %v1352, 0.0
      %v1372 = vmax.f32 %v1354, 0.0
      %v1373 = vmax.f32 %v1357, 0.0
      %v1374 = vmax.f32 %v1359, 0.0
      %v1375 = vmax.f32 %v1362, 0.0
      %v1376 = vmax.f32 %v1364, 0.0
      %v1377 = vmax.f32 %v1367, 0.0
      %v1378 = vmax.f32 %v1369, 0.0
      %v1379 = vadd.f32 %v1371, %v1372
      %v1380 = vadd.f32 %v1379, %v1373
      %v1381 = vadd.f32 %v1380, %v1374
      %v1382 = vadd.f32 %v1381, %v1375
      %v1383 = vadd.f32 %v1382, %v1376
      %v1384 = vadd.f32 %v1383, %v1377
      %v1385 = vadd.f32 %v1384, %v1378
      %v1386 = vrot.slane %v1385, 4
      %v1387 = vadd.f32 %v1385, %v1386
      %v1388 = vrot.slane %v1387, 2
      %v1389 = vadd.f32 %v1387, %v1388
      %v1390 = vrot.slane %v1389, 1
      %v1391 = vadd.f32 %v1389, %v1390
      %v1392 = vrcp.pop 64.0
      %v1393 = vmul.f32 64.0, %v1392
      %v1394 = vsub.f32 1.0, %v1393
      %v1395 = vmul.f32 %v1392, %v1394
      %v1396 = vadd.f32 %v1392, %v1395
      %vm1397 = vweird.f32 %v1392
      %v1398 = vsel %vm1397, %v1392, %v1396
      %v1399 = vmul.f32 %v1391, %v1398
      %1400 = vst [vmem:[%s139] sm:$0x1] %v1399
      %p1401 = scmp.lt.s32.totalorder %s13, 1
      %s1402 = scalar_select %p1401, %s13, 1
      %s1403 = scalar_lea.vmem %s2, %s1402
      // Predicated region
      $region29: #{simclr_forward.4} parent=27 // pred_check
        %p1404 = pneg %p78
      $region30: #{simclr_forward.4} parent=27 // pred_check_branch
        %1406 = sbr.rel (%p1404) target = $region32
      $region31: #{simclr_forward.4} parent=27 // pred_region
        _
      $region32: #{simclr_forward.4} parent=27 // pred_fallthru
        _
    $region28: #{simclr_forward.4} parent=5 // pred_fallthru
      _
    %p1407 = scmp.le.s32.totalorder 2, %s8
    // Predicated region
    $region33: #{simclr_forward.4} parent=5 // pred_check
      %p1408 = pneg %p1407
    $region34: #{simclr_forward.4} parent=5 // pred_check_branch
      %1410 = sbr.rel (%p1408) target = $region36
    $region35: #{simclr_forward.4} parent=5 // pred_region
      %s1411 = ssub.s32 %s8, 2
      // Predicated region
      $region37: #{simclr_forward.4} parent=35 // pred_check
        %p1412 = pneg %p84
      $region38: #{simclr_forward.4} parent=35 // pred_check_branch
        %1414 = sbr.rel (%p1412) target = $region40
      $region39: #{simclr_forward.4} parent=35 // pred_region
        %p1415 = scmp.lt.s32.totalorder %s14, 1
        %s1416 = scalar_select %p1415, %s14, 1
        %s1417 = scalar_lea.vmem %s2, %s1416
      $region40: #{simclr_forward.4} parent=35 // pred_fallthru
        _
    $region36: #{simclr_forward.4} parent=5 // pred_fallthru
      _
  $region6: #{simclr_forward.4} parent=0 // loop_footer
    %s12 = sadd.s32 1, %s8
  $region7: #{simclr_forward.4} parent=0 // loop_footer_branch
    %7 = sbr.rel target = $region3
  $region8: #{simclr_forward.4} parent=0 // loop_exit
    _

// kernel: simclr_forward.5
$region0: #{simclr_forward.5}
  #allocation0 [shape = 'u32[]', space=smem, size = 0x4, offset = 0x4, fixed_abs, tag = 'smem constant byte address 0x4 - core index']
  #allocation1 [shape = 'u32[72,128]{1,0:T(1,128)}', space=vmem, size = 0x9000, scoped, tag = 'internal scratch']
  %s0 = inlined_call_operand.vmem [shape: f32[2,128], index: 0, kind: input, shape index: {}]
  %s1 = inlined_call_operand.vmem [shape: bf16[128,2048], index: 1, kind: input, shape index: {}]
  %s2 = inlined_call_operand.vmem [shape: f32[1,2048], index: 2, kind: input, shape index: {}]
  %s3 = inlined_call_operand.vmem [shape: bf16[2048,128], index: 3, kind: input, shape index: {}]
  %s4 = inlined_call_operand.vmem [shape: f32[1,128], index: 4, kind: input, shape index: {}]
  %s5 = inlined_call_operand.hbm [shape: f32[2,128], index: 5, kind: output, shape index: {}]
  %s6 = sld [smem:[#allocation0]]
  $region30: #{simclr_forward.5} parent=0
    _
  %s8 = ssub.s32 1, %s6
  %s9 = scalar_select 0, %s8, %s6
  $region1: #{simclr_forward.5} parent=0
    #allocation2 [shape = 'u8[1024]{0}', space=vmem, size = 0x400, scoped, tag = 'output window, operand 0, single buffered']
    #allocation3 [shape = 's32[1]{0}', space=sflag, size = 0x4, scoped, tag = 'scoped memory for simclr_forward.5']
    %10 = vsyncpa [#allocation3], 0
    // Predicated region
    $region2: #{simclr_forward.5} parent=1 // pred_check
      _
    $region3: #{simclr_forward.5} parent=1 // pred_check_branch
      %12 = sbr.rel (0) target = $region5
    $region4: #{simclr_forward.5} parent=1 // pred_region
      _
    $region5: #{simclr_forward.5} parent=1 // pred_fallthru
      _
    // Predicated region
    $region6: #{simclr_forward.5} parent=1 // pred_check
      _
    $region7: #{simclr_forward.5} parent=1 // pred_check_branch
      %14 = sbr.rel (0) target = $region9
    $region8: #{simclr_forward.5} parent=1 // pred_region
      _
    $region9: #{simclr_forward.5} parent=1 // pred_fallthru
      _
    // Predicated region
    $region10: #{simclr_forward.5} parent=1 // pred_check
      _
    $region11: #{simclr_forward.5} parent=1 // pred_check_branch
      %16 = sbr.rel (0) target = $region13
    $region12: #{simclr_forward.5} parent=1 // pred_region
      _
    $region13: #{simclr_forward.5} parent=1 // pred_fallthru
      _
    // Predicated region
    $region14: #{simclr_forward.5} parent=1 // pred_check
      _
    $region15: #{simclr_forward.5} parent=1 // pred_check_branch
      %18 = sbr.rel (0) target = $region17
    $region16: #{simclr_forward.5} parent=1 // pred_region
      _
    $region17: #{simclr_forward.5} parent=1 // pred_fallthru
      _
    // Predicated region
    $region18: #{simclr_forward.5} parent=1 // pred_check
      _
    $region19: #{simclr_forward.5} parent=1 // pred_check_branch
      %20 = sbr.rel (0) target = $region21
    $region20: #{simclr_forward.5} parent=1 // pred_region
      _
    $region21: #{simclr_forward.5} parent=1 // pred_fallthru
      _
    %v21 = vld [vmem:[%s0] sm:$0x3]
    %v22 = vpack.c.bf16 %v21, %v21
    %v23 = vld [vmem:[%s1] sm:$0xff]
    %v24 = vld [vmem:[%s1 + $0x8] sm:$0xff]
    %v25 = vld [vmem:[%s1 + $0x10] sm:$0xff]
    %v26 = vld [vmem:[%s1 + $0x18] sm:$0xff]
    %v27 = vld [vmem:[%s1 + $0x20] sm:$0xff]
    %v28 = vld [vmem:[%s1 + $0x28] sm:$0xff]
    %v29 = vld [vmem:[%s1 + $0x30] sm:$0xff]
    %v30 = vld [vmem:[%s1 + $0x38] sm:$0xff]
    %v31 = vld [vmem:[%s1 + $0x40] sm:$0xff]
    %v32 = vld [vmem:[%s1 + $0x48] sm:$0xff]
    %v33 = vld [vmem:[%s1 + $0x50] sm:$0xff]
    %v34 = vld [vmem:[%s1 + $0x58] sm:$0xff]
    %v35 = vld [vmem:[%s1 + $0x60] sm:$0xff]
    %v36 = vld [vmem:[%s1 + $0x68] sm:$0xff]
    %v37 = vld [vmem:[%s1 + $0x70] sm:$0xff]
    %v38 = vld [vmem:[%s1 + $0x78] sm:$0xff]
    %v39 = vld [vmem:[%s1 + $0x80] sm:$0xff]
    %v40 = vld [vmem:[%s1 + $0x88] sm:$0xff]
    %v41 = vld [vmem:[%s1 + $0x90] sm:$0xff]
    %v42 = vld [vmem:[%s1 + $0x98] sm:$0xff]
    %v43 = vld [vmem:[%s1 + $0xa0] sm:$0xff]
    %v44 = vld [vmem:[%s1 + $0xa8] sm:$0xff]
    %v45 = vld [vmem:[%s1 + $0xb0] sm:$0xff]
    %v46 = vld [vmem:[%s1 + $0xb8] sm:$0xff]
    %v47 = vld [vmem:[%s1 + $0xc0] sm:$0xff]
    %v48 = vld [vmem:[%s1 + $0xc8] sm:$0xff]
    %v49 = vld [vmem:[%s1 + $0xd0] sm:$0xff]
    %v50 = vld [vmem:[%s1 + $0xd8] sm:$0xff]
    %v51 = vld [vmem:[%s1 + $0xe0] sm:$0xff]
    %v52 = vld [vmem:[%s1 + $0xe8] sm:$0xff]
    %v53 = vld [vmem:[%s1 + $0xf0] sm:$0xff]
    %v54 = vld [vmem:[%s1 + $0xf8] sm:$0xff]
    %v55 = vld [vmem:[%s1 + $0x100] sm:$0xff]
    %v56 = vld [vmem:[%s1 + $0x108] sm:$0xff]
    %v57 = vld [vmem:[%s1 + $0x110] sm:$0xff]
    %v58 = vld [vmem:[%s1 + $0x118] sm:$0xff]
    %v59 = vld [vmem:[%s1 + $0x120] sm:$0xff]
    %v60 = vld [vmem:[%s1 + $0x128] sm:$0xff]
    %v61 = vld [vmem:[%s1 + $0x130] sm:$0xff]
    %v62 = vld [vmem:[%s1 + $0x138] sm:$0xff]
    %v63 = vld [vmem:[%s1 + $0x140] sm:$0xff]
    %v64 = vld [vmem:[%s1 + $0x148] sm:$0xff]
    %v65 = vld [vmem:[%s1 + $0x150] sm:$0xff]
    %v66 = vld [vmem:[%s1 + $0x158] sm:$0xff]
    %v67 = vld [vmem:[%s1 + $0x160] sm:$0xff]
    %v68 = vld [vmem:[%s1 + $0x168] sm:$0xff]
    %v69 = vld [vmem:[%s1 + $0x170] sm:$0xff]
    %v70 = vld [vmem:[%s1 + $0x178] sm:$0xff]
    %v71 = vld [vmem:[%s1 + $0x180] sm:$0xff]
    %v72 = vld [vmem:[%s1 + $0x188] sm:$0xff]
    %v73 = vld [vmem:[%s1 + $0x190] sm:$0xff]
    %v74 = vld [vmem:[%s1 + $0x198] sm:$0xff]
    %v75 = vld [vmem:[%s1 + $0x1a0] sm:$0xff]
    %v76 = vld [vmem:[%s1 + $0x1a8] sm:$0xff]
    %v77 = vld [vmem:[%s1 + $0x1b0] sm:$0xff]
    %v78 = vld [vmem:[%s1 + $0x1b8] sm:$0xff]
    %v79 = vld [vmem:[%s1 + $0x1c0] sm:$0xff]
    %v80 = vld [vmem:[%s1 + $0x1c8] sm:$0xff]
    %v81 = vld [vmem:[%s1 + $0x1d0] sm:$0xff]
    %v82 = vld [vmem:[%s1 + $0x1d8] sm:$0xff]
    %v83 = vld [vmem:[%s1 + $0x1e0] sm:$0xff]
    %v84 = vld [vmem:[%s1 + $0x1e8] sm:$0xff]
    %v85 = vld [vmem:[%s1 + $0x1f0] sm:$0xff]
    %v86 = vld [vmem:[%s1 + $0x1f8] sm:$0xff]
    %v87 = vld [vmem:[%s1 + $0x200] sm:$0xff]
    %v88 = vld [vmem:[%s1 + $0x208] sm:$0xff]
    %v89 = vld [vmem:[%s1 + $0x210] sm:$0xff]
    %v90 = vld [vmem:[%s1 + $0x218] sm:$0xff]
    %v91 = vld [vmem:[%s1 + $0x220] sm:$0xff]
    %v92 = vld [vmem:[%s1 + $0x228] sm:$0xff]
    %v93 = vld [vmem:[%s1 + $0x230] sm:$0xff]
    %v94 = vld [vmem:[%s1 + $0x238] sm:$0xff]
    %v95 = vld [vmem:[%s1 + $0x240] sm:$0xff]
    %v96 = vld [vmem:[%s1 + $0x248] sm:$0xff]
    %v97 = vld [vmem:[%s1 + $0x250] sm:$0xff]
    %v98 = vld [vmem:[%s1 + $0x258] sm:$0xff]
    %v99 = vld [vmem:[%s1 + $0x260] sm:$0xff]
    %v100 = vld [vmem:[%s1 + $0x268] sm:$0xff]
    %v101 = vld [vmem:[%s1 + $0x270] sm:$0xff]
    %v102 = vld [vmem:[%s1 + $0x278] sm:$0xff]
    %v103 = vld [vmem:[%s1 + $0x280] sm:$0xff]
    %v104 = vld [vmem:[%s1 + $0x288] sm:$0xff]
    %v105 = vld [vmem:[%s1 + $0x290] sm:$0xff]
    %v106 = vld [vmem:[%s1 + $0x298] sm:$0xff]
    %v107 = vld [vmem:[%s1 + $0x2a0] sm:$0xff]
    %v108 = vld [vmem:[%s1 + $0x2a8] sm:$0xff]
    %v109 = vld [vmem:[%s1 + $0x2b0] sm:$0xff]
    %v110 = vld [vmem:[%s1 + $0x2b8] sm:$0xff]
    %v111 = vld [vmem:[%s1 + $0x2c0] sm:$0xff]
    %v112 = vld [vmem:[%s1 + $0x2c8] sm:$0xff]
    %v113 = vld [vmem:[%s1 + $0x2d0] sm:$0xff]
    %v114 = vld [vmem:[%s1 + $0x2d8] sm:$0xff]
    %v115 = vld [vmem:[%s1 + $0x2e0] sm:$0xff]
    %v116 = vld [vmem:[%s1 + $0x2e8] sm:$0xff]
    %v117 = vld [vmem:[%s1 + $0x2f0] sm:$0xff]
    %v118 = vld [vmem:[%s1 + $0x2f8] sm:$0xff]
    %v119 = vld [vmem:[%s1 + $0x300] sm:$0xff]
    %v120 = vld [vmem:[%s1 + $0x308] sm:$0xff]
    %v121 = vld [vmem:[%s1 + $0x310] sm:$0xff]
    %v122 = vld [vmem:[%s1 + $0x318] sm:$0xff]
    %v123 = vld [vmem:[%s1 + $0x320] sm:$0xff]
    %v124 = vld [vmem:[%s1 + $0x328] sm:$0xff]
    %v125 = vld [vmem:[%s1 + $0x330] sm:$0xff]
    %v126 = vld [vmem:[%s1 + $0x338] sm:$0xff]
    %v127 = vld [vmem:[%s1 + $0x340] sm:$0xff]
    %v128 = vld [vmem:[%s1 + $0x348] sm:$0xff]
    %v129 = vld [vmem:[%s1 + $0x350] sm:$0xff]
    %v130 = vld [vmem:[%s1 + $0x358] sm:$0xff]
    %v131 = vld [vmem:[%s1 + $0x360] sm:$0xff]
    %v132 = vld [vmem:[%s1 + $0x368] sm:$0xff]
    %v133 = vld [vmem:[%s1 + $0x370] sm:$0xff]
    %v134 = vld [vmem:[%s1 + $0x378] sm:$0xff]
    %v135 = vld [vmem:[%s1 + $0x380] sm:$0xff]
    %v136 = vld [vmem:[%s1 + $0x388] sm:$0xff]
    %v137 = vld [vmem:[%s1 + $0x390] sm:$0xff]
    %v138 = vld [vmem:[%s1 + $0x398] sm:$0xff]
    %v139 = vld [vmem:[%s1 + $0x3a0] sm:$0xff]
    %v140 = vld [vmem:[%s1 + $0x3a8] sm:$0xff]
    %v141 = vld [vmem:[%s1 + $0x3b0] sm:$0xff]
    %v142 = vld [vmem:[%s1 + $0x3b8] sm:$0xff]
    %v143 = vld [vmem:[%s1 + $0x3c0] sm:$0xff]
    %v144 = vld [vmem:[%s1 + $0x3c8] sm:$0xff]
    %v145 = vld [vmem:[%s1 + $0x3d0] sm:$0xff]
    %v146 = vld [vmem:[%s1 + $0x3d8] sm:$0xff]
    %v147 = vld [vmem:[%s1 + $0x3e0] sm:$0xff]
    %v148 = vld [vmem:[%s1 + $0x3e8] sm:$0xff]
    %v149 = vld [vmem:[%s1 + $0x3f0] sm:$0xff]
    %v150 = vld [vmem:[%s1 + $0x3f8] sm:$0xff]
    %v151 = vld [vmem:[%s2] sm:$0xff]
    %v152 = vld [vmem:[%s2 + $0x8] sm:$0xff]
    %v155 = vperm.slane %v151, 0
    %v156 = vperm.slane %v151, 1
    %v157 = vperm.slane %v151, 2
    %v158 = vperm.slane %v151, 3
    %v159 = vperm.slane %v151, 4
    %v160 = vperm.slane %v151, 5
    %v161 = vperm.slane %v151, 6
    %v162 = vperm.slane %v151, 7
    %v163 = vperm.slane %v152, 0
    %v164 = vperm.slane %v152, 1
    %v165 = vperm.slane %v152, 2
    %v166 = vperm.slane %v152, 3
    %v167 = vperm.slane %v152, 4
    %v168 = vperm.slane %v152, 5
    %v169 = vperm.slane %v152, 6
    %v170 = vperm.slane %v152, 7
    %v315 = vunpack.c.l.b16 %v23
    %v316 = vunpack.c.h.b16 %v23
    %v317 = vunpack.c.l.b16 %v24
    %v318 = vunpack.c.h.b16 %v24
    %v319 = vunpack.c.l.b16 %v25
    %v320 = vunpack.c.h.b16 %v25
    %v321 = vunpack.c.l.b16 %v26
    %v322 = vunpack.c.h.b16 %v26
    %v323 = vunpack.c.l.b16 %v27
    %v324 = vunpack.c.h.b16 %v27
    %v325 = vunpack.c.l.b16 %v28
    %v326 = vunpack.c.h.b16 %v28
    %v327 = vunpack.c.l.b16 %v29
    %v328 = vunpack.c.h.b16 %v29
    %v329 = vunpack.c.l.b16 %v30
    %v330 = vunpack.c.h.b16 %v30
    %v331 = vunpack.c.l.b16 %v31
    %v332 = vunpack.c.h.b16 %v31
    %v333 = vunpack.c.l.b16 %v32
    %v334 = vunpack.c.h.b16 %v32
    %v335 = vunpack.c.l.b16 %v33
    %v336 = vunpack.c.h.b16 %v33
    %v337 = vunpack.c.l.b16 %v34
    %v338 = vunpack.c.h.b16 %v34
    %v339 = vunpack.c.l.b16 %v35
    %v340 = vunpack.c.h.b16 %v35
    %v341 = vunpack.c.l.b16 %v36
    %v342 = vunpack.c.h.b16 %v36
    %v343 = vunpack.c.l.b16 %v37
    %v344 = vunpack.c.h.b16 %v37
    %v345 = vunpack.c.l.b16 %v38
    %v346 = vunpack.c.h.b16 %v38
    %v347 = vunpack.c.l.b16 %v39
    %v348 = vunpack.c.h.b16 %v39
    %v349 = vunpack.c.l.b16 %v40
    %v350 = vunpack.c.h.b16 %v40
    %v351 = vunpack.c.l.b16 %v41
    %v352 = vunpack.c.h.b16 %v41
    %v353 = vunpack.c.l.b16 %v42
    %v354 = vunpack.c.h.b16 %v42
    %v355 = vunpack.c.l.b16 %v43
    %v356 = vunpack.c.h.b16 %v43
    %v357 = vunpack.c.l.b16 %v44
    %v358 = vunpack.c.h.b16 %v44
    %v359 = vunpack.c.l.b16 %v45
    %v360 = vunpack.c.h.b16 %v45
    %v361 = vunpack.c.l.b16 %v46
    %v362 = vunpack.c.h.b16 %v46
    %v363 = vunpack.c.l.b16 %v47
    %v364 = vunpack.c.h.b16 %v47
    %v365 = vunpack.c.l.b16 %v48
    %v366 = vunpack.c.h.b16 %v48
    %v367 = vunpack.c.l.b16 %v49
    %v368 = vunpack.c.h.b16 %v49
    %v369 = vunpack.c.l.b16 %v50
    %v370 = vunpack.c.h.b16 %v50
    %v371 = vunpack.c.l.b16 %v51
    %v372 = vunpack.c.h.b16 %v51
    %v373 = vunpack.c.l.b16 %v52
    %v374 = vunpack.c.h.b16 %v52
    %v375 = vunpack.c.l.b16 %v53
    %v376 = vunpack.c.h.b16 %v53
    %v377 = vunpack.c.l.b16 %v54
    %v378 = vunpack.c.h.b16 %v54
    %v379 = vunpack.c.l.b16 %v55
    %v380 = vunpack.c.h.b16 %v55
    %v381 = vunpack.c.l.b16 %v56
    %v382 = vunpack.c.h.b16 %v56
    %v383 = vunpack.c.l.b16 %v57
    %v384 = vunpack.c.h.b16 %v57
    %v385 = vunpack.c.l.b16 %v58
    %v386 = vunpack.c.h.b16 %v58
    %v387 = vunpack.c.l.b16 %v59
    %v388 = vunpack.c.h.b16 %v59
    %v389 = vunpack.c.l.b16 %v60
    %v390 = vunpack.c.h.b16 %v60
    %v391 = vunpack.c.l.b16 %v61
    %v392 = vunpack.c.h.b16 %v61
    %v393 = vunpack.c.l.b16 %v62
    %v394 = vunpack.c.h.b16 %v62
    %v395 = vunpack.c.l.b16 %v63
    %v396 = vunpack.c.h.b16 %v63
    %v397 = vunpack.c.l.b16 %v64
    %v398 = vunpack.c.h.b16 %v64
    %v399 = vunpack.c.l.b16 %v65
    %v400 = vunpack.c.h.b16 %v65
    %v401 = vunpack.c.l.b16 %v66
    %v402 = vunpack.c.h.b16 %v66
    %v403 = vunpack.c.l.b16 %v67
    %v404 = vunpack.c.h.b16 %v67
    %v405 = vunpack.c.l.b16 %v68
    %v406 = vunpack.c.h.b16 %v68
    %v407 = vunpack.c.l.b16 %v69
    %v408 = vunpack.c.h.b16 %v69
    %v409 = vunpack.c.l.b16 %v70
    %v410 = vunpack.c.h.b16 %v70
    %v411 = vunpack.c.l.b16 %v71
    %v412 = vunpack.c.h.b16 %v71
    %v413 = vunpack.c.l.b16 %v72
    %v414 = vunpack.c.h.b16 %v72
    %v415 = vunpack.c.l.b16 %v73
    %v416 = vunpack.c.h.b16 %v73
    %v417 = vunpack.c.l.b16 %v74
    %v418 = vunpack.c.h.b16 %v74
    %v419 = vunpack.c.l.b16 %v75
    %v420 = vunpack.c.h.b16 %v75
    %v421 = vunpack.c.l.b16 %v76
    %v422 = vunpack.c.h.b16 %v76
    %v423 = vunpack.c.l.b16 %v77
    %v424 = vunpack.c.h.b16 %v77
    %v425 = vunpack.c.l.b16 %v78
    %v426 = vunpack.c.h.b16 %v78
    %v427 = vunpack.c.l.b16 %v79
    %v428 = vunpack.c.h.b16 %v79
    %v429 = vunpack.c.l.b16 %v80
    %v430 = vunpack.c.h.b16 %v80
    %v431 = vunpack.c.l.b16 %v81
    %v432 = vunpack.c.h.b16 %v81
    %v433 = vunpack.c.l.b16 %v82
    %v434 = vunpack.c.h.b16 %v82
    %v435 = vunpack.c.l.b16 %v83
    %v436 = vunpack.c.h.b16 %v83
    %v437 = vunpack.c.l.b16 %v84
    %v438 = vunpack.c.h.b16 %v84
    %v439 = vunpack.c.l.b16 %v85
    %v440 = vunpack.c.h.b16 %v85
    %v441 = vunpack.c.l.b16 %v86
    %v442 = vunpack.c.h.b16 %v86
    %v443 = vunpack.c.l.b16 %v87
    %v444 = vunpack.c.h.b16 %v87
    %v445 = vunpack.c.l.b16 %v88
    %v446 = vunpack.c.h.b16 %v88
    %v447 = vunpack.c.l.b16 %v89
    %v448 = vunpack.c.h.b16 %v89
    %v449 = vunpack.c.l.b16 %v90
    %v450 = vunpack.c.h.b16 %v90
    %v451 = vunpack.c.l.b16 %v91
    %v452 = vunpack.c.h.b16 %v91
    %v453 = vunpack.c.l.b16 %v92
    %v454 = vunpack.c.h.b16 %v92
    %v455 = vunpack.c.l.b16 %v93
    %v456 = vunpack.c.h.b16 %v93
    %v457 = vunpack.c.l.b16 %v94
    %v458 = vunpack.c.h.b16 %v94
    %v459 = vunpack.c.l.b16 %v95
    %v460 = vunpack.c.h.b16 %v95
    %v461 = vunpack.c.l.b16 %v96
    %v462 = vunpack.c.h.b16 %v96
    %v463 = vunpack.c.l.b16 %v97
    %v464 = vunpack.c.h.b16 %v97
    %v465 = vunpack.c.l.b16 %v98
    %v466 = vunpack.c.h.b16 %v98
    %v467 = vunpack.c.l.b16 %v99
    %v468 = vunpack.c.h.b16 %v99
    %v469 = vunpack.c.l.b16 %v100
    %v470 = vunpack.c.h.b16 %v100
    %v471 = vunpack.c.l.b16 %v101
    %v472 = vunpack.c.h.b16 %v101
    %v473 = vunpack.c.l.b16 %v102
    %v474 = vunpack.c.h.b16 %v102
    %v475 = vunpack.c.l.b16 %v103
    %v476 = vunpack.c.h.b16 %v103
    %v477 = vunpack.c.l.b16 %v104
    %v478 = vunpack.c.h.b16 %v104
    %v479 = vunpack.c.l.b16 %v105
    %v480 = vunpack.c.h.b16 %v105
    %v481 = vunpack.c.l.b16 %v106
    %v482 = vunpack.c.h.b16 %v106
    %v483 = vunpack.c.l.b16 %v107
    %v484 = vunpack.c.h.b16 %v107
    %v485 = vunpack.c.l.b16 %v108
    %v486 = vunpack.c.h.b16 %v108
    %v487 = vunpack.c.l.b16 %v109
    %v488 = vunpack.c.h.b16 %v109
    %v489 = vunpack.c.l.b16 %v110
    %v490 = vunpack.c.h.b16 %v110
    %v491 = vunpack.c.l.b16 %v111
    %v492 = vunpack.c.h.b16 %v111
    %v493 = vunpack.c.l.b16 %v112
    %v494 = vunpack.c.h.b16 %v112
    %v495 = vunpack.c.l.b16 %v113
    %v496 = vunpack.c.h.b16 %v113
    %v497 = vunpack.c.l.b16 %v114
    %v498 = vunpack.c.h.b16 %v114
    %v499 = vunpack.c.l.b16 %v115
    %v500 = vunpack.c.h.b16 %v115
    %v501 = vunpack.c.l.b16 %v116
    %v502 = vunpack.c.h.b16 %v116
    %v503 = vunpack.c.l.b16 %v117
    %v504 = vunpack.c.h.b16 %v117
    %v505 = vunpack.c.l.b16 %v118
    %v506 = vunpack.c.h.b16 %v118
    %v507 = vunpack.c.l.b16 %v119
    %v508 = vunpack.c.h.b16 %v119
    %v509 = vunpack.c.l.b16 %v120
    %v510 = vunpack.c.h.b16 %v120
    %v511 = vunpack.c.l.b16 %v121
    %v512 = vunpack.c.h.b16 %v121
    %v513 = vunpack.c.l.b16 %v122
    %v514 = vunpack.c.h.b16 %v122
    %v515 = vunpack.c.l.b16 %v123
    %v516 = vunpack.c.h.b16 %v123
    %v517 = vunpack.c.l.b16 %v124
    %v518 = vunpack.c.h.b16 %v124
    %v519 = vunpack.c.l.b16 %v125
    %v520 = vunpack.c.h.b16 %v125
    %v521 = vunpack.c.l.b16 %v126
    %v522 = vunpack.c.h.b16 %v126
    %v523 = vunpack.c.l.b16 %v127
    %v524 = vunpack.c.h.b16 %v127
    %v525 = vunpack.c.l.b16 %v128
    %v526 = vunpack.c.h.b16 %v128
    %v527 = vunpack.c.l.b16 %v129
    %v528 = vunpack.c.h.b16 %v129
    %v529 = vunpack.c.l.b16 %v130
    %v530 = vunpack.c.h.b16 %v130
    %v531 = vunpack.c.l.b16 %v131
    %v532 = vunpack.c.h.b16 %v131
    %v533 = vunpack.c.l.b16 %v132
    %v534 = vunpack.c.h.b16 %v132
    %v535 = vunpack.c.l.b16 %v133
    %v536 = vunpack.c.h.b16 %v133
    %v537 = vunpack.c.l.b16 %v134
    %v538 = vunpack.c.h.b16 %v134
    %v539 = vunpack.c.l.b16 %v135
    %v540 = vunpack.c.h.b16 %v135
    %v541 = vunpack.c.l.b16 %v136
    %v542 = vunpack.c.h.b16 %v136
    %v543 = vunpack.c.l.b16 %v137
    %v544 = vunpack.c.h.b16 %v137
    %v545 = vunpack.c.l.b16 %v138
    %v546 = vunpack.c.h.b16 %v138
    %v547 = vunpack.c.l.b16 %v139
    %v548 = vunpack.c.h.b16 %v139
    %v549 = vunpack.c.l.b16 %v140
    %v550 = vunpack.c.h.b16 %v140
    %v551 = vunpack.c.l.b16 %v141
    %v552 = vunpack.c.h.b16 %v141
    %v553 = vunpack.c.l.b16 %v142
    %v554 = vunpack.c.h.b16 %v142
    %v555 = vunpack.c.l.b16 %v143
    %v556 = vunpack.c.h.b16 %v143
    %v557 = vunpack.c.l.b16 %v144
    %v558 = vunpack.c.h.b16 %v144
    %v559 = vunpack.c.l.b16 %v145
    %v560 = vunpack.c.h.b16 %v145
    %v561 = vunpack.c.l.b16 %v146
    %v562 = vunpack.c.h.b16 %v146
    %v563 = vunpack.c.l.b16 %v147
    %v564 = vunpack.c.h.b16 %v147
    %v565 = vunpack.c.l.b16 %v148
    %v566 = vunpack.c.h.b16 %v148
    %v567 = vunpack.c.l.b16 %v149
    %v568 = vunpack.c.h.b16 %v149
    %v569 = vunpack.c.l.b16 %v150
    %v570 = vunpack.c.h.b16 %v150
    %v571 = vpack.c.b16 %v331, %v315
    %v572 = vpack.c.b16 %v332, %v316
    %v573 = vpack.c.b16 %v333, %v317
    %v574 = vpack.c.b16 %v334, %v318
    %v575 = vpack.c.b16 %v335, %v319
    %v576 = vpack.c.b16 %v336, %v320
    %v577 = vpack.c.b16 %v337, %v321
    %v578 = vpack.c.b16 %v338, %v322
    %v579 = vpack.c.b16 %v339, %v323
    %v580 = vpack.c.b16 %v340, %v324
    %v581 = vpack.c.b16 %v341, %v325
    %v582 = vpack.c.b16 %v342, %v326
    %v583 = vpack.c.b16 %v343, %v327
    %v584 = vpack.c.b16 %v344, %v328
    %v585 = vpack.c.b16 %v345, %v329
    %v586 = vpack.c.b16 %v346, %v330
    %v587 = vpack.c.b16 %v363, %v347
    %v588 = vpack.c.b16 %v364, %v348
    %v589 = vpack.c.b16 %v365, %v349
    %v590 = vpack.c.b16 %v366, %v350
    %v591 = vpack.c.b16 %v367, %v351
    %v592 = vpack.c.b16 %v368, %v352
    %v593 = vpack.c.b16 %v369, %v353
    %v594 = vpack.c.b16 %v370, %v354
    %v595 = vpack.c.b16 %v371, %v355
    %v596 = vpack.c.b16 %v372, %v356
    %v597 = vpack.c.b16 %v373, %v357
    %v598 = vpack.c.b16 %v374, %v358
    %v599 = vpack.c.b16 %v375, %v359
    %v600 = vpack.c.b16 %v376, %v360
    %v601 = vpack.c.b16 %v377, %v361
    %v602 = vpack.c.b16 %v378, %v362
    %v603 = vpack.c.b16 %v395, %v379
    %v604 = vpack.c.b16 %v396, %v380
    %v605 = vpack.c.b16 %v397, %v381
    %v606 = vpack.c.b16 %v398, %v382
    %v607 = vpack.c.b16 %v399, %v383
    %v608 = vpack.c.b16 %v400, %v384
    %v609 = vpack.c.b16 %v401, %v385
    %v610 = vpack.c.b16 %v402, %v386
    %v611 = vpack.c.b16 %v403, %v387
    %v612 = vpack.c.b16 %v404, %v388
    %v613 = vpack.c.b16 %v405, %v389
    %v614 = vpack.c.b16 %v406, %v390
    %v615 = vpack.c.b16 %v407, %v391
    %v616 = vpack.c.b16 %v408, %v392
    %v617 = vpack.c.b16 %v409, %v393
    %v618 = vpack.c.b16 %v410, %v394
    %v619 = vpack.c.b16 %v427, %v411
    %v620 = vpack.c.b16 %v428, %v412
    %v621 = vpack.c.b16 %v429, %v413
    %v622 = vpack.c.b16 %v430, %v414
    %v623 = vpack.c.b16 %v431, %v415
    %v624 = vpack.c.b16 %v432, %v416
    %v625 = vpack.c.b16 %v433, %v417
    %v626 = vpack.c.b16 %v434, %v418
    %v627 = vpack.c.b16 %v435, %v419
    %v628 = vpack.c.b16 %v436, %v420
    %v629 = vpack.c.b16 %v437, %v421
    %v630 = vpack.c.b16 %v438, %v422
    %v631 = vpack.c.b16 %v439, %v423
    %v632 = vpack.c.b16 %v440, %v424
    %v633 = vpack.c.b16 %v441, %v425
    %v634 = vpack.c.b16 %v442, %v426
    %v635 = vpack.c.b16 %v459, %v443
    %v636 = vpack.c.b16 %v460, %v444
    %v637 = vpack.c.b16 %v461, %v445
    %v638 = vpack.c.b16 %v462, %v446
    %v639 = vpack.c.b16 %v463, %v447
    %v640 = vpack.c.b16 %v464, %v448
    %v641 = vpack.c.b16 %v465, %v449
    %v642 = vpack.c.b16 %v466, %v450
    %v643 = vpack.c.b16 %v467, %v451
    %v644 = vpack.c.b16 %v468, %v452
    %v645 = vpack.c.b16 %v469, %v453
    %v646 = vpack.c.b16 %v470, %v454
    %v647 = vpack.c.b16 %v471, %v455
    %v648 = vpack.c.b16 %v472, %v456
    %v649 = vpack.c.b16 %v473, %v457
    %v650 = vpack.c.b16 %v474, %v458
    %v651 = vpack.c.b16 %v491, %v475
    %v652 = vpack.c.b16 %v492, %v476
    %v653 = vpack.c.b16 %v493, %v477
    %v654 = vpack.c.b16 %v494, %v478
    %v655 = vpack.c.b16 %v495, %v479
    %v656 = vpack.c.b16 %v496, %v480
    %v657 = vpack.c.b16 %v497, %v481
    %v658 = vpack.c.b16 %v498, %v482
    %v659 = vpack.c.b16 %v499, %v483
    %v660 = vpack.c.b16 %v500, %v484
    %v661 = vpack.c.b16 %v501, %v485
    %v662 = vpack.c.b16 %v502, %v486
    %v663 = vpack.c.b16 %v503, %v487
    %v664 = vpack.c.b16 %v504, %v488
    %v665 = vpack.c.b16 %v505, %v489
    %v666 = vpack.c.b16 %v506, %v490
    %v667 = vpack.c.b16 %v523, %v507
    %v668 = vpack.c.b16 %v524, %v508
    %v669 = vpack.c.b16 %v525, %v509
    %v670 = vpack.c.b16 %v526, %v510
    %v671 = vpack.c.b16 %v527, %v511
    %v672 = vpack.c.b16 %v528, %v512
    %v673 = vpack.c.b16 %v529, %v513
    %v674 = vpack.c.b16 %v530, %v514
    %v675 = vpack.c.b16 %v531, %v515
    %v676 = vpack.c.b16 %v532, %v516
    %v677 = vpack.c.b16 %v533, %v517
    %v678 = vpack.c.b16 %v534, %v518
    %v679 = vpack.c.b16 %v535, %v519
    %v680 = vpack.c.b16 %v536, %v520
    %v681 = vpack.c.b16 %v537, %v521
    %v682 = vpack.c.b16 %v538, %v522
    %v683 = vpack.c.b16 %v555, %v539
    %v684 = vpack.c.b16 %v556, %v540
    %v685 = vpack.c.b16 %v557, %v541
    %v686 = vpack.c.b16 %v558, %v542
    %v687 = vpack.c.b16 %v559, %v543
    %v688 = vpack.c.b16 %v560, %v544
    %v689 = vpack.c.b16 %v561, %v545
    %v690 = vpack.c.b16 %v562, %v546
    %v691 = vpack.c.b16 %v563, %v547
    %v692 = vpack.c.b16 %v564, %v548
    %v693 = vpack.c.b16 %v565, %v549
    %v694 = vpack.c.b16 %v566, %v550
    %v695 = vpack.c.b16 %v567, %v551
    %v696 = vpack.c.b16 %v568, %v552
    %v697 = vpack.c.b16 %v569, %v553
    %v698 = vpack.c.b16 %v570, %v554
    %827 = vmatpush.bf16.msra.mxu0 %v683
    %828 = vmatpush.bf16.msra.mxu0 %v667
    %829 = vmatpush.bf16.msra.mxu0 %v651
    %830 = vmatpush.bf16.msra.mxu0 %v635
    %831 = vmatpush.bf16.msra.mxu0 %v619
    %832 = vmatpush.bf16.msra.mxu0 %v603
    %833 = vmatpush.bf16.msra.mxu0 %v587
    %834 = vmatpush.bf16.msra.mxu0 %v571
    %835 = vmatmul.bf16.gmra.mxu0 %v22
    %v836 = vpop.f32.mrf.mxu0
    %v837 = vadd.f32 %v155, %v836
    %v838 = vpop.f32.mrf.mxu0
    %839 = vdwg.mxu0
    %840 = vmatpush.bf16.msra.mxu0 %v684
    %841 = vmatpush.bf16.msra.mxu0 %v668
    %842 = vmatpush.bf16.msra.mxu0 %v652
    %843 = vmatpush.bf16.msra.mxu0 %v636
    %844 = vmatpush.bf16.msra.mxu0 %v620
    %845 = vmatpush.bf16.msra.mxu0 %v604
    %846 = vmatpush.bf16.msra.mxu0 %v588
    %847 = vmatpush.bf16.msra.mxu0 %v572
    %848 = vmatmul.bf16.gmra.mxu0 %v22
    %v849 = vpop.f32.mrf.mxu0
    %v850 = vadd.f32 %v156, %v849
    %v851 = vpop.f32.mrf.mxu0
    %852 = vdwg.mxu0
    %853 = vmatpush.bf16.msra.mxu0 %v685
    %854 = vmatpush.bf16.msra.mxu0 %v669
    %855 = vmatpush.bf16.msra.mxu0 %v653
    %856 = vmatpush.bf16.msra.mxu0 %v637
    %857 = vmatpush.bf16.msra.mxu0 %v621
    %858 = vmatpush.bf16.msra.mxu0 %v605
    %859 = vmatpush.bf16.msra.mxu0 %v589
    %860 = vmatpush.bf16.msra.mxu0 %v573
    %861 = vmatmul.bf16.gmra.mxu0 %v22
    %v862 = vpop.f32.mrf.mxu0
    %v863 = vadd.f32 %v157, %v862
    %v864 = vpop.f32.mrf.mxu0
    %865 = vdwg.mxu0
    %866 = vmatpush.bf16.msra.mxu0 %v686
    %867 = vmatpush.bf16.msra.mxu0 %v670
    %868 = vmatpush.bf16.msra.mxu0 %v654
    %869 = vmatpush.bf16.msra.mxu0 %v638
    %870 = vmatpush.bf16.msra.mxu0 %v622
    %871 = vmatpush.bf16.msra.mxu0 %v606
    %872 = vmatpush.bf16.msra.mxu0 %v590
    %873 = vmatpush.bf16.msra.mxu0 %v574
    %874 = vmatmul.bf16.gmra.mxu0 %v22
    %v875 = vpop.f32.mrf.mxu0
    %v876 = vadd.f32 %v158, %v875
    %v877 = vpop.f32.mrf.mxu0
    %878 = vdwg.mxu0
    %879 = vmatpush.bf16.msra.mxu0 %v687
    %880 = vmatpush.bf16.msra.mxu0 %v671
    %881 = vmatpush.bf16.msra.mxu0 %v655
    %882 = vmatpush.bf16.msra.mxu0 %v639
    %883 = vmatpush.bf16.msra.mxu0 %v623
    %884 = vmatpush.bf16.msra.mxu0 %v607
    %885 = vmatpush.bf16.msra.mxu0 %v591
    %886 = vmatpush.bf16.msra.mxu0 %v575
    %887 = vmatmul.bf16.gmra.mxu0 %v22
    %v888 = vpop.f32.mrf.mxu0
    %v889 = vadd.f32 %v159, %v888
    %v890 = vpop.f32.mrf.mxu0
    %891 = vdwg.mxu0
    %892 = vmatpush.bf16.msra.mxu0 %v688
    %893 = vmatpush.bf16.msra.mxu0 %v672
    %894 = vmatpush.bf16.msra.mxu0 %v656
    %895 = vmatpush.bf16.msra.mxu0 %v640
    %896 = vmatpush.bf16.msra.mxu0 %v624
    %897 = vmatpush.bf16.msra.mxu0 %v608
    %898 = vmatpush.bf16.msra.mxu0 %v592
    %899 = vmatpush.bf16.msra.mxu0 %v576
    %900 = vmatmul.bf16.gmra.mxu0 %v22
    %v901 = vpop.f32.mrf.mxu0
    %v902 = vadd.f32 %v160, %v901
    %v903 = vpop.f32.mrf.mxu0
    %904 = vdwg.mxu0
    %905 = vmatpush.bf16.msra.mxu0 %v689
    %906 = vmatpush.bf16.msra.mxu0 %v673
    %907 = vmatpush.bf16.msra.mxu0 %v657
    %908 = vmatpush.bf16.msra.mxu0 %v641
    %909 = vmatpush.bf16.msra.mxu0 %v625
    %910 = vmatpush.bf16.msra.mxu0 %v609
    %911 = vmatpush.bf16.msra.mxu0 %v593
    %912 = vmatpush.bf16.msra.mxu0 %v577
    %913 = vmatmul.bf16.gmra.mxu0 %v22
    %v914 = vpop.f32.mrf.mxu0
    %v915 = vadd.f32 %v161, %v914
    %v916 = vpop.f32.mrf.mxu0
    %917 = vdwg.mxu0
    %918 = vmatpush.bf16.msra.mxu0 %v690
    %919 = vmatpush.bf16.msra.mxu0 %v674
    %920 = vmatpush.bf16.msra.mxu0 %v658
    %921 = vmatpush.bf16.msra.mxu0 %v642
    %922 = vmatpush.bf16.msra.mxu0 %v626
    %923 = vmatpush.bf16.msra.mxu0 %v610
    %924 = vmatpush.bf16.msra.mxu0 %v594
    %925 = vmatpush.bf16.msra.mxu0 %v578
    %926 = vmatmul.bf16.gmra.mxu0 %v22
    %v927 = vpop.f32.mrf.mxu0
    %v928 = vadd.f32 %v162, %v927
    %v929 = vpop.f32.mrf.mxu0
    %930 = vdwg.mxu0
    %931 = vmatpush.bf16.msra.mxu0 %v691
    %932 = vmatpush.bf16.msra.mxu0 %v675
    %933 = vmatpush.bf16.msra.mxu0 %v659
    %934 = vmatpush.bf16.msra.mxu0 %v643
    %935 = vmatpush.bf16.msra.mxu0 %v627
    %936 = vmatpush.bf16.msra.mxu0 %v611
    %937 = vmatpush.bf16.msra.mxu0 %v595
    %938 = vmatpush.bf16.msra.mxu0 %v579
    %939 = vmatmul.bf16.gmra.mxu0 %v22
    %v940 = vpop.f32.mrf.mxu0
    %v941 = vadd.f32 %v163, %v940
    %v942 = vpop.f32.mrf.mxu0
    %943 = vdwg.mxu0
    %944 = vmatpush.bf16.msra.mxu0 %v692
    %945 = vmatpush.bf16.msra.mxu0 %v676
    %946 = vmatpush.bf16.msra.mxu0 %v660
    %947 = vmatpush.bf16.msra.mxu0 %v644
    %948 = vmatpush.bf16.msra.mxu0 %v628
    %949 = vmatpush.bf16.msra.mxu0 %v612
    %950 = vmatpush.bf16.msra.mxu0 %v596
    %951 = vmatpush.bf16.msra.mxu0 %v580
    %952 = vmatmul.bf16.gmra.mxu0 %v22
    %v953 = vpop.f32.mrf.mxu0
    %v954 = vadd.f32 %v164, %v953
    %v955 = vpop.f32.mrf.mxu0
    %956 = vdwg.mxu0
    %957 = vmatpush.bf16.msra.mxu0 %v693
    %958 = vmatpush.bf16.msra.mxu0 %v677
    %959 = vmatpush.bf16.msra.mxu0 %v661
    %960 = vmatpush.bf16.msra.mxu0 %v645
    %961 = vmatpush.bf16.msra.mxu0 %v629
    %962 = vmatpush.bf16.msra.mxu0 %v613
    %963 = vmatpush.bf16.msra.mxu0 %v597
    %964 = vmatpush.bf16.msra.mxu0 %v581
    %965 = vmatmul.bf16.gmra.mxu0 %v22
    %v966 = vpop.f32.mrf.mxu0
    %v967 = vadd.f32 %v165, %v966
    %v968 = vpop.f32.mrf.mxu0
    %969 = vdwg.mxu0
    %970 = vmatpush.bf16.msra.mxu0 %v694
    %971 = vmatpush.bf16.msra.mxu0 %v678
    %972 = vmatpush.bf16.msra.mxu0 %v662
    %973 = vmatpush.bf16.msra.mxu0 %v646
    %974 = vmatpush.bf16.msra.mxu0 %v630
    %975 = vmatpush.bf16.msra.mxu0 %v614
    %976 = vmatpush.bf16.msra.mxu0 %v598
    %977 = vmatpush.bf16.msra.mxu0 %v582
    %978 = vmatmul.bf16.gmra.mxu0 %v22
    %v979 = vpop.f32.mrf.mxu0
    %v980 = vadd.f32 %v166, %v979
    %v981 = vpop.f32.mrf.mxu0
    %982 = vdwg.mxu0
    %983 = vmatpush.bf16.msra.mxu0 %v695
    %984 = vmatpush.bf16.msra.mxu0 %v679
    %985 = vmatpush.bf16.msra.mxu0 %v663
    %986 = vmatpush.bf16.msra.mxu0 %v647
    %987 = vmatpush.bf16.msra.mxu0 %v631
    %988 = vmatpush.bf16.msra.mxu0 %v615
    %989 = vmatpush.bf16.msra.mxu0 %v599
    %990 = vmatpush.bf16.msra.mxu0 %v583
    %991 = vmatmul.bf16.gmra.mxu0 %v22
    %v992 = vpop.f32.mrf.mxu0
    %v993 = vadd.f32 %v167, %v992
    %v994 = vpop.f32.mrf.mxu0
    %995 = vdwg.mxu0
    %996 = vmatpush.bf16.msra.mxu0 %v696
    %997 = vmatpush.bf16.msra.mxu0 %v680
    %998 = vmatpush.bf16.msra.mxu0 %v664
    %999 = vmatpush.bf16.msra.mxu0 %v648
    %1000 = vmatpush.bf16.msra.mxu0 %v632
    %1001 = vmatpush.bf16.msra.mxu0 %v616
    %1002 = vmatpush.bf16.msra.mxu0 %v600
    %1003 = vmatpush.bf16.msra.mxu0 %v584
    %1004 = vmatmul.bf16.gmra.mxu0 %v22
    %v1005 = vpop.f32.mrf.mxu0
    %v1006 = vadd.f32 %v168, %v1005
    %v1007 = vpop.f32.mrf.mxu0
    %1008 = vdwg.mxu0
    %1009 = vmatpush.bf16.msra.mxu0 %v697
    %1010 = vmatpush.bf16.msra.mxu0 %v681
    %1011 = vmatpush.bf16.msra.mxu0 %v665
    %1012 = vmatpush.bf16.msra.mxu0 %v649
    %1013 = vmatpush.bf16.msra.mxu0 %v633
    %1014 = vmatpush.bf16.msra.mxu0 %v617
    %1015 = vmatpush.bf16.msra.mxu0 %v601
    %1016 = vmatpush.bf16.msra.mxu0 %v585
    %1017 = vmatmul.bf16.gmra.mxu0 %v22
    %v1018 = vpop.f32.mrf.mxu0
    %v1019 = vadd.f32 %v169, %v1018
    %v1020 = vpop.f32.mrf.mxu0
    %1021 = vdwg.mxu0
    %1022 = vmatpush.bf16.msra.mxu0 %v698
    %1023 = vmatpush.bf16.msra.mxu0 %v682
    %1024 = vmatpush.bf16.msra.mxu0 %v666
    %1025 = vmatpush.bf16.msra.mxu0 %v650
    %1026 = vmatpush.bf16.msra.mxu0 %v634
    %1027 = vmatpush.bf16.msra.mxu0 %v618
    %1028 = vmatpush.bf16.msra.mxu0 %v602
    %1029 = vmatpush.bf16.msra.mxu0 %v586
    %1030 = vmatmul.bf16.gmra.mxu0 %v22
    %v1031 = vpop.f32.mrf.mxu0
    %v1032 = vadd.f32 %v170, %v1031
    %v1033 = vpop.f32.mrf.mxu0
    %1034 = vdwg.mxu0
    %v1035 = vmax.f32 %v837, 0.0
    %v1036 = vmax.f32 %v850, 0.0
    %v1037 = vmax.f32 %v863, 0.0
    %v1038 = vmax.f32 %v876, 0.0
    %v1039 = vmax.f32 %v889, 0.0
    %v1040 = vmax.f32 %v902, 0.0
    %v1041 = vmax.f32 %v915, 0.0
    %v1042 = vmax.f32 %v928, 0.0
    %v1043 = vmax.f32 %v941, 0.0
    %v1044 = vmax.f32 %v954, 0.0
    %v1045 = vmax.f32 %v967, 0.0
    %v1046 = vmax.f32 %v980, 0.0
    %v1047 = vmax.f32 %v993, 0.0
    %v1048 = vmax.f32 %v1006, 0.0
    %v1049 = vmax.f32 %v1019, 0.0
    %v1050 = vmax.f32 %v1032, 0.0
    %v1051 = vpack.c.bf16 %v1035, %v1035
    %v1052 = vpack.c.bf16 %v1036, %v1036
    %v1053 = vpack.c.bf16 %v1037, %v1037
    %v1054 = vpack.c.bf16 %v1038, %v1038
    %v1055 = vpack.c.bf16 %v1039, %v1039
    %v1056 = vpack.c.bf16 %v1040, %v1040
    %v1057 = vpack.c.bf16 %v1041, %v1041
    %v1058 = vpack.c.bf16 %v1042, %v1042
    %v1059 = vpack.c.bf16 %v1043, %v1043
    %v1060 = vpack.c.bf16 %v1044, %v1044
    %v1061 = vpack.c.bf16 %v1045, %v1045
    %v1062 = vpack.c.bf16 %v1046, %v1046
    %v1063 = vpack.c.bf16 %v1047, %v1047
    %v1064 = vpack.c.bf16 %v1048, %v1048
    %v1065 = vpack.c.bf16 %v1049, %v1049
    %v1066 = vpack.c.bf16 %v1050, %v1050
    %v1067 = vld [vmem:[%s3] sm:$0xf]
    %v1068 = vld [vmem:[%s3 + $0x4] sm:$0xf]
    %v1069 = vld [vmem:[%s3 + $0x8] sm:$0xf]
    %v1070 = vld [vmem:[%s3 + $0xc] sm:$0xf]
    %v1071 = vld [vmem:[%s3 + $0x10] sm:$0xf]
    %v1072 = vld [vmem:[%s3 + $0x14] sm:$0xf]
    %v1073 = vld [vmem:[%s3 + $0x18] sm:$0xf]
    %v1074 = vld [vmem:[%s3 + $0x1c] sm:$0xf]
    %v1075 = vld [vmem:[%s3 + $0x20] sm:$0xf]
    %v1076 = vld [vmem:[%s3 + $0x24] sm:$0xf]
    %v1077 = vld [vmem:[%s3 + $0x28] sm:$0xf]
    %v1078 = vld [vmem:[%s3 + $0x2c] sm:$0xf]
    %v1079 = vld [vmem:[%s3 + $0x30] sm:$0xf]
    %v1080 = vld [vmem:[%s3 + $0x34] sm:$0xf]
    %v1081 = vld [vmem:[%s3 + $0x38] sm:$0xf]
    %v1082 = vld [vmem:[%s3 + $0x3c] sm:$0xf]
    %v1083 = vld [vmem:[%s3 + $0x40] sm:$0xf]
    %v1084 = vld [vmem:[%s3 + $0x44] sm:$0xf]
    %v1085 = vld [vmem:[%s3 + $0x48] sm:$0xf]
    %v1086 = vld [vmem:[%s3 + $0x4c] sm:$0xf]
    %v1087 = vld [vmem:[%s3 + $0x50] sm:$0xf]
    %v1088 = vld [vmem:[%s3 + $0x54] sm:$0xf]
    %v1089 = vld [vmem:[%s3 + $0x58] sm:$0xf]
    %v1090 = vld [vmem:[%s3 + $0x5c] sm:$0xf]
    %v1091 = vld [vmem:[%s3 + $0x60] sm:$0xf]
    %v1092 = vld [vmem:[%s3 + $0x64] sm:$0xf]
    %v1093 = vld [vmem:[%s3 + $0x68] sm:$0xf]
    %v1094 = vld [vmem:[%s3 + $0x6c] sm:$0xf]
    %v1095 = vld [vmem:[%s3 + $0x70] sm:$0xf]
    %v1096 = vld [vmem:[%s3 + $0x74] sm:$0xf]
    %v1097 = vld [vmem:[%s3 + $0x78] sm:$0xf]
    %v1098 = vld [vmem:[%s3 + $0x7c] sm:$0xf]
    %v1099 = vld [vmem:[%s3 + $0x80] sm:$0xf]
    %v1100 = vld [vmem:[%s3 + $0x84] sm:$0xf]
    %v1101 = vld [vmem:[%s3 + $0x88] sm:$0xf]
    %v1102 = vld [vmem:[%s3 + $0x8c] sm:$0xf]
    %v1103 = vld [vmem:[%s3 + $0x90] sm:$0xf]
    %v1104 = vld [vmem:[%s3 + $0x94] sm:$0xf]
    %v1105 = vld [vmem:[%s3 + $0x98] sm:$0xf]
    %v1106 = vld [vmem:[%s3 + $0x9c] sm:$0xf]
    %v1107 = vld [vmem:[%s3 + $0xa0] sm:$0xf]
    %v1108 = vld [vmem:[%s3 + $0xa4] sm:$0xf]
    %v1109 = vld [vmem:[%s3 + $0xa8] sm:$0xf]
    %v1110 = vld [vmem:[%s3 + $0xac] sm:$0xf]
    %v1111 = vld [vmem:[%s3 + $0xb0] sm:$0xf]
    %v1112 = vld [vmem:[%s3 + $0xb4] sm:$0xf]
    %v1113 = vld [vmem:[%s3 + $0xb8] sm:$0xf]
    %v1114 = vld [vmem:[%s3 + $0xbc] sm:$0xf]
    %v1115 = vld [vmem:[%s3 + $0xc0] sm:$0xf]
    %v1116 = vld [vmem:[%s3 + $0xc4] sm:$0xf]
    %v1117 = vld [vmem:[%s3 + $0xc8] sm:$0xf]
    %v1118 = vld [vmem:[%s3 + $0xcc] sm:$0xf]
    %v1119 = vld [vmem:[%s3 + $0xd0] sm:$0xf]
    %v1120 = vld [vmem:[%s3 + $0xd4] sm:$0xf]
    %v1121 = vld [vmem:[%s3 + $0xd8] sm:$0xf]
    %v1122 = vld [vmem:[%s3 + $0xdc] sm:$0xf]
    %v1123 = vld [vmem:[%s3 + $0xe0] sm:$0xf]
    %v1124 = vld [vmem:[%s3 + $0xe4] sm:$0xf]
    %v1125 = vld [vmem:[%s3 + $0xe8] sm:$0xf]
    %v1126 = vld [vmem:[%s3 + $0xec] sm:$0xf]
    %v1127 = vld [vmem:[%s3 + $0xf0] sm:$0xf]
    %v1128 = vld [vmem:[%s3 + $0xf4] sm:$0xf]
    %v1129 = vld [vmem:[%s3 + $0xf8] sm:$0xf]
    %v1130 = vld [vmem:[%s3 + $0xfc] sm:$0xf]
    %v1131 = vld [vmem:[%s3 + $0x100] sm:$0xf]
    %v1132 = vld [vmem:[%s3 + $0x104] sm:$0xf]
    %v1133 = vld [vmem:[%s3 + $0x108] sm:$0xf]
    %v1134 = vld [vmem:[%s3 + $0x10c] sm:$0xf]
    %v1135 = vld [vmem:[%s3 + $0x110] sm:$0xf]
    %v1136 = vld [vmem:[%s3 + $0x114] sm:$0xf]
    %v1137 = vld [vmem:[%s3 + $0x118] sm:$0xf]
    %v1138 = vld [vmem:[%s3 + $0x11c] sm:$0xf]
    %v1139 = vld [vmem:[%s3 + $0x120] sm:$0xf]
    %v1140 = vld [vmem:[%s3 + $0x124] sm:$0xf]
    %v1141 = vld [vmem:[%s3 + $0x128] sm:$0xf]
    %v1142 = vld [vmem:[%s3 + $0x12c] sm:$0xf]
    %v1143 = vld [vmem:[%s3 + $0x130] sm:$0xf]
    %v1144 = vld [vmem:[%s3 + $0x134] sm:$0xf]
    %v1145 = vld [vmem:[%s3 + $0x138] sm:$0xf]
    %v1146 = vld [vmem:[%s3 + $0x13c] sm:$0xf]
    %v1147 = vld [vmem:[%s3 + $0x140] sm:$0xf]
    %v1148 = vld [vmem:[%s3 + $0x144] sm:$0xf]
    %v1149 = vld [vmem:[%s3 + $0x148] sm:$0xf]
    %v1150 = vld [vmem:[%s3 + $0x14c] sm:$0xf]
    %v1151 = vld [vmem:[%s3 + $0x150] sm:$0xf]
    %v1152 = vld [vmem:[%s3 + $0x154] sm:$0xf]
    %v1153 = vld [vmem:[%s3 + $0x158] sm:$0xf]
    %v1154 = vld [vmem:[%s3 + $0x15c] sm:$0xf]
    %v1155 = vld [vmem:[%s3 + $0x160] sm:$0xf]
    %v1156 = vld [vmem:[%s3 + $0x164] sm:$0xf]
    %v1157 = vld [vmem:[%s3 + $0x168] sm:$0xf]
    %v1158 = vld [vmem:[%s3 + $0x16c] sm:$0xf]
    %v1159 = vld [vmem:[%s3 + $0x170] sm:$0xf]
    %v1160 = vld [vmem:[%s3 + $0x174] sm:$0xf]
    %v1161 = vld [vmem:[%s3 + $0x178] sm:$0xf]
    %v1162 = vld [vmem:[%s3 + $0x17c] sm:$0xf]
    %v1163 = vld [vmem:[%s3 + $0x180] sm:$0xf]
    %v1164 = vld [vmem:[%s3 + $0x184] sm:$0xf]
    %v1165 = vld [vmem:[%s3 + $0x188] sm:$0xf]
    %v1166 = vld [vmem:[%s3 + $0x18c] sm:$0xf]
    %v1167 = vld [vmem:[%s3 + $0x190] sm:$0xf]
    %v1168 = vld [vmem:[%s3 + $0x194] sm:$0xf]
    %v1169 = vld [vmem:[%s3 + $0x198] sm:$0xf]
    %v1170 = vld [vmem:[%s3 + $0x19c] sm:$0xf]
    %v1171 = vld [vmem:[%s3 + $0x1a0] sm:$0xf]
    %v1172 = vld [vmem:[%s3 + $0x1a4] sm:$0xf]
    %v1173 = vld [vmem:[%s3 + $0x1a8] sm:$0xf]
    %v1174 = vld [vmem:[%s3 + $0x1ac] sm:$0xf]
    %v1175 = vld [vmem:[%s3 + $0x1b0] sm:$0xf]
    %v1176 = vld [vmem:[%s3 + $0x1b4] sm:$0xf]
    %v1177 = vld [vmem:[%s3 + $0x1b8] sm:$0xf]
    %v1178 = vld [vmem:[%s3 + $0x1bc] sm:$0xf]
    %v1179 = vld [vmem:[%s3 + $0x1c0] sm:$0xf]
    %v1180 = vld [vmem:[%s3 + $0x1c4] sm:$0xf]
    %v1181 = vld [vmem:[%s3 + $0x1c8] sm:$0xf]
    %v1182 = vld [vmem:[%s3 + $0x1cc] sm:$0xf]
    %v1183 = vld [vmem:[%s3 + $0x1d0] sm:$0xf]
    %v1184 = vld [vmem:[%s3 + $0x1d4] sm:$0xf]
    %v1185 = vld [vmem:[%s3 + $0x1d8] sm:$0xf]
    %v1186 = vld [vmem:[%s3 + $0x1dc] sm:$0xf]
    %v1187 = vld [vmem:[%s3 + $0x1e0] sm:$0xf]
    %v1188 = vld [vmem:[%s3 + $0x1e4] sm:$0xf]
    %v1189 = vld [vmem:[%s3 + $0x1e8] sm:$0xf]
    %v1190 = vld [vmem:[%s3 + $0x1ec] sm:$0xf]
    %v1191 = vld [vmem:[%s3 + $0x1f0] sm:$0xf]
    %v1192 = vld [vmem:[%s3 + $0x1f4] sm:$0xf]
    %v1193 = vld [vmem:[%s3 + $0x1f8] sm:$0xf]
    %v1194 = vld [vmem:[%s3 + $0x1fc] sm:$0xf]
    %v1195 = vld [vmem:[%s3 + $0x200] sm:$0xf]
    %v1196 = vld [vmem:[%s3 + $0x204] sm:$0xf]
    %v1197 = vld [vmem:[%s3 + $0x208] sm:$0xf]
    %v1198 = vld [vmem:[%s3 + $0x20c] sm:$0xf]
    %v1199 = vld [vmem:[%s3 + $0x210] sm:$0xf]
    %v1200 = vld [vmem:[%s3 + $0x214] sm:$0xf]
    %v1201 = vld [vmem:[%s3 + $0x218] sm:$0xf]
    %v1202 = vld [vmem:[%s3 + $0x21c] sm:$0xf]
    %v1203 = vld [vmem:[%s3 + $0x220] sm:$0xf]
    %v1204 = vld [vmem:[%s3 + $0x224] sm:$0xf]
    %v1205 = vld [vmem:[%s3 + $0x228] sm:$0xf]
    %v1206 = vld [vmem:[%s3 + $0x22c] sm:$0xf]
    %v1207 = vld [vmem:[%s3 + $0x230] sm:$0xf]
    %v1208 = vld [vmem:[%s3 + $0x234] sm:$0xf]
    %v1209 = vld [vmem:[%s3 + $0x238] sm:$0xf]
    %v1210 = vld [vmem:[%s3 + $0x23c] sm:$0xf]
    %v1211 = vld [vmem:[%s3 + $0x240] sm:$0xf]
    %v1212 = vld [vmem:[%s3 + $0x244] sm:$0xf]
    %v1213 = vld [vmem:[%s3 + $0x248] sm:$0xf]
    %v1214 = vld [vmem:[%s3 + $0x24c] sm:$0xf]
    %v1215 = vld [vmem:[%s3 + $0x250] sm:$0xf]
    %v1216 = vld [vmem:[%s3 + $0x254] sm:$0xf]
    %v1217 = vld [vmem:[%s3 + $0x258] sm:$0xf]
    %v1218 = vld [vmem:[%s3 + $0x25c] sm:$0xf]
    %v1219 = vld [vmem:[%s3 + $0x260] sm:$0xf]
    %v1220 = vld [vmem:[%s3 + $0x264] sm:$0xf]
    %v1221 = vld [vmem:[%s3 + $0x268] sm:$0xf]
    %v1222 = vld [vmem:[%s3 + $0x26c] sm:$0xf]
    %v1223 = vld [vmem:[%s3 + $0x270] sm:$0xf]
    %v1224 = vld [vmem:[%s3 + $0x274] sm:$0xf]
    %v1225 = vld [vmem:[%s3 + $0x278] sm:$0xf]
    %v1226 = vld [vmem:[%s3 + $0x27c] sm:$0xf]
    %v1227 = vld [vmem:[%s3 + $0x280] sm:$0xf]
    %v1228 = vld [vmem:[%s3 + $0x284] sm:$0xf]
    %v1229 = vld [vmem:[%s3 + $0x288] sm:$0xf]
    %v1230 = vld [vmem:[%s3 + $0x28c] sm:$0xf]
    %v1231 = vld [vmem:[%s3 + $0x290] sm:$0xf]
    %v1232 = vld [vmem:[%s3 + $0x294] sm:$0xf]
    %v1233 = vld [vmem:[%s3 + $0x298] sm:$0xf]
    %v1234 = vld [vmem:[%s3 + $0x29c] sm:$0xf]
    %v1235 = vld [vmem:[%s3 + $0x2a0] sm:$0xf]
    %v1236 = vld [vmem:[%s3 + $0x2a4] sm:$0xf]
    %v1237 = vld [vmem:[%s3 + $0x2a8] sm:$0xf]
    %v1238 = vld [vmem:[%s3 + $0x2ac] sm:$0xf]
    %v1239 = vld [vmem:[%s3 + $0x2b0] sm:$0xf]
    %v1240 = vld [vmem:[%s3 + $0x2b4] sm:$0xf]
    %v1241 = vld [vmem:[%s3 + $0x2b8] sm:$0xf]
    %v1242 = vld [vmem:[%s3 + $0x2bc] sm:$0xf]
    %v1243 = vld [vmem:[%s3 + $0x2c0] sm:$0xf]
    %v1244 = vld [vmem:[%s3 + $0x2c4] sm:$0xf]
    %v1245 = vld [vmem:[%s3 + $0x2c8] sm:$0xf]
    %v1246 = vld [vmem:[%s3 + $0x2cc] sm:$0xf]
    %v1247 = vld [vmem:[%s3 + $0x2d0] sm:$0xf]
    %v1248 = vld [vmem:[%s3 + $0x2d4] sm:$0xf]
    %v1249 = vld [vmem:[%s3 + $0x2d8] sm:$0xf]
    %v1250 = vld [vmem:[%s3 + $0x2dc] sm:$0xf]
    %v1251 = vld [vmem:[%s3 + $0x2e0] sm:$0xf]
    %v1252 = vld [vmem:[%s3 + $0x2e4] sm:$0xf]
    %v1253 = vld [vmem:[%s3 + $0x2e8] sm:$0xf]
    %v1254 = vld [vmem:[%s3 + $0x2ec] sm:$0xf]
    %v1255 = vld [vmem:[%s3 + $0x2f0] sm:$0xf]
    %v1256 = vld [vmem:[%s3 + $0x2f4] sm:$0xf]
    %v1257 = vld [vmem:[%s3 + $0x2f8] sm:$0xf]
    %v1258 = vld [vmem:[%s3 + $0x2fc] sm:$0xf]
    %v1259 = vld [vmem:[%s3 + $0x300] sm:$0xf]
    %v1260 = vld [vmem:[%s3 + $0x304] sm:$0xf]
    %v1261 = vld [vmem:[%s3 + $0x308] sm:$0xf]
    %v1262 = vld [vmem:[%s3 + $0x30c] sm:$0xf]
    %v1263 = vld [vmem:[%s3 + $0x310] sm:$0xf]
    %v1264 = vld [vmem:[%s3 + $0x314] sm:$0xf]
    %v1265 = vld [vmem:[%s3 + $0x318] sm:$0xf]
    %v1266 = vld [vmem:[%s3 + $0x31c] sm:$0xf]
    %v1267 = vld [vmem:[%s3 + $0x320] sm:$0xf]
    %v1268 = vld [vmem:[%s3 + $0x324] sm:$0xf]
    %v1269 = vld [vmem:[%s3 + $0x328] sm:$0xf]
    %v1270 = vld [vmem:[%s3 + $0x32c] sm:$0xf]
    %v1271 = vld [vmem:[%s3 + $0x330] sm:$0xf]
    %v1272 = vld [vmem:[%s3 + $0x334] sm:$0xf]
    %v1273 = vld [vmem:[%s3 + $0x338] sm:$0xf]
    %v1274 = vld [vmem:[%s3 + $0x33c] sm:$0xf]
    %v1275 = vld [vmem:[%s3 + $0x340] sm:$0xf]
    %v1276 = vld [vmem:[%s3 + $0x344] sm:$0xf]
    %v1277 = vld [vmem:[%s3 + $0x348] sm:$0xf]
    %v1278 = vld [vmem:[%s3 + $0x34c] sm:$0xf]
    %v1279 = vld [vmem:[%s3 + $0x350] sm:$0xf]
    %v1280 = vld [vmem:[%s3 + $0x354] sm:$0xf]
    %v1281 = vld [vmem:[%s3 + $0x358] sm:$0xf]
    %v1282 = vld [vmem:[%s3 + $0x35c] sm:$0xf]
    %v1283 = vld [vmem:[%s3 + $0x360] sm:$0xf]
    %v1284 = vld [vmem:[%s3 + $0x364] sm:$0xf]
    %v1285 = vld [vmem:[%s3 + $0x368] sm:$0xf]
    %v1286 = vld [vmem:[%s3 + $0x36c] sm:$0xf]
    %v1287 = vld [vmem:[%s3 + $0x370] sm:$0xf]
    %v1288 = vld [vmem:[%s3 + $0x374] sm:$0xf]
    %v1289 = vld [vmem:[%s3 + $0x378] sm:$0xf]
    %v1290 = vld [vmem:[%s3 + $0x37c] sm:$0xf]
    %v1291 = vld [vmem:[%s3 + $0x380] sm:$0xf]
    %v1292 = vld [vmem:[%s3 + $0x384] sm:$0xf]
    %v1293 = vld [vmem:[%s3 + $0x388] sm:$0xf]
    %v1294 = vld [vmem:[%s3 + $0x38c] sm:$0xf]
    %v1295 = vld [vmem:[%s3 + $0x390] sm:$0xf]
    %v1296 = vld [vmem:[%s3 + $0x394] sm:$0xf]
    %v1297 = vld [vmem:[%s3 + $0x398] sm:$0xf]
    %v1298 = vld [vmem:[%s3 + $0x39c] sm:$0xf]
    %v1299 = vld [vmem:[%s3 + $0x3a0] sm:$0xf]
    %v1300 = vld [vmem:[%s3 + $0x3a4] sm:$0xf]
    %v1301 = vld [vmem:[%s3 + $0x3a8] sm:$0xf]
    %v1302 = vld [vmem:[%s3 + $0x3ac] sm:$0xf]
    %v1303 = vld [vmem:[%s3 + $0x3b0] sm:$0xf]
    %v1304 = vld [vmem:[%s3 + $0x3b4] sm:$0xf]
    %v1305 = vld [vmem:[%s3 + $0x3b8] sm:$0xf]
    %v1306 = vld [vmem:[%s3 + $0x3bc] sm:$0xf]
    %v1307 = vld [vmem:[%s3 + $0x3c0] sm:$0xf]
    %v1308 = vld [vmem:[%s3 + $0x3c4] sm:$0xf]
    %v1309 = vld [vmem:[%s3 + $0x3c8] sm:$0xf]
    %v1310 = vld [vmem:[%s3 + $0x3cc] sm:$0xf]
    %v1311 = vld [vmem:[%s3 + $0x3d0] sm:$0xf]
    %v1312 = vld [vmem:[%s3 + $0x3d4] sm:$0xf]
    %v1313 = vld [vmem:[%s3 + $0x3d8] sm:$0xf]
    %v1314 = vld [vmem:[%s3 + $0x3dc] sm:$0xf]
    %v1315 = vld [vmem:[%s3 + $0x3e0] sm:$0xf]
    %v1316 = vld [vmem:[%s3 + $0x3e4] sm:$0xf]
    %v1317 = vld [vmem:[%s3 + $0x3e8] sm:$0xf]
    %v1318 = vld [vmem:[%s3 + $0x3ec] sm:$0xf]
    %v1319 = vld [vmem:[%s3 + $0x3f0] sm:$0xf]
    %v1320 = vld [vmem:[%s3 + $0x3f4] sm:$0xf]
    %v1321 = vld [vmem:[%s3 + $0x3f8] sm:$0xf]
    %v1322 = vld [vmem:[%s3 + $0x3fc] sm:$0xf]
    %v1323 = vld [vmem:[%s4] sm:$0x1]
    %v1325 = vperm.slane %v1323, 0
    %v1583 = vunpack.c.l.b16 %v1067
    %v1584 = vunpack.c.l.b16 %v1068
    %v1585 = vunpack.c.l.b16 %v1069
    %v1586 = vunpack.c.l.b16 %v1070
    %v1587 = vunpack.c.l.b16 %v1071
    %v1588 = vunpack.c.l.b16 %v1072
    %v1589 = vunpack.c.l.b16 %v1073
    %v1590 = vunpack.c.l.b16 %v1074
    %v1591 = vunpack.c.l.b16 %v1075
    %v1592 = vunpack.c.l.b16 %v1076
    %v1593 = vunpack.c.l.b16 %v1077
    %v1594 = vunpack.c.l.b16 %v1078
    %v1595 = vunpack.c.l.b16 %v1079
    %v1596 = vunpack.c.l.b16 %v1080
    %v1597 = vunpack.c.l.b16 %v1081
    %v1598 = vunpack.c.l.b16 %v1082
    %v1599 = vunpack.c.l.b16 %v1083
    %v1600 = vunpack.c.l.b16 %v1084
    %v1601 = vunpack.c.l.b16 %v1085
    %v1602 = vunpack.c.l.b16 %v1086
    %v1603 = vunpack.c.l.b16 %v1087
    %v1604 = vunpack.c.l.b16 %v1088
    %v1605 = vunpack.c.l.b16 %v1089
    %v1606 = vunpack.c.l.b16 %v1090
    %v1607 = vunpack.c.l.b16 %v1091
    %v1608 = vunpack.c.l.b16 %v1092
    %v1609 = vunpack.c.l.b16 %v1093
    %v1610 = vunpack.c.l.b16 %v1094
    %v1611 = vunpack.c.l.b16 %v1095
    %v1612 = vunpack.c.l.b16 %v1096
    %v1613 = vunpack.c.l.b16 %v1097
    %v1614 = vunpack.c.l.b16 %v1098
    %v1615 = vunpack.c.l.b16 %v1099
    %v1616 = vunpack.c.l.b16 %v1100
    %v1617 = vunpack.c.l.b16 %v1101
    %v1618 = vunpack.c.l.b16 %v1102
    %v1619 = vunpack.c.l.b16 %v1103
    %v1620 = vunpack.c.l.b16 %v1104
    %v1621 = vunpack.c.l.b16 %v1105
    %v1622 = vunpack.c.l.b16 %v1106
    %v1623 = vunpack.c.l.b16 %v1107
    %v1624 = vunpack.c.l.b16 %v1108
    %v1625 = vunpack.c.l.b16 %v1109
    %v1626 = vunpack.c.l.b16 %v1110
    %v1627 = vunpack.c.l.b16 %v1111
    %v1628 = vunpack.c.l.b16 %v1112
    %v1629 = vunpack.c.l.b16 %v1113
    %v1630 = vunpack.c.l.b16 %v1114
    %v1631 = vunpack.c.l.b16 %v1115
    %v1632 = vunpack.c.l.b16 %v1116
    %v1633 = vunpack.c.l.b16 %v1117
    %v1634 = vunpack.c.l.b16 %v1118
    %v1635 = vunpack.c.l.b16 %v1119
    %v1636 = vunpack.c.l.b16 %v1120
    %v1637 = vunpack.c.l.b16 %v1121
    %v1638 = vunpack.c.l.b16 %v1122
    %v1639 = vunpack.c.l.b16 %v1123
    %v1640 = vunpack.c.l.b16 %v1124
    %v1641 = vunpack.c.l.b16 %v1125
    %v1642 = vunpack.c.l.b16 %v1126
    %v1643 = vunpack.c.l.b16 %v1127
    %v1644 = vunpack.c.l.b16 %v1128
    %v1645 = vunpack.c.l.b16 %v1129
    %v1646 = vunpack.c.l.b16 %v1130
    %v1647 = vunpack.c.l.b16 %v1131
    %v1648 = vunpack.c.l.b16 %v1132
    %v1649 = vunpack.c.l.b16 %v1133
    %v1650 = vunpack.c.l.b16 %v1134
    %v1651 = vunpack.c.l.b16 %v1135
    %v1652 = vunpack.c.l.b16 %v1136
    %v1653 = vunpack.c.l.b16 %v1137
    %v1654 = vunpack.c.l.b16 %v1138
    %v1655 = vunpack.c.l.b16 %v1139
    %v1656 = vunpack.c.l.b16 %v1140
    %v1657 = vunpack.c.l.b16 %v1141
    %v1658 = vunpack.c.l.b16 %v1142
    %v1659 = vunpack.c.l.b16 %v1143
    %v1660 = vunpack.c.l.b16 %v1144
    %v1661 = vunpack.c.l.b16 %v1145
    %v1662 = vunpack.c.l.b16 %v1146
    %v1663 = vunpack.c.l.b16 %v1147
    %v1664 = vunpack.c.l.b16 %v1148
    %v1665 = vunpack.c.l.b16 %v1149
    %v1666 = vunpack.c.l.b16 %v1150
    %v1667 = vunpack.c.l.b16 %v1151
    %v1668 = vunpack.c.l.b16 %v1152
    %v1669 = vunpack.c.l.b16 %v1153
    %v1670 = vunpack.c.l.b16 %v1154
    %v1671 = vunpack.c.l.b16 %v1155
    %v1672 = vunpack.c.l.b16 %v1156
    %v1673 = vunpack.c.l.b16 %v1157
    %v1674 = vunpack.c.l.b16 %v1158
    %v1675 = vunpack.c.l.b16 %v1159
    %v1676 = vunpack.c.l.b16 %v1160
    %v1677 = vunpack.c.l.b16 %v1161
    %v1678 = vunpack.c.l.b16 %v1162
    %v1679 = vunpack.c.l.b16 %v1163
    %v1680 = vunpack.c.l.b16 %v1164
    %v1681 = vunpack.c.l.b16 %v1165
    %v1682 = vunpack.c.l.b16 %v1166
    %v1683 = vunpack.c.l.b16 %v1167
    %v1684 = vunpack.c.l.b16 %v1168
    %v1685 = vunpack.c.l.b16 %v1169
    %v1686 = vunpack.c.l.b16 %v1170
    %v1687 = vunpack.c.l.b16 %v1171
    %v1688 = vunpack.c.l.b16 %v1172
    %v1689 = vunpack.c.l.b16 %v1173
    %v1690 = vunpack.c.l.b16 %v1174
    %v1691 = vunpack.c.l.b16 %v1175
    %v1692 = vunpack.c.l.b16 %v1176
    %v1693 = vunpack.c.l.b16 %v1177
    %v1694 = vunpack.c.l.b16 %v1178
    %v1695 = vunpack.c.l.b16 %v1179
    %v1696 = vunpack.c.l.b16 %v1180
    %v1697 = vunpack.c.l.b16 %v1181
    %v1698 = vunpack.c.l.b16 %v1182
    %v1699 = vunpack.c.l.b16 %v1183
    %v1700 = vunpack.c.l.b16 %v1184
    %v1701 = vunpack.c.l.b16 %v1185
    %v1702 = vunpack.c.l.b16 %v1186
    %v1703 = vunpack.c.l.b16 %v1187
    %v1704 = vunpack.c.l.b16 %v1188
    %v1705 = vunpack.c.l.b16 %v1189
    %v1706 = vunpack.c.l.b16 %v1190
    %v1707 = vunpack.c.l.b16 %v1191
    %v1708 = vunpack.c.l.b16 %v1192
    %v1709 = vunpack.c.l.b16 %v1193
    %v1710 = vunpack.c.l.b16 %v1194
    %v1711 = vunpack.c.l.b16 %v1195
    %v1712 = vunpack.c.l.b16 %v1196
    %v1713 = vunpack.c.l.b16 %v1197
    %v1714 = vunpack.c.l.b16 %v1198
    %v1715 = vunpack.c.l.b16 %v1199
    %v1716 = vunpack.c.l.b16 %v1200
    %v1717 = vunpack.c.l.b16 %v1201
    %v1718 = vunpack.c.l.b16 %v1202
    %v1719 = vunpack.c.l.b16 %v1203
    %v1720 = vunpack.c.l.b16 %v1204
    %v1721 = vunpack.c.l.b16 %v1205
    %v1722 = vunpack.c.l.b16 %v1206
    %v1723 = vunpack.c.l.b16 %v1207
    %v1724 = vunpack.c.l.b16 %v1208
    %v1725 = vunpack.c.l.b16 %v1209
    %v1726 = vunpack.c.l.b16 %v1210
    %v1727 = vunpack.c.l.b16 %v1211
    %v1728 = vunpack.c.l.b16 %v1212
    %v1729 = vunpack.c.l.b16 %v1213
    %v1730 = vunpack.c.l.b16 %v1214
    %v1731 = vunpack.c.l.b16 %v1215
    %v1732 = vunpack.c.l.b16 %v1216
    %v1733 = vunpack.c.l.b16 %v1217
    %v1734 = vunpack.c.l.b16 %v1218
    %v1735 = vunpack.c.l.b16 %v1219
    %v1736 = vunpack.c.l.b16 %v1220
    %v1737 = vunpack.c.l.b16 %v1221
    %v1738 = vunpack.c.l.b16 %v1222
    %v1739 = vunpack.c.l.b16 %v1223
    %v1740 = vunpack.c.l.b16 %v1224
    %v1741 = vunpack.c.l.b16 %v1225
    %v1742 = vunpack.c.l.b16 %v1226
    %v1743 = vunpack.c.l.b16 %v1227
    %v1744 = vunpack.c.l.b16 %v1228
    %v1745 = vunpack.c.l.b16 %v1229
    %v1746 = vunpack.c.l.b16 %v1230
    %v1747 = vunpack.c.l.b16 %v1231
    %v1748 = vunpack.c.l.b16 %v1232
    %v1749 = vunpack.c.l.b16 %v1233
    %v1750 = vunpack.c.l.b16 %v1234
    %v1751 = vunpack.c.l.b16 %v1235
    %v1752 = vunpack.c.l.b16 %v1236
    %v1753 = vunpack.c.l.b16 %v1237
    %v1754 = vunpack.c.l.b16 %v1238
    %v1755 = vunpack.c.l.b16 %v1239
    %v1756 = vunpack.c.l.b16 %v1240
    %v1757 = vunpack.c.l.b16 %v1241
    %v1758 = vunpack.c.l.b16 %v1242
    %v1759 = vunpack.c.l.b16 %v1243
    %v1760 = vunpack.c.l.b16 %v1244
    %v1761 = vunpack.c.l.b16 %v1245
    %v1762 = vunpack.c.l.b16 %v1246
    %v1763 = vunpack.c.l.b16 %v1247
    %v1764 = vunpack.c.l.b16 %v1248
    %v1765 = vunpack.c.l.b16 %v1249
    %v1766 = vunpack.c.l.b16 %v1250
    %v1767 = vunpack.c.l.b16 %v1251
    %v1768 = vunpack.c.l.b16 %v1252
    %v1769 = vunpack.c.l.b16 %v1253
    %v1770 = vunpack.c.l.b16 %v1254
    %v1771 = vunpack.c.l.b16 %v1255
    %v1772 = vunpack.c.l.b16 %v1256
    %v1773 = vunpack.c.l.b16 %v1257
    %v1774 = vunpack.c.l.b16 %v1258
    %v1775 = vunpack.c.l.b16 %v1259
    %v1776 = vunpack.c.l.b16 %v1260
    %v1777 = vunpack.c.l.b16 %v1261
    %v1778 = vunpack.c.l.b16 %v1262
    %v1779 = vunpack.c.l.b16 %v1263
    %v1780 = vunpack.c.l.b16 %v1264
    %v1781 = vunpack.c.l.b16 %v1265
    %v1782 = vunpack.c.l.b16 %v1266
    %v1783 = vunpack.c.l.b16 %v1267
    %v1784 = vunpack.c.l.b16 %v1268
    %v1785 = vunpack.c.l.b16 %v1269
    %v1786 = vunpack.c.l.b16 %v1270
    %v1787 = vunpack.c.l.b16 %v1271
    %v1788 = vunpack.c.l.b16 %v1272
    %v1789 = vunpack.c.l.b16 %v1273
    %v1790 = vunpack.c.l.b16 %v1274
    %v1791 = vunpack.c.l.b16 %v1275
    %v1792 = vunpack.c.l.b16 %v1276
    %v1793 = vunpack.c.l.b16 %v1277
    %v1794 = vunpack.c.l.b16 %v1278
    %v1795 = vunpack.c.l.b16 %v1279
    %v1796 = vunpack.c.l.b16 %v1280
    %v1797 = vunpack.c.l.b16 %v1281
    %v1798 = vunpack.c.l.b16 %v1282
    %v1799 = vunpack.c.l.b16 %v1283
    %v1800 = vunpack.c.l.b16 %v1284
    %v1801 = vunpack.c.l.b16 %v1285
    %v1802 = vunpack.c.l.b16 %v1286
    %v1803 = vunpack.c.l.b16 %v1287
    %v1804 = vunpack.c.l.b16 %v1288
    %v1805 = vunpack.c.l.b16 %v1289
    %v1806 = vunpack.c.l.b16 %v1290
    %v1807 = vunpack.c.l.b16 %v1291
    %v1808 = vunpack.c.l.b16 %v1292
    %v1809 = vunpack.c.l.b16 %v1293
    %v1810 = vunpack.c.l.b16 %v1294
    %v1811 = vunpack.c.l.b16 %v1295
    %v1812 = vunpack.c.l.b16 %v1296
    %v1813 = vunpack.c.l.b16 %v1297
    %v1814 = vunpack.c.l.b16 %v1298
    %v1815 = vunpack.c.l.b16 %v1299
    %v1816 = vunpack.c.l.b16 %v1300
    %v1817 = vunpack.c.l.b16 %v1301
    %v1818 = vunpack.c.l.b16 %v1302
    %v1819 = vunpack.c.l.b16 %v1303
    %v1820 = vunpack.c.l.b16 %v1304
    %v1821 = vunpack.c.l.b16 %v1305
    %v1822 = vunpack.c.l.b16 %v1306
    %v1823 = vunpack.c.l.b16 %v1307
    %v1824 = vunpack.c.l.b16 %v1308
    %v1825 = vunpack.c.l.b16 %v1309
    %v1826 = vunpack.c.l.b16 %v1310
    %v1827 = vunpack.c.l.b16 %v1311
    %v1828 = vunpack.c.l.b16 %v1312
    %v1829 = vunpack.c.l.b16 %v1313
    %v1830 = vunpack.c.l.b16 %v1314
    %v1831 = vunpack.c.l.b16 %v1315
    %v1832 = vunpack.c.l.b16 %v1316
    %v1833 = vunpack.c.l.b16 %v1317
    %v1834 = vunpack.c.l.b16 %v1318
    %v1835 = vunpack.c.l.b16 %v1319
    %v1836 = vunpack.c.l.b16 %v1320
    %v1837 = vunpack.c.l.b16 %v1321
    %v1838 = vunpack.c.l.b16 %v1322
    %v1839 = vpack.c.b16 %v1584, %v1583
    %v1840 = vpack.c.b16 %v1586, %v1585
    %v1841 = vpack.c.b16 %v1588, %v1587
    %v1842 = vpack.c.b16 %v1590, %v1589
    %v1843 = vpack.c.b16 %v1592, %v1591
    %v1844 = vpack.c.b16 %v1594, %v1593
    %v1845 = vpack.c.b16 %v1596, %v1595
    %v1846 = vpack.c.b16 %v1598, %v1597
    %v1847 = vpack.c.b16 %v1600, %v1599
    %v1848 = vpack.c.b16 %v1602, %v1601
    %v1849 = vpack.c.b16 %v1604, %v1603
    %v1850 = vpack.c.b16 %v1606, %v1605
    %v1851 = vpack.c.b16 %v1608, %v1607
    %v1852 = vpack.c.b16 %v1610, %v1609
    %v1853 = vpack.c.b16 %v1612, %v1611
    %v1854 = vpack.c.b16 %v1614, %v1613
    %v1855 = vpack.c.b16 %v1616, %v1615
    %v1856 = vpack.c.b16 %v1618, %v1617
    %v1857 = vpack.c.b16 %v1620, %v1619
    %v1858 = vpack.c.b16 %v1622, %v1621
    %v1859 = vpack.c.b16 %v1624, %v1623
    %v1860 = vpack.c.b16 %v1626, %v1625
    %v1861 = vpack.c.b16 %v1628, %v1627
    %v1862 = vpack.c.b16 %v1630, %v1629
    %v1863 = vpack.c.b16 %v1632, %v1631
    %v1864 = vpack.c.b16 %v1634, %v1633
    %v1865 = vpack.c.b16 %v1636, %v1635
    %v1866 = vpack.c.b16 %v1638, %v1637
    %v1867 = vpack.c.b16 %v1640, %v1639
    %v1868 = vpack.c.b16 %v1642, %v1641
    %v1869 = vpack.c.b16 %v1644, %v1643
    %v1870 = vpack.c.b16 %v1646, %v1645
    %v1871 = vpack.c.b16 %v1648, %v1647
    %v1872 = vpack.c.b16 %v1650, %v1649
    %v1873 = vpack.c.b16 %v1652, %v1651
    %v1874 = vpack.c.b16 %v1654, %v1653
    %v1875 = vpack.c.b16 %v1656, %v1655
    %v1876 = vpack.c.b16 %v1658, %v1657
    %v1877 = vpack.c.b16 %v1660, %v1659
    %v1878 = vpack.c.b16 %v1662, %v1661
    %v1879 = vpack.c.b16 %v1664, %v1663
    %v1880 = vpack.c.b16 %v1666, %v1665
    %v1881 = vpack.c.b16 %v1668, %v1667
    %v1882 = vpack.c.b16 %v1670, %v1669
    %v1883 = vpack.c.b16 %v1672, %v1671
    %v1884 = vpack.c.b16 %v1674, %v1673
    %v1885 = vpack.c.b16 %v1676, %v1675
    %v1886 = vpack.c.b16 %v1678, %v1677
    %v1887 = vpack.c.b16 %v1680, %v1679
    %v1888 = vpack.c.b16 %v1682, %v1681
    %v1889 = vpack.c.b16 %v1684, %v1683
    %v1890 = vpack.c.b16 %v1686, %v1685
    %v1891 = vpack.c.b16 %v1688, %v1687
    %v1892 = vpack.c.b16 %v1690, %v1689
    %v1893 = vpack.c.b16 %v1692, %v1691
    %v1894 = vpack.c.b16 %v1694, %v1693
    %v1895 = vpack.c.b16 %v1696, %v1695
    %v1896 = vpack.c.b16 %v1698, %v1697
    %v1897 = vpack.c.b16 %v1700, %v1699
    %v1898 = vpack.c.b16 %v1702, %v1701
    %v1899 = vpack.c.b16 %v1704, %v1703
    %v1900 = vpack.c.b16 %v1706, %v1705
    %v1901 = vpack.c.b16 %v1708, %v1707
    %v1902 = vpack.c.b16 %v1710, %v1709
    %v1903 = vpack.c.b16 %v1712, %v1711
    %v1904 = vpack.c.b16 %v1714, %v1713
    %v1905 = vpack.c.b16 %v1716, %v1715
    %v1906 = vpack.c.b16 %v1718, %v1717
    %v1907 = vpack.c.b16 %v1720, %v1719
    %v1908 = vpack.c.b16 %v1722, %v1721
    %v1909 = vpack.c.b16 %v1724, %v1723
    %v1910 = vpack.c.b16 %v1726, %v1725
    %v1911 = vpack.c.b16 %v1728, %v1727
    %v1912 = vpack.c.b16 %v1730, %v1729
    %v1913 = vpack.c.b16 %v1732, %v1731
    %v1914 = vpack.c.b16 %v1734, %v1733
    %v1915 = vpack.c.b16 %v1736, %v1735
    %v1916 = vpack.c.b16 %v1738, %v1737
    %v1917 = vpack.c.b16 %v1740, %v1739
    %v1918 = vpack.c.b16 %v1742, %v1741
    %v1919 = vpack.c.b16 %v1744, %v1743
    %v1920 = vpack.c.b16 %v1746, %v1745
    %v1921 = vpack.c.b16 %v1748, %v1747
    %v1922 = vpack.c.b16 %v1750, %v1749
    %v1923 = vpack.c.b16 %v1752, %v1751
    %v1924 = vpack.c.b16 %v1754, %v1753
    %v1925 = vpack.c.b16 %v1756, %v1755
    %v1926 = vpack.c.b16 %v1758, %v1757
    %v1927 = vpack.c.b16 %v1760, %v1759
    %v1928 = vpack.c.b16 %v1762, %v1761
    %v1929 = vpack.c.b16 %v1764, %v1763
    %v1930 = vpack.c.b16 %v1766, %v1765
    %v1931 = vpack.c.b16 %v1768, %v1767
    %v1932 = vpack.c.b16 %v1770, %v1769
    %v1933 = vpack.c.b16 %v1772, %v1771
    %v1934 = vpack.c.b16 %v1774, %v1773
    %v1935 = vpack.c.b16 %v1776, %v1775
    %v1936 = vpack.c.b16 %v1778, %v1777
    %v1937 = vpack.c.b16 %v1780, %v1779
    %v1938 = vpack.c.b16 %v1782, %v1781
    %v1939 = vpack.c.b16 %v1784, %v1783
    %v1940 = vpack.c.b16 %v1786, %v1785
    %v1941 = vpack.c.b16 %v1788, %v1787
    %v1942 = vpack.c.b16 %v1790, %v1789
    %v1943 = vpack.c.b16 %v1792, %v1791
    %v1944 = vpack.c.b16 %v1794, %v1793
    %v1945 = vpack.c.b16 %v1796, %v1795
    %v1946 = vpack.c.b16 %v1798, %v1797
    %v1947 = vpack.c.b16 %v1800, %v1799
    %v1948 = vpack.c.b16 %v1802, %v1801
    %v1949 = vpack.c.b16 %v1804, %v1803
    %v1950 = vpack.c.b16 %v1806, %v1805
    %v1951 = vpack.c.b16 %v1808, %v1807
    %v1952 = vpack.c.b16 %v1810, %v1809
    %v1953 = vpack.c.b16 %v1812, %v1811
    %v1954 = vpack.c.b16 %v1814, %v1813
    %v1955 = vpack.c.b16 %v1816, %v1815
    %v1956 = vpack.c.b16 %v1818, %v1817
    %v1957 = vpack.c.b16 %v1820, %v1819
    %v1958 = vpack.c.b16 %v1822, %v1821
    %v1959 = vpack.c.b16 %v1824, %v1823
    %v1960 = vpack.c.b16 %v1826, %v1825
    %v1961 = vpack.c.b16 %v1828, %v1827
    %v1962 = vpack.c.b16 %v1830, %v1829
    %v1963 = vpack.c.b16 %v1832, %v1831
    %v1964 = vpack.c.b16 %v1834, %v1833
    %v1965 = vpack.c.b16 %v1836, %v1835
    %v1966 = vpack.c.b16 %v1838, %v1837
    %2095 = vmatpush.bf16.msra.mxu0 %v1846
    %2096 = vmatpush.bf16.msra.mxu0 %v1845
    %2097 = vmatpush.bf16.msra.mxu0 %v1844
    %2098 = vmatpush.bf16.msra.mxu0 %v1843
    %2099 = vmatpush.bf16.msra.mxu0 %v1842
    %2100 = vmatpush.bf16.msra.mxu0 %v1841
    %2101 = vmatpush.bf16.msra.mxu0 %v1840
    %2102 = vmatpush.bf16.msra.mxu0 %v1839
    %2103 = vmatmul.bf16.gmra.mxu0 %v1051
    %v2104 = vpop.f32.mrf.mxu0
    %v2105 = vadd.f32 %v1325, %v2104
    %v2106 = vpop.f32.mrf.mxu0
    %2107 = vdwg.mxu0
    %2108 = vmatpush.bf16.msra.mxu0 %v1854
    %2109 = vmatpush.bf16.msra.mxu0 %v1853
    %2110 = vmatpush.bf16.msra.mxu0 %v1852
    %2111 = vmatpush.bf16.msra.mxu0 %v1851
    %2112 = vmatpush.bf16.msra.mxu0 %v1850
    %2113 = vmatpush.bf16.msra.mxu0 %v1849
    %2114 = vmatpush.bf16.msra.mxu0 %v1848
    %2115 = vmatpush.bf16.msra.mxu0 %v1847
    %2116 = vmatmul.bf16.gmra.mxu0 %v1052
    %v2117 = vpop.f32.mrf.mxu0
    %v2118 = vadd.f32 %v2105, %v2117
    %v2119 = vpop.f32.mrf.mxu0
    %2120 = vdwg.mxu0
    %2121 = vmatpush.bf16.msra.mxu0 %v1862
    %2122 = vmatpush.bf16.msra.mxu0 %v1861
    %2123 = vmatpush.bf16.msra.mxu0 %v1860
    %2124 = vmatpush.bf16.msra.mxu0 %v1859
    %2125 = vmatpush.bf16.msra.mxu0 %v1858
    %2126 = vmatpush.bf16.msra.mxu0 %v1857
    %2127 = vmatpush.bf16.msra.mxu0 %v1856
    %2128 = vmatpush.bf16.msra.mxu0 %v1855
    %2129 = vmatmul.bf16.gmra.mxu0 %v1053
    %v2130 = vpop.f32.mrf.mxu0
    %v2131 = vadd.f32 %v2118, %v2130
    %v2132 = vpop.f32.mrf.mxu0
    %2133 = vdwg.mxu0
    %2134 = vmatpush.bf16.msra.mxu0 %v1870
    %2135 = vmatpush.bf16.msra.mxu0 %v1869
    %2136 = vmatpush.bf16.msra.mxu0 %v1868
    %2137 = vmatpush.bf16.msra.mxu0 %v1867
    %2138 = vmatpush.bf16.msra.mxu0 %v1866
    %2139 = vmatpush.bf16.msra.mxu0 %v1865
    %2140 = vmatpush.bf16.msra.mxu0 %v1864
    %2141 = vmatpush.bf16.msra.mxu0 %v1863
    %2142 = vmatmul.bf16.gmra.mxu0 %v1054
    %v2143 = vpop.f32.mrf.mxu0
    %v2144 = vadd.f32 %v2131, %v2143
    %v2145 = vpop.f32.mrf.mxu0
    %2146 = vdwg.mxu0
    %2147 = vmatpush.bf16.msra.mxu0 %v1878
    %2148 = vmatpush.bf16.msra.mxu0 %v1877
    %2149 = vmatpush.bf16.msra.mxu0 %v1876
    %2150 = vmatpush.bf16.msra.mxu0 %v1875
    %2151 = vmatpush.bf16.msra.mxu0 %v1874
    %2152 = vmatpush.bf16.msra.mxu0 %v1873
    %2153 = vmatpush.bf16.msra.mxu0 %v1872
    %2154 = vmatpush.bf16.msra.mxu0 %v1871
    %2155 = vmatmul.bf16.gmra.mxu0 %v1055
    %v2156 = vpop.f32.mrf.mxu0
    %v2157 = vadd.f32 %v2144, %v2156
    %v2158 = vpop.f32.mrf.mxu0
    %2159 = vdwg.mxu0
    %2160 = vmatpush.bf16.msra.mxu0 %v1886
    %2161 = vmatpush.bf16.msra.mxu0 %v1885
    %2162 = vmatpush.bf16.msra.mxu0 %v1884
    %2163 = vmatpush.bf16.msra.mxu0 %v1883
    %2164 = vmatpush.bf16.msra.mxu0 %v1882
    %2165 = vmatpush.bf16.msra.mxu0 %v1881
    %2166 = vmatpush.bf16.msra.mxu0 %v1880
    %2167 = vmatpush.bf16.msra.mxu0 %v1879
    %2168 = vmatmul.bf16.gmra.mxu0 %v1056
    %v2169 = vpop.f32.mrf.mxu0
    %v2170 = vadd.f32 %v2157, %v2169
    %v2171 = vpop.f32.mrf.mxu0
    %2172 = vdwg.mxu0
    %2173 = vmatpush.bf16.msra.mxu0 %v1894
    %2174 = vmatpush.bf16.msra.mxu0 %v1893
    %2175 = vmatpush.bf16.msra.mxu0 %v1892
    %2176 = vmatpush.bf16.msra.mxu0 %v1891
    %2177 = vmatpush.bf16.msra.mxu0 %v1890
    %2178 = vmatpush.bf16.msra.mxu0 %v1889
    %2179 = vmatpush.bf16.msra.mxu0 %v1888
    %2180 = vmatpush.bf16.msra.mxu0 %v1887
    %2181 = vmatmul.bf16.gmra.mxu0 %v1057
    %v2182 = vpop.f32.mrf.mxu0
    %v2183 = vadd.f32 %v2170, %v2182
    %v2184 = vpop.f32.mrf.mxu0
    %2185 = vdwg.mxu0
    %2186 = vmatpush.bf16.msra.mxu0 %v1902
    %2187 = vmatpush.bf16.msra.mxu0 %v1901
    %2188 = vmatpush.bf16.msra.mxu0 %v1900
    %2189 = vmatpush.bf16.msra.mxu0 %v1899
    %2190 = vmatpush.bf16.msra.mxu0 %v1898
    %2191 = vmatpush.bf16.msra.mxu0 %v1897
    %2192 = vmatpush.bf16.msra.mxu0 %v1896
    %2193 = vmatpush.bf16.msra.mxu0 %v1895
    %2194 = vmatmul.bf16.gmra.mxu0 %v1058
    %v2195 = vpop.f32.mrf.mxu0
    %v2196 = vadd.f32 %v2183, %v2195
    %v2197 = vpop.f32.mrf.mxu0
    %2198 = vdwg.mxu0
    %2199 = vmatpush.bf16.msra.mxu0 %v1910
    %2200 = vmatpush.bf16.msra.mxu0 %v1909
    %2201 = vmatpush.bf16.msra.mxu0 %v1908
    %2202 = vmatpush.bf16.msra.mxu0 %v1907
    %2203 = vmatpush.bf16.msra.mxu0 %v1906
    %2204 = vmatpush.bf16.msra.mxu0 %v1905
    %2205 = vmatpush.bf16.msra.mxu0 %v1904
    %2206 = vmatpush.bf16.msra.mxu0 %v1903
    %2207 = vmatmul.bf16.gmra.mxu0 %v1059
    %v2208 = vpop.f32.mrf.mxu0
    %v2209 = vadd.f32 %v2196, %v2208
    %v2210 = vpop.f32.mrf.mxu0
    %2211 = vdwg.mxu0
    %2212 = vmatpush.bf16.msra.mxu0 %v1918
    %2213 = vmatpush.bf16.msra.mxu0 %v1917
    %2214 = vmatpush.bf16.msra.mxu0 %v1916
    %2215 = vmatpush.bf16.msra.mxu0 %v1915
    %2216 = vmatpush.bf16.msra.mxu0 %v1914
    %2217 = vmatpush.bf16.msra.mxu0 %v1913
    %2218 = vmatpush.bf16.msra.mxu0 %v1912
    %2219 = vmatpush.bf16.msra.mxu0 %v1911
    %2220 = vmatmul.bf16.gmra.mxu0 %v1060
    %v2221 = vpop.f32.mrf.mxu0
    %v2222 = vadd.f32 %v2209, %v2221
    %v2223 = vpop.f32.mrf.mxu0
    %2224 = vdwg.mxu0
    %2225 = vmatpush.bf16.msra.mxu0 %v1926
    %2226 = vmatpush.bf16.msra.mxu0 %v1925
    %2227 = vmatpush.bf16.msra.mxu0 %v1924
    %2228 = vmatpush.bf16.msra.mxu0 %v1923
    %2229 = vmatpush.bf16.msra.mxu0 %v1922
    %2230 = vmatpush.bf16.msra.mxu0 %v1921
    %2231 = vmatpush.bf16.msra.mxu0 %v1920
    %2232 = vmatpush.bf16.msra.mxu0 %v1919
    %2233 = vmatmul.bf16.gmra.mxu0 %v1061
    %v2234 = vpop.f32.mrf.mxu0
    %v2235 = vadd.f32 %v2222, %v2234
    %v2236 = vpop.f32.mrf.mxu0
    %2237 = vdwg.mxu0
    %2238 = vmatpush.bf16.msra.mxu0 %v1934
    %2239 = vmatpush.bf16.msra.mxu0 %v1933
    %2240 = vmatpush.bf16.msra.mxu0 %v1932
    %2241 = vmatpush.bf16.msra.mxu0 %v1931
    %2242 = vmatpush.bf16.msra.mxu0 %v1930
    %2243 = vmatpush.bf16.msra.mxu0 %v1929
    %2244 = vmatpush.bf16.msra.mxu0 %v1928
    %2245 = vmatpush.bf16.msra.mxu0 %v1927
    %2246 = vmatmul.bf16.gmra.mxu0 %v1062
    %v2247 = vpop.f32.mrf.mxu0
    %v2248 = vadd.f32 %v2235, %v2247
    %v2249 = vpop.f32.mrf.mxu0
    %2250 = vdwg.mxu0
    %2251 = vmatpush.bf16.msra.mxu0 %v1942
    %2252 = vmatpush.bf16.msra.mxu0 %v1941
    %2253 = vmatpush.bf16.msra.mxu0 %v1940
    %2254 = vmatpush.bf16.msra.mxu0 %v1939
    %2255 = vmatpush.bf16.msra.mxu0 %v1938
    %2256 = vmatpush.bf16.msra.mxu0 %v1937
    %2257 = vmatpush.bf16.msra.mxu0 %v1936
    %2258 = vmatpush.bf16.msra.mxu0 %v1935
    %2259 = vmatmul.bf16.gmra.mxu0 %v1063
    %v2260 = vpop.f32.mrf.mxu0
    %v2261 = vadd.f32 %v2248, %v2260
    %v2262 = vpop.f32.mrf.mxu0
    %2263 = vdwg.mxu0
    %2264 = vmatpush.bf16.msra.mxu0 %v1950
    %2265 = vmatpush.bf16.msra.mxu0 %v1949
    %2266 = vmatpush.bf16.msra.mxu0 %v1948
    %2267 = vmatpush.bf16.msra.mxu0 %v1947
    %2268 = vmatpush.bf16.msra.mxu0 %v1946
    %2269 = vmatpush.bf16.msra.mxu0 %v1945
    %2270 = vmatpush.bf16.msra.mxu0 %v1944
    %2271 = vmatpush.bf16.msra.mxu0 %v1943
    %2272 = vmatmul.bf16.gmra.mxu0 %v1064
    %v2273 = vpop.f32.mrf.mxu0
    %v2274 = vadd.f32 %v2261, %v2273
    %v2275 = vpop.f32.mrf.mxu0
    %2276 = vdwg.mxu0
    %2277 = vmatpush.bf16.msra.mxu0 %v1958
    %2278 = vmatpush.bf16.msra.mxu0 %v1957
    %2279 = vmatpush.bf16.msra.mxu0 %v1956
    %2280 = vmatpush.bf16.msra.mxu0 %v1955
    %2281 = vmatpush.bf16.msra.mxu0 %v1954
    %2282 = vmatpush.bf16.msra.mxu0 %v1953
    %2283 = vmatpush.bf16.msra.mxu0 %v1952
    %2284 = vmatpush.bf16.msra.mxu0 %v1951
    %2285 = vmatmul.bf16.gmra.mxu0 %v1065
    %v2286 = vpop.f32.mrf.mxu0
    %v2287 = vadd.f32 %v2274, %v2286
    %v2288 = vpop.f32.mrf.mxu0
    %2289 = vdwg.mxu0
    %2290 = vmatpush.bf16.msra.mxu0 %v1966
    %2291 = vmatpush.bf16.msra.mxu0 %v1965
    %2292 = vmatpush.bf16.msra.mxu0 %v1964
    %2293 = vmatpush.bf16.msra.mxu0 %v1963
    %2294 = vmatpush.bf16.msra.mxu0 %v1962
    %2295 = vmatpush.bf16.msra.mxu0 %v1961
    %2296 = vmatpush.bf16.msra.mxu0 %v1960
    %2297 = vmatpush.bf16.msra.mxu0 %v1959
    %2298 = vmatmul.bf16.gmra.mxu0 %v1066
    %v2299 = vpop.f32.mrf.mxu0
    %v2300 = vadd.f32 %v2287, %v2299
    %v2301 = vpop.f32.mrf.mxu0
    %2302 = vdwg.mxu0
    %2303 = vst [vmem:[#allocation2] sm:$0x3] %v2300
    // Predicated region
    $region22: #{simclr_forward.5} parent=1 // pred_check
      _
    $region23: #{simclr_forward.5} parent=1 // pred_check_branch
      %2305 = sbr.rel (0) target = $region25
    $region24: #{simclr_forward.5} parent=1 // pred_region
      %2307 = vsyncadd [#allocation3], 0
      %s2309 = sshll.u32 [#allocation2], 4
      %s2310 = int_to_ptr.vmem [resolvable:$true] %s2309
      %s2311 = sshll.u32 %s5, 4
      %s2312 = int_to_ptr.hbm [resolvable:$true] %s2311
      %2314 = dma.vmem_to_hbm [thread:$0]  %s2310, 32, %s2312, [#allocation3]
    $region25: #{simclr_forward.5} parent=1 // pred_fallthru
      _
    // Predicated region
    $region26: #{simclr_forward.5} parent=1 // pred_check
      _
    $region27: #{simclr_forward.5} parent=1 // pred_check_branch
      %2316 = sbr.rel (0) target = $region29
    $region28: #{simclr_forward.5} parent=1 // pred_region
      %2318 = dma.done [#allocation3], 32
    $region29: #{simclr_forward.5} parent=1 // pred_fallthru
      _
    %2319 = vsyncpa [#allocation3], 1

</llo_original>
